<compile_context>
chip_gen: v5e
topology: v5e:2x2
jax: 0.10.0
libtpu: 0.0.40
codegen_flags: <defaults>
</compile_context>

<pallas_src>
import functools

import jax
import jax.numpy as jnp
import numpy as np
from jax import lax
from jax.experimental import pallas as pl
from jax.experimental.pallas import tpu as pltpu


def _round_up(x, m):
    return ((x + m - 1) // m) * m


def fcn_kernel(x1_ref, w1_ref, b1_ref, w2_ref, b2_ref, w3_ref, b3_ref,
               wf_ref, bf_ref, out_ref, h1pad_ref, h2pad_ref, *, true_len):
    Bblk, Lp, K1p = x1_ref.shape
    C1 = w1_ref.shape[1]
    C2 = b2_ref.shape[1]
    C3 = b3_ref.shape[1]
    K2 = w2_ref.shape[0] // C1
    K3 = w3_ref.shape[0] // C2
    P2, P3 = K2 // 2, K3 // 2
    M = Bblk * Lp

    def mm(a, b):
        # bf16 operands, fp32 accumulation on the MXU.
        return jnp.dot(a, b, preferred_element_type=jnp.float32)

    # ---- conv1 + ReLU: one (M, 8) @ (8, C1) matmul (batch folded into M).
    h1 = jnp.maximum(mm(x1_ref[...].reshape(M, K1p), w1_ref[...])
                     + b1_ref[...], 0.0)                              # (M, C1) f32

    # Scratch persists across grid steps -> re-zero halos every step.  Do NOT
    # gate behind program_id == 0: under dimension_semantics=("parallel",)
    # each TensorCore has its own scratch.
    h1pad_ref[:, :P2, :] = jnp.zeros((Bblk, P2, C1), jnp.bfloat16)
    h1pad_ref[:, P2:P2 + Lp, :] = h1.astype(jnp.bfloat16).reshape(Bblk, Lp, C1)
    # Zero the right halo AND the time-padding rows (true_len <= Lp) AFTER the
    # interior write so they cannot leak into conv2.
    h1pad_ref[:, P2 + true_len:, :] = jnp.zeros(
        (Bblk, P2 + Lp - true_len, C1), jnp.bfloat16)

    # ---- conv2 + ReLU: im2col in 256-deep chunks (2 taps of C1=128 each).
    acc2 = jnp.zeros((M, C2), jnp.float32)
    k = 0
    while k < K2:                      # static unroll: chunks (0,1) (2,3) (4)
        taps = min(2, K2 - k)
        if taps == 1:
            im = h1pad_ref[:, k:k + Lp, :]
        else:
            im = jnp.concatenate(
                [h1pad_ref[:, k + t:k + t + Lp, :] for t in range(taps)],
                axis=-1)                                             # (B, Lp, 256) bf16
        acc2 = acc2 + mm(im.reshape(M, taps * C1),
                         w2_ref[k * C1:(k + taps) * C1, :])
        k += taps
    h2 = jnp.maximum(acc2 + b2_ref[...], 0.0)                        # (M, C2) f32

    h2pad_ref[:, :P3, :] = jnp.zeros((Bblk, P3, C2), jnp.bfloat16)
    h2pad_ref[:, P3:P3 + Lp, :] = h2.astype(jnp.bfloat16).reshape(Bblk, Lp, C2)
    h2pad_ref[:, P3 + true_len:, :] = jnp.zeros(
        (Bblk, P3 + Lp - true_len, C2), jnp.bfloat16)

    # ---- conv3 + ReLU: each tap is already 256 deep -> no concat needed.
    acc3 = jnp.zeros((M, C3), jnp.float32)
    for k in range(K3):
        acc3 = acc3 + mm(h2pad_ref[:, k:k + Lp, :].reshape(M, C2),
                         w3_ref[k * C2:(k + 1) * C2, :])
    h3 = jnp.maximum(acc3 + b3_ref[...], 0.0)                        # (M, C3) f32

    # ---- global average pool over the TRUE length, then one (Bblk,C3)@(C3,128)
    # matmul and a single lane-dense store (OUT padded to 128 in the wrapper).
    h3r = h3.reshape(Bblk, Lp, C3)
    if Lp != true_len:
        tmask = lax.broadcasted_iota(jnp.int32, (1, Lp, C3), 1) < true_len
        h3r = h3r * tmask.astype(jnp.float32)
    pooled = jnp.sum(h3r, axis=1) * (1.0 / true_len)                 # (Bblk, C3)
    out_ref[...] = mm(pooled.astype(jnp.bfloat16), wf_ref[...]) + bf_ref[...]


def _pick_block_b(B, Lp):
    """Largest batch tile (multiple of 8) that fits a conservative VMEM budget.

    ~6 KB of live VMEM per (batch, timestep): bf16 scratch (h1pad 256 B +
    h2pad 512 B), one bf16 im2col chunk, fp32 conv accumulators and compiler
    temporaries.  Budget ~28 MiB of the 48 MiB scoped limit for these; the
    rest covers the (single, constant) ~1 MiB of bf16 weights plus the
    double-buffered input/output blocks.  Fits v7x's 64 MiB physical VMEM.
    """
    bytes_per_bl = 6 * 1024
    budget = 28 << 20
    bb = max(8, min(256, (budget // (Lp * bytes_per_bl)) // 8 * 8))
    need = _round_up(B, 8)
    bb = min(bb, need)
    # Keep at least 2 grid steps when possible so both v7x TensorCores get
    # work under dimension_semantics=("parallel",).
    if bb == need and need >= 16:
        bb = _round_up(need // 2, 8)
    return bb


def fcn_forward(x, params, *, block_b=None):
    """x: (B, 1, L) float32, NCW like PyTorch.  Returns (B, output) float32."""
    w1, b1, w2, b2, w3, b3, wf, bf = params
    B, cin, L = x.shape
    assert cin == 1
    K1, C1 = w1.shape
    K2, _, C2 = w2.shape
    K3, _, C3 = w3.shape
    OUT = wf.shape[1]
    P1 = K1 // 2

    K1p = 8        # pad conv1 taps 7 -> 8 for aligned lanes
    OUTp = 128     # pad final output to a full lane width for a dense store
    Lp = _round_up(L, 8)   # sublane-aligned time length (masked in the pool)

    if block_b is None:
        block_b = _pick_block_b(B, Lp)
    assert block_b % 8 == 0, "block_b must be a multiple of 8 (sublane tile)"
    Bp = _round_up(B, block_b)

    # Glue: tap-stack the single-channel input -> (Bp, Lp, K1p) bf16.
    # TODO(synk): for very long sequences build the taps in-kernel from the
    # padded (B, Lp+6) signal instead of materializing (B, Lp, 8) in HBM.
    xpad = jnp.pad(x[:, 0, :], ((0, Bp - B), (P1, P1 + (Lp - L))))
    x1 = jnp.stack([xpad[:, k:k + Lp] for k in range(K1)], axis=-1)
    x1 = jnp.pad(x1, ((0, 0), (0, 0), (0, K1p - K1))).astype(jnp.bfloat16)

    # Weight packing (trace time): conv weights as flat bf16 im2col matrices,
    # biases kept fp32 (bias-add/ReLU stay on the fp32 VPU path).
    w1p = jnp.pad(w1, ((0, K1p - K1), (0, 0))).astype(jnp.bfloat16)  # (8, C1)
    w2m = w2.reshape(K2 * C1, C2).astype(jnp.bfloat16)               # (640, 256)
    w3m = w3.reshape(K3 * C2, C3).astype(jnp.bfloat16)               # (768, 128)
    wfp = jnp.pad(wf, ((0, 0), (0, OUTp - OUT))).astype(jnp.bfloat16)  # (C3, 128)
    b1r = jnp.asarray(b1, jnp.float32).reshape(1, C1)
    b2r = jnp.asarray(b2, jnp.float32).reshape(1, C2)
    b3r = jnp.asarray(b3, jnp.float32).reshape(1, C3)
    bfp = jnp.pad(jnp.asarray(bf, jnp.float32).reshape(1, OUT),
                  ((0, 0), (0, OUTp - OUT)))                          # (1, 128)

    kernel = functools.partial(fcn_kernel, true_len=L)
    const2 = lambda i: (0, 0)
    out = pl.pallas_call(
        kernel,
        out_shape=jax.ShapeDtypeStruct((Bp, OUTp), jnp.float32),
        grid_spec=pltpu.PrefetchScalarGridSpec(
            num_scalar_prefetch=0,
            grid=(Bp // block_b,),
            in_specs=[
                pl.BlockSpec((block_b, Lp, K1p), lambda i: (i, 0, 0)),
                pl.BlockSpec((K1p, C1), const2),
                pl.BlockSpec((1, C1), const2),
                pl.BlockSpec((K2 * C1, C2), const2),
                pl.BlockSpec((1, C2), const2),
                pl.BlockSpec((K3 * C2, C3), const2),
                pl.BlockSpec((1, C3), const2),
                pl.BlockSpec((C3, OUTp), const2),
                pl.BlockSpec((1, OUTp), const2),
            ],
            out_specs=pl.BlockSpec((block_b, OUTp), lambda i: (i, 0)),
            scratch_shapes=[
                pltpu.VMEM((block_b, Lp + K2 - 1, C1), jnp.bfloat16),  # padded conv1 out
                pltpu.VMEM((block_b, Lp + K3 - 1, C2), jnp.bfloat16),  # padded conv2 out
            ],
        ),
        compiler_params=pltpu.CompilerParams(
            dimension_semantics=("parallel",),        # shard batch tiles across TCs
            vmem_limit_bytes=48 * 1024 * 1024,        # > 16/32 MiB defaults, < 64 MiB v7x
        ),
    )(x1, w1p, b1r, w2m, b2r, w3m, b3r, wfp, bfp)
    return out[:B, :OUT]


def init_params(key, output=7):
    ks = jax.random.split(key, 8)
    s = 0.1
    w1 = s * jax.random.normal(ks[0], (7, 128), jnp.float32)        # (K, C_out), C_in=1
    b1 = s * jax.random.normal(ks[1], (1, 128), jnp.float32)
    w2 = s * jax.random.normal(ks[2], (5, 128, 256), jnp.float32)   # (K, C_in, C_out)
    b2 = s * jax.random.normal(ks[3], (1, 256), jnp.float32)
    w3 = s * jax.random.normal(ks[4], (3, 256, 128), jnp.float32)
    b3 = s * jax.random.normal(ks[5], (1, 128), jnp.float32)
    wf = s * jax.random.normal(ks[6], (128, output), jnp.float32)   # (C_in, C_out)
    bf = s * jax.random.normal(ks[7], (1, output), jnp.float32)
    return (w1, b1, w2, b2, w3, b3, wf, bf)


def reference_forward(x, params):
    """Pure-JAX fp32 reference matching the PyTorch forward (for B > 1)."""
    w1, b1, w2, b2, w3, b3, wf, bf = params

    def conv1d(a, w_kio, bias, pad):
        w_oik = jnp.transpose(w_kio, (2, 1, 0))                     # (C_out, C_in, K)
        y = lax.conv_general_dilated(
            a, w_oik, window_strides=(1,), padding=[(pad, pad)],
            dimension_numbers=('NCW', 'OIW', 'NCW'),
            precision=lax.Precision.HIGHEST)
        return y + bias.reshape(1, -1, 1)

    h = jax.nn.relu(conv1d(x, w1.reshape(7, 1, 128), b1, 3))
    h = jax.nn.relu(conv1d(h, w2, b2, 2))
    h = jax.nn.relu(conv1d(h, w3, b3, 1))
    pooled = jnp.mean(h, axis=-1)                                   # (B, 128)
    return pooled @ wf + bf


if __name__ == "__main__":
    key = jax.random.PRNGKey(0)
    pkey, xkey, xkey2 = jax.random.split(key, 3)
    OUT = 7
    params = init_params(pkey, output=OUT)
    fwd = jax.jit(fcn_forward)

    # bf16 matmul operands (fp32 accumulation) vs fp32 HIGHEST reference
    # -> relaxed tolerance.
    TOL = dict(rtol=5e-2, atol=5e-2)

    # Primary self-test: Net(input=16, output=7), B=2 (L multiple of 8).
    x = jax.random.normal(xkey, (2, 1, 16), jnp.float32)            # NCW, like PyTorch
    out = jax.block_until_ready(fwd(x, params))
    ref = jax.block_until_ready(reference_forward(x, params))
    np.testing.assert_allclose(np.asarray(out), np.asarray(ref), **TOL)

    # Secondary self-test: L not a multiple of 8 exercises the time-padding
    # + masked-pool path.
    x2 = jax.random.normal(xkey2, (2, 1, 12), jnp.float32)
    out2 = jax.block_until_ready(fwd(x2, params))
    ref2 = jax.block_until_ready(reference_forward(x2, params))
    np.testing.assert_allclose(np.asarray(out2), np.asarray(ref2), **TOL)

    print("KERNEL_OK")
</pallas_src>

<mosaic_0001>
module attributes {stable_mosaic.version = 11 : i64} {
  func.func @fcn_kernel(%arg0: i32, %arg1: memref<8x16x8xbf16, #tpu.memory_space<vmem>>, %arg2: memref<8x128xbf16, #tpu.memory_space<vmem>>, %arg3: memref<1x128xf32, #tpu.memory_space<vmem>>, %arg4: memref<640x256xbf16, #tpu.memory_space<vmem>>, %arg5: memref<1x256xf32, #tpu.memory_space<vmem>>, %arg6: memref<768x128xbf16, #tpu.memory_space<vmem>>, %arg7: memref<1x128xf32, #tpu.memory_space<vmem>>, %arg8: memref<128x128xbf16, #tpu.memory_space<vmem>>, %arg9: memref<1x128xf32, #tpu.memory_space<vmem>>, %arg10: memref<8x128xf32, #tpu.memory_space<vmem>>, %arg11: memref<8x20x128xbf16, #tpu.memory_space<vmem>>, %arg12: memref<8x18x256xbf16, #tpu.memory_space<vmem>>) attributes {dimension_semantics = [#tpu.dimension_semantics<parallel>], iteration_bounds = array<i64: 1>, scalar_prefetch = 0 : i64, scratch_operands = 2 : i64, tpu.core_type = #tpu.core_type<tc>, window_params = [{transform_indices = @transform_0, window_bounds = array<i64: 8, 16, 8>}, {pipeline_mode = #tpu.pipeline_mode<synchronous>, transform_indices = @transform_1, window_bounds = array<i64: 8, 128>}, {pipeline_mode = #tpu.pipeline_mode<synchronous>, transform_indices = @transform_2, window_bounds = array<i64: 1, 128>}, {pipeline_mode = #tpu.pipeline_mode<synchronous>, transform_indices = @transform_3, window_bounds = array<i64: 640, 256>}, {pipeline_mode = #tpu.pipeline_mode<synchronous>, transform_indices = @transform_4, window_bounds = array<i64: 1, 256>}, {pipeline_mode = #tpu.pipeline_mode<synchronous>, transform_indices = @transform_5, window_bounds = array<i64: 768, 128>}, {pipeline_mode = #tpu.pipeline_mode<synchronous>, transform_indices = @transform_6, window_bounds = array<i64: 1, 128>}, {pipeline_mode = #tpu.pipeline_mode<synchronous>, transform_indices = @transform_7, window_bounds = array<i64: 128, 128>}, {pipeline_mode = #tpu.pipeline_mode<synchronous>, transform_indices = @transform_8, window_bounds = array<i64: 1, 128>}, {transform_indices = @transform_9, window_bounds = array<i64: 8, 128>}]} {
    %c0 = arith.constant 0 : index
    %c0_0 = arith.constant 0 : index
    %c0_1 = arith.constant 0 : index
    %0 = vector.load %arg1[%c0, %c0_0, %c0_1] : memref<8x16x8xbf16, #tpu.memory_space<vmem>>, vector<8x16x8xbf16>
    %1 = vector.shape_cast %0 : vector<8x16x8xbf16> to vector<128x8xbf16>
    %c0_2 = arith.constant 0 : index
    %c0_3 = arith.constant 0 : index
    %2 = vector.load %arg2[%c0_2, %c0_3] : memref<8x128xbf16, #tpu.memory_space<vmem>>, vector<8x128xbf16>
    %cst = arith.constant dense<0.000000e+00> : vector<128x128xf32>
    %3 = tpu.matmul %1, %2, %cst {dimension_numbers = #tpu.dot_dimension_numbers<[1], [0], [0], [1], [0, 0, 1, 1], [], []>} : vector<128x8xbf16>, vector<8x128xbf16>, vector<128x128xf32> -> vector<128x128xf32>
    %c0_4 = arith.constant 0 : index
    %c0_5 = arith.constant 0 : index
    %4 = vector.load %arg3[%c0_4, %c0_5] : memref<1x128xf32, #tpu.memory_space<vmem>>, vector<1x128xf32>
    %5 = vector.broadcast %4 : vector<1x128xf32> to vector<128x128xf32>
    %6 = arith.addf %3, %5 : vector<128x128xf32>
    %cst_6 = arith.constant 0.000000e+00 : f32
    %7 = vector.broadcast %cst_6 : f32 to vector<128x128xf32>
    %8 = arith.maximumf %6, %7 : vector<128x128xf32>
    %cst_7 = arith.constant 0.000000e+00 : bf16
    %9 = vector.broadcast %cst_7 : bf16 to vector<8x2x128xbf16>
    %c0_8 = arith.constant 0 : index
    %c0_9 = arith.constant 0 : index
    %c0_10 = arith.constant 0 : index
    %10 = vector.load %arg11[%c0_8, %c0_9, %c0_10] : memref<8x20x128xbf16, #tpu.memory_space<vmem>>, vector<8x2x128xbf16>
    tpu.vector_store %arg11[%c0_8, %c0_9, %c0_10], %9 {strides = array<i32>} : memref<8x20x128xbf16, #tpu.memory_space<vmem>>, vector<8x2x128xbf16>,
    %11 = arith.truncf %8 : vector<128x128xf32> to vector<128x128xbf16>
    %12 = vector.shape_cast %11 : vector<128x128xbf16> to vector<8x16x128xbf16>
    %c0_11 = arith.constant 0 : index
    %c2 = arith.constant 2 : index
    %c0_12 = arith.constant 0 : index
    %13 = vector.load %arg11[%c0_11, %c2, %c0_12] : memref<8x20x128xbf16, #tpu.memory_space<vmem>>, vector<8x16x128xbf16>
    tpu.vector_store %arg11[%c0_11, %c2, %c0_12], %12 {strides = array<i32>} : memref<8x20x128xbf16, #tpu.memory_space<vmem>>, vector<8x16x128xbf16>,
    %cst_13 = arith.constant 0.000000e+00 : bf16
    %14 = vector.broadcast %cst_13 : bf16 to vector<8x2x128xbf16>
    %c0_14 = arith.constant 0 : index
    %c18 = arith.constant 18 : index
    %c0_15 = arith.constant 0 : index
    %15 = vector.load %arg11[%c0_14, %c18, %c0_15] : memref<8x20x128xbf16, #tpu.memory_space<vmem>>, vector<8x2x128xbf16>
    tpu.vector_store %arg11[%c0_14, %c18, %c0_15], %14 {strides = array<i32>} : memref<8x20x128xbf16, #tpu.memory_space<vmem>>, vector<8x2x128xbf16>,
    %cst_16 = arith.constant 0.000000e+00 : f32
    %16 = vector.broadcast %cst_16 : f32 to vector<128x256xf32>
    %c0_17 = arith.constant 0 : index
    %c0_18 = arith.constant 0 : index
    %c0_19 = arith.constant 0 : index
    %17 = vector.load %arg11[%c0_17, %c0_18, %c0_19] : memref<8x20x128xbf16, #tpu.memory_space<vmem>>, vector<8x16x128xbf16>
    %c0_20 = arith.constant 0 : index
    %c1 = arith.constant 1 : index
    %c0_21 = arith.constant 0 : index
    %18 = vector.load %arg11[%c0_20, %c1, %c0_21] : memref<8x20x128xbf16, #tpu.memory_space<vmem>>, vector<8x16x128xbf16>
    %19 = tpu.concatenate %17, %18 in 2 : vector<8x16x128xbf16>, vector<8x16x128xbf16> -> vector<8x16x256xbf16>
    %20 = vector.shape_cast %19 : vector<8x16x256xbf16> to vector<128x256xbf16>
    %c0_22 = arith.constant 0 : index
    %c0_23 = arith.constant 0 : index
    %21 = vector.load %arg4[%c0_22, %c0_23] : memref<640x256xbf16, #tpu.memory_space<vmem>>, vector<256x256xbf16>
    %cst_24 = arith.constant dense<0.000000e+00> : vector<128x256xf32>
    %22 = tpu.matmul %20, %21, %cst_24 {dimension_numbers = #tpu.dot_dimension_numbers<[1], [0], [0], [1], [0, 0, 1, 1], [], []>} : vector<128x256xbf16>, vector<256x256xbf16>, vector<128x256xf32> -> vector<128x256xf32>
    %23 = arith.addf %16, %22 : vector<128x256xf32>
    %c0_25 = arith.constant 0 : index
    %c2_26 = arith.constant 2 : index
    %c0_27 = arith.constant 0 : index
    %24 = vector.load %arg11[%c0_25, %c2_26, %c0_27] : memref<8x20x128xbf16, #tpu.memory_space<vmem>>, vector<8x16x128xbf16>
    %c0_28 = arith.constant 0 : index
    %c3 = arith.constant 3 : index
    %c0_29 = arith.constant 0 : index
    %25 = vector.load %arg11[%c0_28, %c3, %c0_29] : memref<8x20x128xbf16, #tpu.memory_space<vmem>>, vector<8x16x128xbf16>
    %26 = tpu.concatenate %24, %25 in 2 : vector<8x16x128xbf16>, vector<8x16x128xbf16> -> vector<8x16x256xbf16>
    %27 = vector.shape_cast %26 : vector<8x16x256xbf16> to vector<128x256xbf16>
    %c256 = arith.constant 256 : index
    %c0_30 = arith.constant 0 : index
    %28 = vector.load %arg4[%c256, %c0_30] : memref<640x256xbf16, #tpu.memory_space<vmem>>, vector<256x256xbf16>
    %cst_31 = arith.constant dense<0.000000e+00> : vector<128x256xf32>
    %29 = tpu.matmul %27, %28, %cst_31 {dimension_numbers = #tpu.dot_dimension_numbers<[1], [0], [0], [1], [0, 0, 1, 1], [], []>} : vector<128x256xbf16>, vector<256x256xbf16>, vector<128x256xf32> -> vector<128x256xf32>
    %30 = arith.addf %23, %29 : vector<128x256xf32>
    %c0_32 = arith.constant 0 : index
    %c4 = arith.constant 4 : index
    %c0_33 = arith.constant 0 : index
    %31 = vector.load %arg11[%c0_32, %c4, %c0_33] : memref<8x20x128xbf16, #tpu.memory_space<vmem>>, vector<8x16x128xbf16>
    %32 = vector.shape_cast %31 : vector<8x16x128xbf16> to vector<128x128xbf16>
    %c512 = arith.constant 512 : index
    %c0_34 = arith.constant 0 : index
    %33 = vector.load %arg4[%c512, %c0_34] : memref<640x256xbf16, #tpu.memory_space<vmem>>, vector<128x256xbf16>
    %cst_35 = arith.constant dense<0.000000e+00> : vector<128x256xf32>
    %34 = tpu.matmul %32, %33, %cst_35 {dimension_numbers = #tpu.dot_dimension_numbers<[1], [0], [0], [1], [0, 0, 1, 1], [], []>} : vector<128x128xbf16>, vector<128x256xbf16>, vector<128x256xf32> -> vector<128x256xf32>
    %35 = arith.addf %30, %34 : vector<128x256xf32>
    %c0_36 = arith.constant 0 : index
    %c0_37 = arith.constant 0 : index
    %36 = vector.load %arg5[%c0_36, %c0_37] : memref<1x256xf32, #tpu.memory_space<vmem>>, vector<1x256xf32>
    %37 = vector.broadcast %36 : vector<1x256xf32> to vector<128x256xf32>
    %38 = arith.addf %35, %37 : vector<128x256xf32>
    %cst_38 = arith.constant 0.000000e+00 : f32
    %39 = vector.broadcast %cst_38 : f32 to vector<128x256xf32>
    %40 = arith.maximumf %38, %39 : vector<128x256xf32>
    %cst_39 = arith.constant 0.000000e+00 : bf16
    %41 = vector.broadcast %cst_39 : bf16 to vector<8x1x256xbf16>
    %c0_40 = arith.constant 0 : index
    %c0_41 = arith.constant 0 : index
    %c0_42 = arith.constant 0 : index
    %42 = vector.load %arg12[%c0_40, %c0_41, %c0_42] : memref<8x18x256xbf16, #tpu.memory_space<vmem>>, vector<8x1x256xbf16>
    tpu.vector_store %arg12[%c0_40, %c0_41, %c0_42], %41 {strides = array<i32>} : memref<8x18x256xbf16, #tpu.memory_space<vmem>>, vector<8x1x256xbf16>,
    %43 = arith.truncf %40 : vector<128x256xf32> to vector<128x256xbf16>
    %44 = vector.shape_cast %43 : vector<128x256xbf16> to vector<8x16x256xbf16>
    %c0_43 = arith.constant 0 : index
    %c1_44 = arith.constant 1 : index
    %c0_45 = arith.constant 0 : index
    %45 = vector.load %arg12[%c0_43, %c1_44, %c0_45] : memref<8x18x256xbf16, #tpu.memory_space<vmem>>, vector<8x16x256xbf16>
    tpu.vector_store %arg12[%c0_43, %c1_44, %c0_45], %44 {strides = array<i32>} : memref<8x18x256xbf16, #tpu.memory_space<vmem>>, vector<8x16x256xbf16>,
    %cst_46 = arith.constant 0.000000e+00 : bf16
    %46 = vector.broadcast %cst_46 : bf16 to vector<8x1x256xbf16>
    %c0_47 = arith.constant 0 : index
    %c17 = arith.constant 17 : index
    %c0_48 = arith.constant 0 : index
    %47 = vector.load %arg12[%c0_47, %c17, %c0_48] : memref<8x18x256xbf16, #tpu.memory_space<vmem>>, vector<8x1x256xbf16>
    tpu.vector_store %arg12[%c0_47, %c17, %c0_48], %46 {strides = array<i32>} : memref<8x18x256xbf16, #tpu.memory_space<vmem>>, vector<8x1x256xbf16>,
    %cst_49 = arith.constant 0.000000e+00 : f32
    %48 = vector.broadcast %cst_49 : f32 to vector<128x128xf32>
    %c0_50 = arith.constant 0 : index
    %c0_51 = arith.constant 0 : index
    %c0_52 = arith.constant 0 : index
    %49 = vector.load %arg12[%c0_50, %c0_51, %c0_52] : memref<8x18x256xbf16, #tpu.memory_space<vmem>>, vector<8x16x256xbf16>
    %50 = vector.shape_cast %49 : vector<8x16x256xbf16> to vector<128x256xbf16>
    %c0_53 = arith.constant 0 : index
    %c0_54 = arith.constant 0 : index
    %51 = vector.load %arg6[%c0_53, %c0_54] : memref<768x128xbf16, #tpu.memory_space<vmem>>, vector<256x128xbf16>
    %cst_55 = arith.constant dense<0.000000e+00> : vector<128x128xf32>
    %52 = tpu.matmul %50, %51, %cst_55 {dimension_numbers = #tpu.dot_dimension_numbers<[1], [0], [0], [1], [0, 0, 1, 1], [], []>} : vector<128x256xbf16>, vector<256x128xbf16>, vector<128x128xf32> -> vector<128x128xf32>
    %53 = arith.addf %48, %52 : vector<128x128xf32>
    %c0_56 = arith.constant 0 : index
    %c1_57 = arith.constant 1 : index
    %c0_58 = arith.constant 0 : index
    %54 = vector.load %arg12[%c0_56, %c1_57, %c0_58] : memref<8x18x256xbf16, #tpu.memory_space<vmem>>, vector<8x16x256xbf16>
    %55 = vector.shape_cast %54 : vector<8x16x256xbf16> to vector<128x256xbf16>
    %c256_59 = arith.constant 256 : index
    %c0_60 = arith.constant 0 : index
    %56 = vector.load %arg6[%c256_59, %c0_60] : memref<768x128xbf16, #tpu.memory_space<vmem>>, vector<256x128xbf16>
    %cst_61 = arith.constant dense<0.000000e+00> : vector<128x128xf32>
    %57 = tpu.matmul %55, %56, %cst_61 {dimension_numbers = #tpu.dot_dimension_numbers<[1], [0], [0], [1], [0, 0, 1, 1], [], []>} : vector<128x256xbf16>, vector<256x128xbf16>, vector<128x128xf32> -> vector<128x128xf32>
    %58 = arith.addf %53, %57 : vector<128x128xf32>
    %c0_62 = arith.constant 0 : index
    %c2_63 = arith.constant 2 : index
    %c0_64 = arith.constant 0 : index
    %59 = vector.load %arg12[%c0_62, %c2_63, %c0_64] : memref<8x18x256xbf16, #tpu.memory_space<vmem>>, vector<8x16x256xbf16>
    %60 = vector.shape_cast %59 : vector<8x16x256xbf16> to vector<128x256xbf16>
    %c512_65 = arith.constant 512 : index
    %c0_66 = arith.constant 0 : index
    %61 = vector.load %arg6[%c512_65, %c0_66] : memref<768x128xbf16, #tpu.memory_space<vmem>>, vector<256x128xbf16>
    %cst_67 = arith.constant dense<0.000000e+00> : vector<128x128xf32>
    %62 = tpu.matmul %60, %61, %cst_67 {dimension_numbers = #tpu.dot_dimension_numbers<[1], [0], [0], [1], [0, 0, 1, 1], [], []>} : vector<128x256xbf16>, vector<256x128xbf16>, vector<128x128xf32> -> vector<128x128xf32>
    %63 = arith.addf %58, %62 : vector<128x128xf32>
    %c0_68 = arith.constant 0 : index
    %c0_69 = arith.constant 0 : index
    %64 = vector.load %arg7[%c0_68, %c0_69] : memref<1x128xf32, #tpu.memory_space<vmem>>, vector<1x128xf32>
    %65 = vector.broadcast %64 : vector<1x128xf32> to vector<128x128xf32>
    %66 = arith.addf %63, %65 : vector<128x128xf32>
    %cst_70 = arith.constant 0.000000e+00 : f32
    %67 = vector.broadcast %cst_70 : f32 to vector<128x128xf32>
    %68 = arith.maximumf %66, %67 : vector<128x128xf32>
    %69 = vector.shape_cast %68 : vector<128x128xf32> to vector<8x16x128xf32>
    %cst_71 = arith.constant dense<0.000000e+00> : vector<8x128xf32>
    %70 = vector.multi_reduction <add>, %69, %cst_71 [1] : vector<8x16x128xf32> to vector<8x128xf32>
    %cst_72 = arith.constant 6.250000e-02 : f32
    %71 = vector.broadcast %cst_72 : f32 to vector<8x128xf32>
    %72 = arith.mulf %70, %71 : vector<8x128xf32>
    %73 = arith.truncf %72 : vector<8x128xf32> to vector<8x128xbf16>
    %c0_73 = arith.constant 0 : index
    %c0_74 = arith.constant 0 : index
    %74 = vector.load %arg8[%c0_73, %c0_74] : memref<128x128xbf16, #tpu.memory_space<vmem>>, vector<128x128xbf16>
    %cst_75 = arith.constant dense<0.000000e+00> : vector<8x128xf32>
    %75 = tpu.matmul %73, %74, %cst_75 {dimension_numbers = #tpu.dot_dimension_numbers<[1], [0], [0], [1], [0, 0, 1, 1], [], []>} : vector<8x128xbf16>, vector<128x128xbf16>, vector<8x128xf32> -> vector<8x128xf32>
    %c0_76 = arith.constant 0 : index
    %c0_77 = arith.constant 0 : index
    %76 = vector.load %arg9[%c0_76, %c0_77] : memref<1x128xf32, #tpu.memory_space<vmem>>, vector<1x128xf32>
    %77 = vector.broadcast %76 : vector<1x128xf32> to vector<8x128xf32>
    %78 = arith.addf %75, %77 : vector<8x128xf32>
    %c0_78 = arith.constant 0 : index
    %c0_79 = arith.constant 0 : index
    %79 = vector.load %arg10[%c0_78, %c0_79] : memref<8x128xf32, #tpu.memory_space<vmem>>, vector<8x128xf32>
    tpu.vector_store %arg10[%c0_78, %c0_79], %78 {strides = array<i32>} : memref<8x128xf32, #tpu.memory_space<vmem>>, vector<8x128xf32>,
    return
  }
  func.func @transform_0(%arg0: i32) -> (i32, i32, i32) {
    %c0_i32 = arith.constant 0 : i32
    %c0_i32_0 = arith.constant 0 : i32
    %c0_i32_1 = arith.constant 0 : i32
    return %arg0, %c0_i32, %c0_i32_0 : i32, i32, i32
  }
  func.func @transform_1(%arg0: i32) -> (i32, i32) {
    %c0_i32 = arith.constant 0 : i32
    %c0_i32_0 = arith.constant 0 : i32
    %c0_i32_1 = arith.constant 0 : i32
    return %c0_i32, %c0_i32_0 : i32, i32
  }
  func.func @transform_2(%arg0: i32) -> (i32, i32) {
    %c0_i32 = arith.constant 0 : i32
    %c0_i32_0 = arith.constant 0 : i32
    %c0_i32_1 = arith.constant 0 : i32
    return %c0_i32, %c0_i32_0 : i32, i32
  }
  func.func @transform_3(%arg0: i32) -> (i32, i32) {
    %c0_i32 = arith.constant 0 : i32
    %c0_i32_0 = arith.constant 0 : i32
    %c0_i32_1 = arith.constant 0 : i32
    return %c0_i32, %c0_i32_0 : i32, i32
  }
  func.func @transform_4(%arg0: i32) -> (i32, i32) {
    %c0_i32 = arith.constant 0 : i32
    %c0_i32_0 = arith.constant 0 : i32
    %c0_i32_1 = arith.constant 0 : i32
    return %c0_i32, %c0_i32_0 : i32, i32
  }
  func.func @transform_5(%arg0: i32) -> (i32, i32) {
    %c0_i32 = arith.constant 0 : i32
    %c0_i32_0 = arith.constant 0 : i32
    %c0_i32_1 = arith.constant 0 : i32
    return %c0_i32, %c0_i32_0 : i32, i32
  }
  func.func @transform_6(%arg0: i32) -> (i32, i32) {
    %c0_i32 = arith.constant 0 : i32
    %c0_i32_0 = arith.constant 0 : i32
    %c0_i32_1 = arith.constant 0 : i32
    return %c0_i32, %c0_i32_0 : i32, i32
  }
  func.func @transform_7(%arg0: i32) -> (i32, i32) {
    %c0_i32 = arith.constant 0 : i32
    %c0_i32_0 = arith.constant 0 : i32
    %c0_i32_1 = arith.constant 0 : i32
    return %c0_i32, %c0_i32_0 : i32, i32
  }
  func.func @transform_8(%arg0: i32) -> (i32, i32) {
    %c0_i32 = arith.constant 0 : i32
    %c0_i32_0 = arith.constant 0 : i32
    %c0_i32_1 = arith.constant 0 : i32
    return %c0_i32, %c0_i32_0 : i32, i32
  }
  func.func @transform_9(%arg0: i32) -> (i32, i32) {
    %c0_i32 = arith.constant 0 : i32
    %c0_i32_0 = arith.constant 0 : i32
    return %arg0, %c0_i32 : i32, i32
  }
}

</mosaic_0001>

<llo_original>
// kernel: fcn_forward.1
$region0: #{fcn_forward.1}
  #allocation0 [shape = 'u32[]', space=smem, size = 0x4, offset = 0x4, fixed_abs, tag = 'smem constant byte address 0x4 - core index']
  #allocation1 [shape = 'u32[72,128]{1,0:T(1,128)}', space=vmem, size = 0x9000, scoped, tag = 'internal scratch']
  #allocation2 [shape = 'bf16[8,20,128]{2,1,0:T(8,128)(2,1)}', space=vmem, size = 0xc000, scoped, tag = 'scratch operand']
  #allocation3 [shape = 'bf16[8,18,256]{2,1,0:T(8,128)(2,1)}', space=vmem, size = 0x18000, scoped, tag = 'scratch operand']
  %s0 = inlined_call_operand.vmem [shape: bf16[8,16,8], index: 0, kind: input, shape index: {}]
  %s1 = inlined_call_operand.vmem [shape: bf16[8,128], index: 1, kind: input, shape index: {}]
  %s2 = inlined_call_operand.vmem [shape: f32[1,128], index: 2, kind: input, shape index: {}]
  %s3 = inlined_call_operand.vmem [shape: bf16[640,256], index: 3, kind: input, shape index: {}]
  %s4 = inlined_call_operand.vmem [shape: f32[1,256], index: 4, kind: input, shape index: {}]
  %s5 = inlined_call_operand.vmem [shape: bf16[768,128], index: 5, kind: input, shape index: {}]
  %s6 = inlined_call_operand.vmem [shape: f32[1,128], index: 6, kind: input, shape index: {}]
  %s7 = inlined_call_operand.vmem [shape: bf16[128,128], index: 7, kind: input, shape index: {}]
  %s8 = inlined_call_operand.vmem [shape: f32[1,128], index: 8, kind: input, shape index: {}]
  %s9 = inlined_call_operand.vmem [shape: f32[8,128], index: 9, kind: output, shape index: {}]
  %s10 = sld [smem:[#allocation0]]
  $region46: #{fcn_forward.1} parent=0
    _
  %s12 = ssub.s32 1, %s10
  %s13 = scalar_select 0, %s12, %s10
  // Predicated region
  $region2: #{fcn_forward.1} parent=0 // pred_check
    _
  $region3: #{fcn_forward.1} parent=0 // pred_check_branch
    %15 = sbr.rel (0) target = $region5
  $region4: #{fcn_forward.1} parent=0 // pred_region
    _
  $region5: #{fcn_forward.1} parent=0 // pred_fallthru
    _
  // Predicated region
  $region6: #{fcn_forward.1} parent=0 // pred_check
    _
  $region7: #{fcn_forward.1} parent=0 // pred_check_branch
    %17 = sbr.rel (0) target = $region9
  $region8: #{fcn_forward.1} parent=0 // pred_region
    _
  $region9: #{fcn_forward.1} parent=0 // pred_fallthru
    _
  // Predicated region
  $region10: #{fcn_forward.1} parent=0 // pred_check
    _
  $region11: #{fcn_forward.1} parent=0 // pred_check_branch
    %19 = sbr.rel (0) target = $region13
  $region12: #{fcn_forward.1} parent=0 // pred_region
    _
  $region13: #{fcn_forward.1} parent=0 // pred_fallthru
    _
  // Predicated region
  $region14: #{fcn_forward.1} parent=0 // pred_check
    _
  $region15: #{fcn_forward.1} parent=0 // pred_check_branch
    %21 = sbr.rel (0) target = $region17
  $region16: #{fcn_forward.1} parent=0 // pred_region
    _
  $region17: #{fcn_forward.1} parent=0 // pred_fallthru
    _
  // Predicated region
  $region18: #{fcn_forward.1} parent=0 // pred_check
    _
  $region19: #{fcn_forward.1} parent=0 // pred_check_branch
    %23 = sbr.rel (0) target = $region21
  $region20: #{fcn_forward.1} parent=0 // pred_region
    _
  $region21: #{fcn_forward.1} parent=0 // pred_fallthru
    _
  // Predicated region
  $region22: #{fcn_forward.1} parent=0 // pred_check
    _
  $region23: #{fcn_forward.1} parent=0 // pred_check_branch
    %25 = sbr.rel (0) target = $region25
  $region24: #{fcn_forward.1} parent=0 // pred_region
    _
  $region25: #{fcn_forward.1} parent=0 // pred_fallthru
    _
  // Predicated region
  $region26: #{fcn_forward.1} parent=0 // pred_check
    _
  $region27: #{fcn_forward.1} parent=0 // pred_check_branch
    %27 = sbr.rel (0) target = $region29
  $region28: #{fcn_forward.1} parent=0 // pred_region
    _
  $region29: #{fcn_forward.1} parent=0 // pred_fallthru
    _
  // Predicated region
  $region30: #{fcn_forward.1} parent=0 // pred_check
    _
  $region31: #{fcn_forward.1} parent=0 // pred_check_branch
    %29 = sbr.rel (0) target = $region33
  $region32: #{fcn_forward.1} parent=0 // pred_region
    _
  $region33: #{fcn_forward.1} parent=0 // pred_fallthru
    _
  // Predicated region
  $region34: #{fcn_forward.1} parent=0 // pred_check
    _
  $region35: #{fcn_forward.1} parent=0 // pred_check_branch
    %31 = sbr.rel (0) target = $region37
  $region36: #{fcn_forward.1} parent=0 // pred_region
    _
  $region37: #{fcn_forward.1} parent=0 // pred_fallthru
    _
  %v33 = vld [vmem:[%s0] sm:$0xf]
  %v34 = vld [vmem:[%s0 + $0x4] sm:$0xf]
  %v35 = vld [vmem:[%s0 + $0x8] sm:$0xf]
  %v36 = vld [vmem:[%s0 + $0xc] sm:$0xf]
  %v37 = vld [vmem:[%s0 + $0x10] sm:$0xf]
  %v38 = vld [vmem:[%s0 + $0x14] sm:$0xf]
  %v39 = vld [vmem:[%s0 + $0x18] sm:$0xf]
  %v40 = vld [vmem:[%s0 + $0x1c] sm:$0xf]
  %v41 = vld [vmem:[%s0 + $0x20] sm:$0xf]
  %v42 = vld [vmem:[%s0 + $0x24] sm:$0xf]
  %v43 = vld [vmem:[%s0 + $0x28] sm:$0xf]
  %v44 = vld [vmem:[%s0 + $0x2c] sm:$0xf]
  %v45 = vld [vmem:[%s0 + $0x30] sm:$0xf]
  %v46 = vld [vmem:[%s0 + $0x34] sm:$0xf]
  %v47 = vld [vmem:[%s0 + $0x38] sm:$0xf]
  %v48 = vld [vmem:[%s0 + $0x3c] sm:$0xf]
  %v49 = vld [vmem:[%s1] sm:$0xf]
  %v50 = vld [vmem:[%s2] sm:$0x1]
  %v52 = vperm.slane %v50, 0
  %v70 = vunpack.c.l.b16 %v33
  %v71 = vunpack.c.l.b16 %v34
  %v72 = vunpack.c.l.b16 %v35
  %v73 = vunpack.c.l.b16 %v36
  %v74 = vunpack.c.l.b16 %v37
  %v75 = vunpack.c.l.b16 %v38
  %v76 = vunpack.c.l.b16 %v39
  %v77 = vunpack.c.l.b16 %v40
  %v78 = vunpack.c.l.b16 %v41
  %v79 = vunpack.c.l.b16 %v42
  %v80 = vunpack.c.l.b16 %v43
  %v81 = vunpack.c.l.b16 %v44
  %v82 = vunpack.c.l.b16 %v45
  %v83 = vunpack.c.l.b16 %v46
  %v84 = vunpack.c.l.b16 %v47
  %v85 = vunpack.c.l.b16 %v48
  %v86 = vpack.c.b16 %v71, %v70
  %v87 = vpack.c.b16 %v73, %v72
  %v88 = vpack.c.b16 %v75, %v74
  %v89 = vpack.c.b16 %v77, %v76
  %v90 = vpack.c.b16 %v79, %v78
  %v91 = vpack.c.b16 %v81, %v80
  %v92 = vpack.c.b16 %v83, %v82
  %v93 = vpack.c.b16 %v85, %v84
  %vm94 = vcmask 64512
  %v96 = vsel %vm94, %v86, 0
  %v99 = vsel %vm94, %v87, 0
  %v102 = vsel %vm94, %v88, 0
  %v105 = vsel %vm94, %v89, 0
  %v108 = vsel %vm94, %v90, 0
  %v111 = vsel %vm94, %v91, 0
  %v114 = vsel %vm94, %v92, 0
  %v117 = vsel %vm94, %v93, 0
  %vm119 = vcmask 1043456
  %v121 = vsel %vm119, %v49, 0
  %123 = vmatpush.bf16.msra.mxu0 0
  %124 = vmatpush.bf16.msra.mxu0 0
  %125 = vmatpush.bf16.msra.mxu0 0
  %126 = vmatpush.bf16.msra.mxu0 0
  %127 = vmatpush.bf16.msra.mxu0 0
  %128 = vmatpush.bf16.msra.mxu0 0
  %129 = vmatpush.bf16.msra.mxu0 0
  %130 = vmatpush.bf16.msra.mxu0 %v121
  %131 = vmatmul.bf16.gmra.mxu0 %v96
  %v132 = vpop.f32.mrf.mxu0
  %v133 = vadd.f32 %v52, %v132
  %v134 = vpop.f32.mrf.mxu0
  %v135 = vadd.f32 %v52, %v134
  %136 = vmatmul.bf16.gmra.mxu0 %v99
  %v137 = vpop.f32.mrf.mxu0
  %v138 = vadd.f32 %v52, %v137
  %v139 = vpop.f32.mrf.mxu0
  %v140 = vadd.f32 %v52, %v139
  %141 = vmatmul.bf16.gmra.mxu0 %v102
  %v142 = vpop.f32.mrf.mxu0
  %v143 = vadd.f32 %v52, %v142
  %v144 = vpop.f32.mrf.mxu0
  %v145 = vadd.f32 %v52, %v144
  %146 = vmatmul.bf16.gmra.mxu0 %v105
  %v147 = vpop.f32.mrf.mxu0
  %v148 = vadd.f32 %v52, %v147
  %v149 = vpop.f32.mrf.mxu0
  %v150 = vadd.f32 %v52, %v149
  %151 = vmatmul.bf16.gmra.mxu0 %v108
  %v152 = vpop.f32.mrf.mxu0
  %v153 = vadd.f32 %v52, %v152
  %v154 = vpop.f32.mrf.mxu0
  %v155 = vadd.f32 %v52, %v154
  %156 = vmatmul.bf16.gmra.mxu0 %v111
  %v157 = vpop.f32.mrf.mxu0
  %v158 = vadd.f32 %v52, %v157
  %v159 = vpop.f32.mrf.mxu0
  %v160 = vadd.f32 %v52, %v159
  %161 = vmatmul.bf16.gmra.mxu0 %v114
  %v162 = vpop.f32.mrf.mxu0
  %v163 = vadd.f32 %v52, %v162
  %v164 = vpop.f32.mrf.mxu0
  %v165 = vadd.f32 %v52, %v164
  %166 = vmatmul.bf16.gmra.mxu0 %v117
  %v167 = vpop.f32.mrf.mxu0
  %v168 = vadd.f32 %v52, %v167
  %v169 = vpop.f32.mrf.mxu0
  %v170 = vadd.f32 %v52, %v169
  %171 = vdwg.mxu0
  %v172 = vmax.f32 %v133, 0.0
  %v173 = vmax.f32 %v135, 0.0
  %v174 = vmax.f32 %v138, 0.0
  %v175 = vmax.f32 %v140, 0.0
  %v176 = vmax.f32 %v143, 0.0
  %v177 = vmax.f32 %v145, 0.0
  %v178 = vmax.f32 %v148, 0.0
  %v179 = vmax.f32 %v150, 0.0
  %v180 = vmax.f32 %v153, 0.0
  %v181 = vmax.f32 %v155, 0.0
  %v182 = vmax.f32 %v158, 0.0
  %v183 = vmax.f32 %v160, 0.0
  %v184 = vmax.f32 %v163, 0.0
  %v185 = vmax.f32 %v165, 0.0
  %v186 = vmax.f32 %v168, 0.0
  %v187 = vmax.f32 %v170, 0.0
  %188 = vst [vmem:[#allocation2] sm:$0x1] 0
  %189 = vst [vmem:[#allocation2 + $0xc] sm:$0x1] 0
  %190 = vst [vmem:[#allocation2 + $0x18] sm:$0x1] 0
  %191 = vst [vmem:[#allocation2 + $0x24] sm:$0x1] 0
  %192 = vst [vmem:[#allocation2 + $0x30] sm:$0x1] 0
  %193 = vst [vmem:[#allocation2 + $0x3c] sm:$0x1] 0
  %194 = vst [vmem:[#allocation2 + $0x48] sm:$0x1] 0
  %195 = vst [vmem:[#allocation2 + $0x54] sm:$0x1] 0
  %v196 = vpack.c.bf16 %v172, %v172
  %v197 = vpack.c.bf16 %v173, %v173
  %v198 = vpack.c.bf16 %v174, %v174
  %v199 = vpack.c.bf16 %v175, %v175
  %v200 = vpack.c.bf16 %v176, %v176
  %v201 = vpack.c.bf16 %v177, %v177
  %v202 = vpack.c.bf16 %v178, %v178
  %v203 = vpack.c.bf16 %v179, %v179
  %v204 = vpack.c.bf16 %v180, %v180
  %v205 = vpack.c.bf16 %v181, %v181
  %v206 = vpack.c.bf16 %v182, %v182
  %v207 = vpack.c.bf16 %v183, %v183
  %v208 = vpack.c.bf16 %v184, %v184
  %v209 = vpack.c.bf16 %v185, %v185
  %v210 = vpack.c.bf16 %v186, %v186
  %v211 = vpack.c.bf16 %v187, %v187
  %vm228 = vcmask 1040384
  %vm229 = vcmask 1044484
  %vm230 = vmor %vm228, %vm229
  %v231 = vrot.slane %v196, 7
  %v232 = vrot.slane %v231, 4
  %v233 = vrot.slane %v197, 7
  %v234 = vsel %vm230, %v232, %v233
  %v235 = vrot.slane %v233, 4
  %v236 = vrot.slane %v198, 7
  %v237 = vrot.slane %v236, 4
  %v238 = vrot.slane %v199, 7
  %v239 = vsel %vm230, %v237, %v238
  %v240 = vrot.slane %v238, 4
  %v241 = vrot.slane %v200, 7
  %v242 = vrot.slane %v241, 4
  %v243 = vrot.slane %v201, 7
  %v244 = vsel %vm230, %v242, %v243
  %v245 = vrot.slane %v243, 4
  %v246 = vrot.slane %v202, 7
  %v247 = vrot.slane %v246, 4
  %v248 = vrot.slane %v203, 7
  %v249 = vsel %vm230, %v247, %v248
  %v250 = vrot.slane %v248, 4
  %v251 = vrot.slane %v204, 7
  %v252 = vrot.slane %v251, 4
  %v253 = vrot.slane %v205, 7
  %v254 = vsel %vm230, %v252, %v253
  %v255 = vrot.slane %v253, 4
  %v256 = vrot.slane %v206, 7
  %v257 = vrot.slane %v256, 4
  %v258 = vrot.slane %v207, 7
  %v259 = vsel %vm230, %v257, %v258
  %v260 = vrot.slane %v258, 4
  %v261 = vrot.slane %v208, 7
  %v262 = vrot.slane %v261, 4
  %v263 = vrot.slane %v209, 7
  %v264 = vsel %vm230, %v262, %v263
  %v265 = vrot.slane %v263, 4
  %v266 = vrot.slane %v210, 7
  %v267 = vrot.slane %v266, 4
  %v268 = vrot.slane %v211, 7
  %v269 = vsel %vm230, %v267, %v268
  %v270 = vrot.slane %v268, 4
  %295 = vst [vmem:[#allocation2] sm:$0xe] %v231
  %296 = vst [vmem:[#allocation2 + $0x4] sm:$0xf] %v234
  %297 = vst [vmem:[#allocation2 + $0x8] sm:$0x1] %v235
  %298 = vst [vmem:[#allocation2 + $0xc] sm:$0xe] %v236
  %299 = vst [vmem:[#allocation2 + $0x10] sm:$0xf] %v239
  %300 = vst [vmem:[#allocation2 + $0x14] sm:$0x1] %v240
  %301 = vst [vmem:[#allocation2 + $0x18] sm:$0xe] %v241
  %302 = vst [vmem:[#allocation2 + $0x1c] sm:$0xf] %v244
  %303 = vst [vmem:[#allocation2 + $0x20] sm:$0x1] %v245
  %304 = vst [vmem:[#allocation2 + $0x24] sm:$0xe] %v246
  %305 = vst [vmem:[#allocation2 + $0x28] sm:$0xf] %v249
  %306 = vst [vmem:[#allocation2 + $0x2c] sm:$0x1] %v250
  %307 = vst [vmem:[#allocation2 + $0x30] sm:$0xe] %v251
  %308 = vst [vmem:[#allocation2 + $0x34] sm:$0xf] %v254
  %309 = vst [vmem:[#allocation2 + $0x38] sm:$0x1] %v255
  %310 = vst [vmem:[#allocation2 + $0x3c] sm:$0xe] %v256
  %311 = vst [vmem:[#allocation2 + $0x40] sm:$0xf] %v259
  %312 = vst [vmem:[#allocation2 + $0x44] sm:$0x1] %v260
  %313 = vst [vmem:[#allocation2 + $0x48] sm:$0xe] %v261
  %314 = vst [vmem:[#allocation2 + $0x4c] sm:$0xf] %v264
  %315 = vst [vmem:[#allocation2 + $0x50] sm:$0x1] %v265
  %316 = vst [vmem:[#allocation2 + $0x54] sm:$0xe] %v266
  %317 = vst [vmem:[#allocation2 + $0x58] sm:$0xf] %v269
  %318 = vst [vmem:[#allocation2 + $0x5c] sm:$0x1] %v270
  %319 = vst [vmem:[#allocation2 + $0x8] sm:$0x2] 0
  %320 = vst [vmem:[#allocation2 + $0x14] sm:$0x2] 0
  %321 = vst [vmem:[#allocation2 + $0x20] sm:$0x2] 0
  %322 = vst [vmem:[#allocation2 + $0x2c] sm:$0x2] 0
  %323 = vst [vmem:[#allocation2 + $0x38] sm:$0x2] 0
  %324 = vst [vmem:[#allocation2 + $0x44] sm:$0x2] 0
  %325 = vst [vmem:[#allocation2 + $0x50] sm:$0x2] 0
  %326 = vst [vmem:[#allocation2 + $0x5c] sm:$0x2] 0
  %v327 = vld [vmem:[#allocation2] sm:$0xf]
  %v328 = vld [vmem:[#allocation2 + $0x4] sm:$0xf]
  %v329 = vld [vmem:[#allocation2 + $0xc] sm:$0xf]
  %v330 = vld [vmem:[#allocation2 + $0x10] sm:$0xf]
  %v331 = vld [vmem:[#allocation2 + $0x18] sm:$0xf]
  %v332 = vld [vmem:[#allocation2 + $0x1c] sm:$0xf]
  %v333 = vld [vmem:[#allocation2 + $0x24] sm:$0xf]
  %v334 = vld [vmem:[#allocation2 + $0x28] sm:$0xf]
  %v335 = vld [vmem:[#allocation2 + $0x30] sm:$0xf]
  %v336 = vld [vmem:[#allocation2 + $0x34] sm:$0xf]
  %v337 = vld [vmem:[#allocation2 + $0x3c] sm:$0xf]
  %v338 = vld [vmem:[#allocation2 + $0x40] sm:$0xf]
  %v339 = vld [vmem:[#allocation2 + $0x48] sm:$0xf]
  %v340 = vld [vmem:[#allocation2 + $0x4c] sm:$0xf]
  %v341 = vld [vmem:[#allocation2 + $0x54] sm:$0xf]
  %v342 = vld [vmem:[#allocation2 + $0x58] sm:$0xf]
  %v343 = vld [vmem:[#allocation2 + $0x8] sm:$0x1]
  %v344 = vld [vmem:[#allocation2 + $0x14] sm:$0x1]
  %v345 = vld [vmem:[#allocation2 + $0x20] sm:$0x1]
  %v346 = vld [vmem:[#allocation2 + $0x2c] sm:$0x1]
  %v347 = vld [vmem:[#allocation2 + $0x38] sm:$0x1]
  %v348 = vld [vmem:[#allocation2 + $0x44] sm:$0x1]
  %v349 = vld [vmem:[#allocation2 + $0x50] sm:$0x1]
  %v350 = vld [vmem:[#allocation2 + $0x5c] sm:$0x1]
  %v367 = vunpack.c.l.b16 %v327
  %v368 = vunpack.c.l.b16 %v328
  %v369 = vunpack.c.l.b16 %v329
  %v370 = vunpack.c.l.b16 %v330
  %v371 = vunpack.c.l.b16 %v331
  %v372 = vunpack.c.l.b16 %v332
  %v373 = vunpack.c.l.b16 %v333
  %v374 = vunpack.c.l.b16 %v334
  %v375 = vunpack.c.l.b16 %v335
  %v376 = vunpack.c.l.b16 %v336
  %v377 = vunpack.c.l.b16 %v337
  %v378 = vunpack.c.l.b16 %v338
  %v379 = vunpack.c.l.b16 %v339
  %v380 = vunpack.c.l.b16 %v340
  %v381 = vunpack.c.l.b16 %v341
  %v382 = vunpack.c.l.b16 %v342
  %v383 = vpack.c.b16 %v368, %v367
  %v384 = vpack.c.b16 %v370, %v369
  %v385 = vpack.c.b16 %v372, %v371
  %v386 = vpack.c.b16 %v374, %v373
  %v387 = vpack.c.b16 %v376, %v375
  %v388 = vpack.c.b16 %v378, %v377
  %v389 = vpack.c.b16 %v380, %v379
  %v390 = vpack.c.b16 %v382, %v381
  %v407 = vunpack.c.l.b16 %v343
  %v408 = vunpack.c.l.b16 %v344
  %v409 = vunpack.c.l.b16 %v345
  %v410 = vunpack.c.l.b16 %v346
  %v411 = vunpack.c.l.b16 %v347
  %v412 = vunpack.c.l.b16 %v348
  %v413 = vunpack.c.l.b16 %v349
  %v414 = vunpack.c.l.b16 %v350
  %v415 = vpack.c.b16 %v407, %v407
  %v416 = vpack.c.b16 %v408, %v408
  %v417 = vpack.c.b16 %v409, %v409
  %v418 = vpack.c.b16 %v410, %v410
  %v419 = vpack.c.b16 %v411, %v411
  %v420 = vpack.c.b16 %v412, %v412
  %v421 = vpack.c.b16 %v413, %v413
  %v422 = vpack.c.b16 %v414, %v414
  %vm423 = vsmask.f32 7424
  %v425 = vshrl.u32 %v383, 16
  %v427 = vshll.u32 %v383, 16
  %v429 = vrot.slane %v427, 1
  %v430 = vor.u32 %v425, %v429
  %v432 = vshll.u32 %v415, 16
  %v434 = vrot.slane %v432, 1
  %v435 = vsel %vm423, %v430, %v434
  %v437 = vshrl.u32 %v384, 16
  %v439 = vshll.u32 %v384, 16
  %v441 = vrot.slane %v439, 1
  %v442 = vor.u32 %v437, %v441
  %v444 = vshll.u32 %v416, 16
  %v446 = vrot.slane %v444, 1
  %v447 = vsel %vm423, %v442, %v446
  %v449 = vshrl.u32 %v385, 16
  %v451 = vshll.u32 %v385, 16
  %v453 = vrot.slane %v451, 1
  %v454 = vor.u32 %v449, %v453
  %v456 = vshll.u32 %v417, 16
  %v458 = vrot.slane %v456, 1
  %v459 = vsel %vm423, %v454, %v458
  %v461 = vshrl.u32 %v386, 16
  %v463 = vshll.u32 %v386, 16
  %v465 = vrot.slane %v463, 1
  %v466 = vor.u32 %v461, %v465
  %v468 = vshll.u32 %v418, 16
  %v470 = vrot.slane %v468, 1
  %v471 = vsel %vm423, %v466, %v470
  %v473 = vshrl.u32 %v387, 16
  %v475 = vshll.u32 %v387, 16
  %v477 = vrot.slane %v475, 1
  %v478 = vor.u32 %v473, %v477
  %v480 = vshll.u32 %v419, 16
  %v482 = vrot.slane %v480, 1
  %v483 = vsel %vm423, %v478, %v482
  %v485 = vshrl.u32 %v388, 16
  %v487 = vshll.u32 %v388, 16
  %v489 = vrot.slane %v487, 1
  %v490 = vor.u32 %v485, %v489
  %v492 = vshll.u32 %v420, 16
  %v494 = vrot.slane %v492, 1
  %v495 = vsel %vm423, %v490, %v494
  %v497 = vshrl.u32 %v389, 16
  %v499 = vshll.u32 %v389, 16
  %v501 = vrot.slane %v499, 1
  %v502 = vor.u32 %v497, %v501
  %v504 = vshll.u32 %v421, 16
  %v506 = vrot.slane %v504, 1
  %v507 = vsel %vm423, %v502, %v506
  %v509 = vshrl.u32 %v390, 16
  %v511 = vshll.u32 %v390, 16
  %v513 = vrot.slane %v511, 1
  %v514 = vor.u32 %v509, %v513
  %v516 = vshll.u32 %v422, 16
  %v518 = vrot.slane %v516, 1
  %v519 = vsel %vm423, %v514, %v518
  %v528 = vld [vmem:[%s3] sm:$0xff]
  %v529 = vld [vmem:[%s3 + $0x8] sm:$0xff]
  %v530 = vld [vmem:[%s3 + $0x10] sm:$0xff]
  %v531 = vld [vmem:[%s3 + $0x18] sm:$0xff]
  %v532 = vld [vmem:[%s3 + $0x20] sm:$0xff]
  %v533 = vld [vmem:[%s3 + $0x28] sm:$0xff]
  %v534 = vld [vmem:[%s3 + $0x30] sm:$0xff]
  %v535 = vld [vmem:[%s3 + $0x38] sm:$0xff]
  %v536 = vld [vmem:[%s3 + $0x40] sm:$0xff]
  %v537 = vld [vmem:[%s3 + $0x48] sm:$0xff]
  %v538 = vld [vmem:[%s3 + $0x50] sm:$0xff]
  %v539 = vld [vmem:[%s3 + $0x58] sm:$0xff]
  %v540 = vld [vmem:[%s3 + $0x60] sm:$0xff]
  %v541 = vld [vmem:[%s3 + $0x68] sm:$0xff]
  %v542 = vld [vmem:[%s3 + $0x70] sm:$0xff]
  %v543 = vld [vmem:[%s3 + $0x78] sm:$0xff]
  %v544 = vld [vmem:[%s3 + $0x80] sm:$0xff]
  %v545 = vld [vmem:[%s3 + $0x88] sm:$0xff]
  %v546 = vld [vmem:[%s3 + $0x90] sm:$0xff]
  %v547 = vld [vmem:[%s3 + $0x98] sm:$0xff]
  %v548 = vld [vmem:[%s3 + $0xa0] sm:$0xff]
  %v549 = vld [vmem:[%s3 + $0xa8] sm:$0xff]
  %v550 = vld [vmem:[%s3 + $0xb0] sm:$0xff]
  %v551 = vld [vmem:[%s3 + $0xb8] sm:$0xff]
  %v552 = vld [vmem:[%s3 + $0xc0] sm:$0xff]
  %v553 = vld [vmem:[%s3 + $0xc8] sm:$0xff]
  %v554 = vld [vmem:[%s3 + $0xd0] sm:$0xff]
  %v555 = vld [vmem:[%s3 + $0xd8] sm:$0xff]
  %v556 = vld [vmem:[%s3 + $0xe0] sm:$0xff]
  %v557 = vld [vmem:[%s3 + $0xe8] sm:$0xff]
  %v558 = vld [vmem:[%s3 + $0xf0] sm:$0xff]
  %v559 = vld [vmem:[%s3 + $0xf8] sm:$0xff]
  %v560 = vld [vmem:[#allocation2] sm:$0xe]
  %v561 = vld [vmem:[#allocation2 + $0xc] sm:$0xe]
  %v562 = vld [vmem:[#allocation2 + $0x18] sm:$0xe]
  %v563 = vld [vmem:[#allocation2 + $0x24] sm:$0xe]
  %v564 = vld [vmem:[#allocation2 + $0x30] sm:$0xe]
  %v565 = vld [vmem:[#allocation2 + $0x3c] sm:$0xe]
  %v566 = vld [vmem:[#allocation2 + $0x48] sm:$0xe]
  %v567 = vld [vmem:[#allocation2 + $0x54] sm:$0xe]
  %v568 = vld [vmem:[#allocation2 + $0x8] sm:$0x3]
  %v569 = vld [vmem:[#allocation2 + $0x14] sm:$0x3]
  %v570 = vld [vmem:[#allocation2 + $0x20] sm:$0x3]
  %v571 = vld [vmem:[#allocation2 + $0x2c] sm:$0x3]
  %v572 = vld [vmem:[#allocation2 + $0x38] sm:$0x3]
  %v573 = vld [vmem:[#allocation2 + $0x44] sm:$0x3]
  %v574 = vld [vmem:[#allocation2 + $0x50] sm:$0x3]
  %v575 = vld [vmem:[#allocation2 + $0x5c] sm:$0x3]
  %v584 = vunpack.c.l.b16 %v560
  %v585 = vunpack.c.l.b16 %v561
  %v586 = vunpack.c.l.b16 %v562
  %v587 = vunpack.c.l.b16 %v563
  %v588 = vunpack.c.l.b16 %v564
  %v589 = vunpack.c.l.b16 %v565
  %v590 = vunpack.c.l.b16 %v566
  %v591 = vunpack.c.l.b16 %v567
  %v592 = vpack.c.b16 %v368, %v584
  %v593 = vpack.c.b16 %v370, %v585
  %v594 = vpack.c.b16 %v372, %v586
  %v595 = vpack.c.b16 %v374, %v587
  %v596 = vpack.c.b16 %v376, %v588
  %v597 = vpack.c.b16 %v378, %v589
  %v598 = vpack.c.b16 %v380, %v590
  %v599 = vpack.c.b16 %v382, %v591
  %v608 = vunpack.c.l.b16 %v568
  %v609 = vunpack.c.l.b16 %v569
  %v610 = vunpack.c.l.b16 %v570
  %v611 = vunpack.c.l.b16 %v571
  %v612 = vunpack.c.l.b16 %v572
  %v613 = vunpack.c.l.b16 %v573
  %v614 = vunpack.c.l.b16 %v574
  %v615 = vunpack.c.l.b16 %v575
  %v616 = vpack.c.b16 %v608, %v608
  %v617 = vpack.c.b16 %v609, %v609
  %v618 = vpack.c.b16 %v610, %v610
  %v619 = vpack.c.b16 %v611, %v611
  %v620 = vpack.c.b16 %v612, %v612
  %v621 = vpack.c.b16 %v613, %v613
  %v622 = vpack.c.b16 %v614, %v614
  %v623 = vpack.c.b16 %v615, %v615
  %v625 = vshrl.u32 %v592, 16
  %v627 = vshll.u32 %v592, 16
  %v629 = vrot.slane %v627, 1
  %v630 = vor.u32 %v625, %v629
  %v632 = vshll.u32 %v616, 16
  %v634 = vrot.slane %v632, 1
  %v635 = vsel %vm423, %v630, %v634
  %v636 = vshrl.u32 %v616, 16
  %v638 = vor.u32 %v636, %v634
  %v640 = vshrl.u32 %v593, 16
  %v642 = vshll.u32 %v593, 16
  %v644 = vrot.slane %v642, 1
  %v645 = vor.u32 %v640, %v644
  %v647 = vshll.u32 %v617, 16
  %v649 = vrot.slane %v647, 1
  %v650 = vsel %vm423, %v645, %v649
  %v651 = vshrl.u32 %v617, 16
  %v653 = vor.u32 %v651, %v649
  %v655 = vshrl.u32 %v594, 16
  %v657 = vshll.u32 %v594, 16
  %v659 = vrot.slane %v657, 1
  %v660 = vor.u32 %v655, %v659
  %v662 = vshll.u32 %v618, 16
  %v664 = vrot.slane %v662, 1
  %v665 = vsel %vm423, %v660, %v664
  %v666 = vshrl.u32 %v618, 16
  %v668 = vor.u32 %v666, %v664
  %v670 = vshrl.u32 %v595, 16
  %v672 = vshll.u32 %v595, 16
  %v674 = vrot.slane %v672, 1
  %v675 = vor.u32 %v670, %v674
  %v677 = vshll.u32 %v619, 16
  %v679 = vrot.slane %v677, 1
  %v680 = vsel %vm423, %v675, %v679
  %v681 = vshrl.u32 %v619, 16
  %v683 = vor.u32 %v681, %v679
  %v685 = vshrl.u32 %v596, 16
  %v687 = vshll.u32 %v596, 16
  %v689 = vrot.slane %v687, 1
  %v690 = vor.u32 %v685, %v689
  %v692 = vshll.u32 %v620, 16
  %v694 = vrot.slane %v692, 1
  %v695 = vsel %vm423, %v690, %v694
  %v696 = vshrl.u32 %v620, 16
  %v698 = vor.u32 %v696, %v694
  %v700 = vshrl.u32 %v597, 16
  %v702 = vshll.u32 %v597, 16
  %v704 = vrot.slane %v702, 1
  %v705 = vor.u32 %v700, %v704
  %v707 = vshll.u32 %v621, 16
  %v709 = vrot.slane %v707, 1
  %v710 = vsel %vm423, %v705, %v709
  %v711 = vshrl.u32 %v621, 16
  %v713 = vor.u32 %v711, %v709
  %v715 = vshrl.u32 %v598, 16
  %v717 = vshll.u32 %v598, 16
  %v719 = vrot.slane %v717, 1
  %v720 = vor.u32 %v715, %v719
  %v722 = vshll.u32 %v622, 16
  %v724 = vrot.slane %v722, 1
  %v725 = vsel %vm423, %v720, %v724
  %v726 = vshrl.u32 %v622, 16
  %v728 = vor.u32 %v726, %v724
  %v730 = vshrl.u32 %v599, 16
  %v732 = vshll.u32 %v599, 16
  %v734 = vrot.slane %v732, 1
  %v735 = vor.u32 %v730, %v734
  %v737 = vshll.u32 %v623, 16
  %v739 = vrot.slane %v737, 1
  %v740 = vsel %vm423, %v735, %v739
  %v741 = vshrl.u32 %v623, 16
  %v743 = vor.u32 %v741, %v739
  %vm744 = vcmask 1046528
  %v745 = vrot.slane %v592, 1
  %v746 = vrot.slane %v415, 1
  %v747 = vsel %vm744, %v745, %v746
  %v748 = vrot.slane %v635, 1
  %v749 = vrot.slane %v638, 1
  %v750 = vsel %vm744, %v748, %v749
  %v751 = vrot.slane %v593, 1
  %v752 = vrot.slane %v416, 1
  %v753 = vsel %vm744, %v751, %v752
  %v754 = vrot.slane %v650, 1
  %v755 = vrot.slane %v653, 1
  %v756 = vsel %vm744, %v754, %v755
  %v757 = vrot.slane %v594, 1
  %v758 = vrot.slane %v417, 1
  %v759 = vsel %vm744, %v757, %v758
  %v760 = vrot.slane %v665, 1
  %v761 = vrot.slane %v668, 1
  %v762 = vsel %vm744, %v760, %v761
  %v763 = vrot.slane %v595, 1
  %v764 = vrot.slane %v418, 1
  %v765 = vsel %vm744, %v763, %v764
  %v766 = vrot.slane %v680, 1
  %v767 = vrot.slane %v683, 1
  %v768 = vsel %vm744, %v766, %v767
  %v769 = vrot.slane %v596, 1
  %v770 = vrot.slane %v419, 1
  %v771 = vsel %vm744, %v769, %v770
  %v772 = vrot.slane %v695, 1
  %v773 = vrot.slane %v698, 1
  %v774 = vsel %vm744, %v772, %v773
  %v775 = vrot.slane %v597, 1
  %v776 = vrot.slane %v420, 1
  %v777 = vsel %vm744, %v775, %v776
  %v778 = vrot.slane %v710, 1
  %v779 = vrot.slane %v713, 1
  %v780 = vsel %vm744, %v778, %v779
  %v781 = vrot.slane %v598, 1
  %v782 = vrot.slane %v421, 1
  %v783 = vsel %vm744, %v781, %v782
  %v784 = vrot.slane %v725, 1
  %v785 = vrot.slane %v728, 1
  %v786 = vsel %vm744, %v784, %v785
  %v787 = vrot.slane %v599, 1
  %v788 = vrot.slane %v422, 1
  %v789 = vsel %vm744, %v787, %v788
  %v790 = vrot.slane %v740, 1
  %v791 = vrot.slane %v743, 1
  %v792 = vsel %vm744, %v790, %v791
  %v809 = vld [vmem:[%s3 + $0x100] sm:$0xff]
  %v810 = vld [vmem:[%s3 + $0x108] sm:$0xff]
  %v811 = vld [vmem:[%s3 + $0x110] sm:$0xff]
  %v812 = vld [vmem:[%s3 + $0x118] sm:$0xff]
  %v813 = vld [vmem:[%s3 + $0x120] sm:$0xff]
  %v814 = vld [vmem:[%s3 + $0x128] sm:$0xff]
  %v815 = vld [vmem:[%s3 + $0x130] sm:$0xff]
  %v816 = vld [vmem:[%s3 + $0x138] sm:$0xff]
  %v817 = vld [vmem:[%s3 + $0x140] sm:$0xff]
  %v818 = vld [vmem:[%s3 + $0x148] sm:$0xff]
  %v819 = vld [vmem:[%s3 + $0x150] sm:$0xff]
  %v820 = vld [vmem:[%s3 + $0x158] sm:$0xff]
  %v821 = vld [vmem:[%s3 + $0x160] sm:$0xff]
  %v822 = vld [vmem:[%s3 + $0x168] sm:$0xff]
  %v823 = vld [vmem:[%s3 + $0x170] sm:$0xff]
  %v824 = vld [vmem:[%s3 + $0x178] sm:$0xff]
  %v825 = vld [vmem:[%s3 + $0x180] sm:$0xff]
  %v826 = vld [vmem:[%s3 + $0x188] sm:$0xff]
  %v827 = vld [vmem:[%s3 + $0x190] sm:$0xff]
  %v828 = vld [vmem:[%s3 + $0x198] sm:$0xff]
  %v829 = vld [vmem:[%s3 + $0x1a0] sm:$0xff]
  %v830 = vld [vmem:[%s3 + $0x1a8] sm:$0xff]
  %v831 = vld [vmem:[%s3 + $0x1b0] sm:$0xff]
  %v832 = vld [vmem:[%s3 + $0x1b8] sm:$0xff]
  %v833 = vld [vmem:[%s3 + $0x1c0] sm:$0xff]
  %v834 = vld [vmem:[%s3 + $0x1c8] sm:$0xff]
  %v835 = vld [vmem:[%s3 + $0x1d0] sm:$0xff]
  %v836 = vld [vmem:[%s3 + $0x1d8] sm:$0xff]
  %v837 = vld [vmem:[%s3 + $0x1e0] sm:$0xff]
  %v838 = vld [vmem:[%s3 + $0x1e8] sm:$0xff]
  %v839 = vld [vmem:[%s3 + $0x1f0] sm:$0xff]
  %v840 = vld [vmem:[%s3 + $0x1f8] sm:$0xff]
  %v873 = vunpack.c.l.b16 %v809
  %v874 = vunpack.c.h.b16 %v809
  %v875 = vunpack.c.l.b16 %v810
  %v876 = vunpack.c.h.b16 %v810
  %v877 = vunpack.c.l.b16 %v811
  %v878 = vunpack.c.h.b16 %v811
  %v879 = vunpack.c.l.b16 %v812
  %v880 = vunpack.c.h.b16 %v812
  %v881 = vunpack.c.l.b16 %v813
  %v882 = vunpack.c.h.b16 %v813
  %v883 = vunpack.c.l.b16 %v814
  %v884 = vunpack.c.h.b16 %v814
  %v885 = vunpack.c.l.b16 %v815
  %v886 = vunpack.c.h.b16 %v815
  %v887 = vunpack.c.l.b16 %v816
  %v888 = vunpack.c.h.b16 %v816
  %v889 = vunpack.c.l.b16 %v817
  %v890 = vunpack.c.h.b16 %v817
  %v891 = vunpack.c.l.b16 %v818
  %v892 = vunpack.c.h.b16 %v818
  %v893 = vunpack.c.l.b16 %v819
  %v894 = vunpack.c.h.b16 %v819
  %v895 = vunpack.c.l.b16 %v820
  %v896 = vunpack.c.h.b16 %v820
  %v897 = vunpack.c.l.b16 %v821
  %v898 = vunpack.c.h.b16 %v821
  %v899 = vunpack.c.l.b16 %v822
  %v900 = vunpack.c.h.b16 %v822
  %v901 = vunpack.c.l.b16 %v823
  %v902 = vunpack.c.h.b16 %v823
  %v903 = vunpack.c.l.b16 %v824
  %v904 = vunpack.c.h.b16 %v824
  %v905 = vunpack.c.l.b16 %v825
  %v906 = vunpack.c.h.b16 %v825
  %v907 = vunpack.c.l.b16 %v826
  %v908 = vunpack.c.h.b16 %v826
  %v909 = vunpack.c.l.b16 %v827
  %v910 = vunpack.c.h.b16 %v827
  %v911 = vunpack.c.l.b16 %v828
  %v912 = vunpack.c.h.b16 %v828
  %v913 = vunpack.c.l.b16 %v829
  %v914 = vunpack.c.h.b16 %v829
  %v915 = vunpack.c.l.b16 %v830
  %v916 = vunpack.c.h.b16 %v830
  %v917 = vunpack.c.l.b16 %v831
  %v918 = vunpack.c.h.b16 %v831
  %v919 = vunpack.c.l.b16 %v832
  %v920 = vunpack.c.h.b16 %v832
  %v921 = vunpack.c.l.b16 %v833
  %v922 = vunpack.c.h.b16 %v833
  %v923 = vunpack.c.l.b16 %v834
  %v924 = vunpack.c.h.b16 %v834
  %v925 = vunpack.c.l.b16 %v835
  %v926 = vunpack.c.h.b16 %v835
  %v927 = vunpack.c.l.b16 %v836
  %v928 = vunpack.c.h.b16 %v836
  %v929 = vunpack.c.l.b16 %v837
  %v930 = vunpack.c.h.b16 %v837
  %v931 = vunpack.c.l.b16 %v838
  %v932 = vunpack.c.h.b16 %v838
  %v933 = vunpack.c.l.b16 %v839
  %v934 = vunpack.c.h.b16 %v839
  %v935 = vunpack.c.l.b16 %v840
  %v936 = vunpack.c.h.b16 %v840
  %v937 = vpack.c.b16 %v875, %v873
  %v938 = vpack.c.b16 %v876, %v874
  %v939 = vpack.c.b16 %v879, %v877
  %v940 = vpack.c.b16 %v880, %v878
  %v941 = vpack.c.b16 %v883, %v881
  %v942 = vpack.c.b16 %v884, %v882
  %v943 = vpack.c.b16 %v887, %v885
  %v944 = vpack.c.b16 %v888, %v886
  %v945 = vpack.c.b16 %v891, %v889
  %v946 = vpack.c.b16 %v892, %v890
  %v947 = vpack.c.b16 %v895, %v893
  %v948 = vpack.c.b16 %v896, %v894
  %v949 = vpack.c.b16 %v899, %v897
  %v950 = vpack.c.b16 %v900, %v898
  %v951 = vpack.c.b16 %v903, %v901
  %v952 = vpack.c.b16 %v904, %v902
  %v953 = vpack.c.b16 %v907, %v905
  %v954 = vpack.c.b16 %v908, %v906
  %v955 = vpack.c.b16 %v911, %v909
  %v956 = vpack.c.b16 %v912, %v910
  %v957 = vpack.c.b16 %v915, %v913
  %v958 = vpack.c.b16 %v916, %v914
  %v959 = vpack.c.b16 %v919, %v917
  %v960 = vpack.c.b16 %v920, %v918
  %v961 = vpack.c.b16 %v923, %v921
  %v962 = vpack.c.b16 %v924, %v922
  %v963 = vpack.c.b16 %v927, %v925
  %v964 = vpack.c.b16 %v928, %v926
  %v965 = vpack.c.b16 %v931, %v929
  %v966 = vpack.c.b16 %v932, %v930
  %v967 = vpack.c.b16 %v935, %v933
  %v968 = vpack.c.b16 %v936, %v934
  %1001 = vmatpush.bf16.msra.mxu0 %v951
  %1002 = vmatpush.bf16.msra.mxu0 %v949
  %1003 = vmatpush.bf16.msra.mxu0 %v947
  %1004 = vmatpush.bf16.msra.mxu0 %v945
  %1005 = vmatpush.bf16.msra.mxu0 %v943
  %1006 = vmatpush.bf16.msra.mxu0 %v941
  %1007 = vmatpush.bf16.msra.mxu0 %v939
  %1008 = vmatpush.bf16.msra.mxu0 %v937
  %1009 = vmatmul.bf16.gmra.mxu0 %v747
  %v1010 = vpop.f32.mrf.mxu0
  %v1011 = vadd.f32 0.0, %v1010
  %v1012 = vpop.f32.mrf.mxu0
  %v1013 = vadd.f32 0.0, %v1012
  %1014 = vmatmul.bf16.gmra.mxu0 %v753
  %v1015 = vpop.f32.mrf.mxu0
  %v1016 = vadd.f32 0.0, %v1015
  %v1017 = vpop.f32.mrf.mxu0
  %v1018 = vadd.f32 0.0, %v1017
  %1019 = vmatmul.bf16.gmra.mxu0 %v759
  %v1020 = vpop.f32.mrf.mxu0
  %v1021 = vadd.f32 0.0, %v1020
  %v1022 = vpop.f32.mrf.mxu0
  %v1023 = vadd.f32 0.0, %v1022
  %1024 = vmatmul.bf16.gmra.mxu0 %v765
  %v1025 = vpop.f32.mrf.mxu0
  %v1026 = vadd.f32 0.0, %v1025
  %v1027 = vpop.f32.mrf.mxu0
  %v1028 = vadd.f32 0.0, %v1027
  %1029 = vmatmul.bf16.gmra.mxu0 %v771
  %v1030 = vpop.f32.mrf.mxu0
  %v1031 = vadd.f32 0.0, %v1030
  %v1032 = vpop.f32.mrf.mxu0
  %v1033 = vadd.f32 0.0, %v1032
  %1034 = vmatmul.bf16.gmra.mxu0 %v777
  %v1035 = vpop.f32.mrf.mxu0
  %v1036 = vadd.f32 0.0, %v1035
  %v1037 = vpop.f32.mrf.mxu0
  %v1038 = vadd.f32 0.0, %v1037
  %1039 = vmatmul.bf16.gmra.mxu0 %v783
  %v1040 = vpop.f32.mrf.mxu0
  %v1041 = vadd.f32 0.0, %v1040
  %v1042 = vpop.f32.mrf.mxu0
  %v1043 = vadd.f32 0.0, %v1042
  %1044 = vmatmul.bf16.gmra.mxu0 %v789
  %v1045 = vpop.f32.mrf.mxu0
  %v1046 = vadd.f32 0.0, %v1045
  %v1047 = vpop.f32.mrf.mxu0
  %v1048 = vadd.f32 0.0, %v1047
  %1049 = vdwg.mxu0
  %1050 = vmatpush.bf16.msra.mxu0 %v967
  %1051 = vmatpush.bf16.msra.mxu0 %v965
  %1052 = vmatpush.bf16.msra.mxu0 %v963
  %1053 = vmatpush.bf16.msra.mxu0 %v961
  %1054 = vmatpush.bf16.msra.mxu0 %v959
  %1055 = vmatpush.bf16.msra.mxu0 %v957
  %1056 = vmatpush.bf16.msra.mxu0 %v955
  %1057 = vmatpush.bf16.msra.mxu0 %v953
  %1058 = vmatmul.bf16.gmra.mxu0 %v750
  %v1059 = vpop.f32.mrf.mxu0
  %v1060 = vadd.f32 %v1011, %v1059
  %v1061 = vpop.f32.mrf.mxu0
  %v1062 = vadd.f32 %v1013, %v1061
  %1063 = vmatmul.bf16.gmra.mxu0 %v756
  %v1064 = vpop.f32.mrf.mxu0
  %v1065 = vadd.f32 %v1016, %v1064
  %v1066 = vpop.f32.mrf.mxu0
  %v1067 = vadd.f32 %v1018, %v1066
  %1068 = vmatmul.bf16.gmra.mxu0 %v762
  %v1069 = vpop.f32.mrf.mxu0
  %v1070 = vadd.f32 %v1021, %v1069
  %v1071 = vpop.f32.mrf.mxu0
  %v1072 = vadd.f32 %v1023, %v1071
  %1073 = vmatmul.bf16.gmra.mxu0 %v768
  %v1074 = vpop.f32.mrf.mxu0
  %v1075 = vadd.f32 %v1026, %v1074
  %v1076 = vpop.f32.mrf.mxu0
  %v1077 = vadd.f32 %v1028, %v1076
  %1078 = vmatmul.bf16.gmra.mxu0 %v774
  %v1079 = vpop.f32.mrf.mxu0
  %v1080 = vadd.f32 %v1031, %v1079
  %v1081 = vpop.f32.mrf.mxu0
  %v1082 = vadd.f32 %v1033, %v1081
  %1083 = vmatmul.bf16.gmra.mxu0 %v780
  %v1084 = vpop.f32.mrf.mxu0
  %v1085 = vadd.f32 %v1036, %v1084
  %v1086 = vpop.f32.mrf.mxu0
  %v1087 = vadd.f32 %v1038, %v1086
  %1088 = vmatmul.bf16.gmra.mxu0 %v786
  %v1089 = vpop.f32.mrf.mxu0
  %v1090 = vadd.f32 %v1041, %v1089
  %v1091 = vpop.f32.mrf.mxu0
  %v1092 = vadd.f32 %v1043, %v1091
  %1093 = vmatmul.bf16.gmra.mxu0 %v792
  %v1094 = vpop.f32.mrf.mxu0
  %v1095 = vadd.f32 %v1046, %v1094
  %v1096 = vpop.f32.mrf.mxu0
  %v1097 = vadd.f32 %v1048, %v1096
  %1098 = vdwg.mxu0
  %1099 = vmatpush.bf16.msra.mxu0 %v952
  %1100 = vmatpush.bf16.msra.mxu0 %v950
  %1101 = vmatpush.bf16.msra.mxu0 %v948
  %1102 = vmatpush.bf16.msra.mxu0 %v946
  %1103 = vmatpush.bf16.msra.mxu0 %v944
  %1104 = vmatpush.bf16.msra.mxu0 %v942
  %1105 = vmatpush.bf16.msra.mxu0 %v940
  %1106 = vmatpush.bf16.msra.mxu0 %v938
  %1107 = vmatmul.bf16.gmra.mxu0 %v747
  %v1108 = vpop.f32.mrf.mxu0
  %v1109 = vadd.f32 0.0, %v1108
  %v1110 = vpop.f32.mrf.mxu0
  %v1111 = vadd.f32 0.0, %v1110
  %1112 = vmatmul.bf16.gmra.mxu0 %v753
  %v1113 = vpop.f32.mrf.mxu0
  %v1114 = vadd.f32 0.0, %v1113
  %v1115 = vpop.f32.mrf.mxu0
  %v1116 = vadd.f32 0.0, %v1115
  %1117 = vmatmul.bf16.gmra.mxu0 %v759
  %v1118 = vpop.f32.mrf.mxu0
  %v1119 = vadd.f32 0.0, %v1118
  %v1120 = vpop.f32.mrf.mxu0
  %v1121 = vadd.f32 0.0, %v1120
  %1122 = vmatmul.bf16.gmra.mxu0 %v765
  %v1123 = vpop.f32.mrf.mxu0
  %v1124 = vadd.f32 0.0, %v1123
  %v1125 = vpop.f32.mrf.mxu0
  %v1126 = vadd.f32 0.0, %v1125
  %1127 = vmatmul.bf16.gmra.mxu0 %v771
  %v1128 = vpop.f32.mrf.mxu0
  %v1129 = vadd.f32 0.0, %v1128
  %v1130 = vpop.f32.mrf.mxu0
  %v1131 = vadd.f32 0.0, %v1130
  %1132 = vmatmul.bf16.gmra.mxu0 %v777
  %v1133 = vpop.f32.mrf.mxu0
  %v1134 = vadd.f32 0.0, %v1133
  %v1135 = vpop.f32.mrf.mxu0
  %v1136 = vadd.f32 0.0, %v1135
  %1137 = vmatmul.bf16.gmra.mxu0 %v783
  %v1138 = vpop.f32.mrf.mxu0
  %v1139 = vadd.f32 0.0, %v1138
  %v1140 = vpop.f32.mrf.mxu0
  %v1141 = vadd.f32 0.0, %v1140
  %1142 = vmatmul.bf16.gmra.mxu0 %v789
  %v1143 = vpop.f32.mrf.mxu0
  %v1144 = vadd.f32 0.0, %v1143
  %v1145 = vpop.f32.mrf.mxu0
  %v1146 = vadd.f32 0.0, %v1145
  %1147 = vdwg.mxu0
  %1148 = vmatpush.bf16.msra.mxu0 %v968
  %1149 = vmatpush.bf16.msra.mxu0 %v966
  %1150 = vmatpush.bf16.msra.mxu0 %v964
  %1151 = vmatpush.bf16.msra.mxu0 %v962
  %1152 = vmatpush.bf16.msra.mxu0 %v960
  %1153 = vmatpush.bf16.msra.mxu0 %v958
  %1154 = vmatpush.bf16.msra.mxu0 %v956
  %1155 = vmatpush.bf16.msra.mxu0 %v954
  %1156 = vmatmul.bf16.gmra.mxu0 %v750
  %v1157 = vpop.f32.mrf.mxu0
  %v1158 = vadd.f32 %v1109, %v1157
  %v1159 = vpop.f32.mrf.mxu0
  %v1160 = vadd.f32 %v1111, %v1159
  %1161 = vmatmul.bf16.gmra.mxu0 %v756
  %v1162 = vpop.f32.mrf.mxu0
  %v1163 = vadd.f32 %v1114, %v1162
  %v1164 = vpop.f32.mrf.mxu0
  %v1165 = vadd.f32 %v1116, %v1164
  %1166 = vmatmul.bf16.gmra.mxu0 %v762
  %v1167 = vpop.f32.mrf.mxu0
  %v1168 = vadd.f32 %v1119, %v1167
  %v1169 = vpop.f32.mrf.mxu0
  %v1170 = vadd.f32 %v1121, %v1169
  %1171 = vmatmul.bf16.gmra.mxu0 %v768
  %v1172 = vpop.f32.mrf.mxu0
  %v1173 = vadd.f32 %v1124, %v1172
  %v1174 = vpop.f32.mrf.mxu0
  %v1175 = vadd.f32 %v1126, %v1174
  %1176 = vmatmul.bf16.gmra.mxu0 %v774
  %v1177 = vpop.f32.mrf.mxu0
  %v1178 = vadd.f32 %v1129, %v1177
  %v1179 = vpop.f32.mrf.mxu0
  %v1180 = vadd.f32 %v1131, %v1179
  %1181 = vmatmul.bf16.gmra.mxu0 %v780
  %v1182 = vpop.f32.mrf.mxu0
  %v1183 = vadd.f32 %v1134, %v1182
  %v1184 = vpop.f32.mrf.mxu0
  %v1185 = vadd.f32 %v1136, %v1184
  %1186 = vmatmul.bf16.gmra.mxu0 %v786
  %v1187 = vpop.f32.mrf.mxu0
  %v1188 = vadd.f32 %v1139, %v1187
  %v1189 = vpop.f32.mrf.mxu0
  %v1190 = vadd.f32 %v1141, %v1189
  %1191 = vmatmul.bf16.gmra.mxu0 %v792
  %v1192 = vpop.f32.mrf.mxu0
  %v1193 = vadd.f32 %v1144, %v1192
  %v1194 = vpop.f32.mrf.mxu0
  %v1195 = vadd.f32 %v1146, %v1194
  %1196 = vdwg.mxu0
  %v1229 = vunpack.c.l.b16 %v528
  %v1230 = vunpack.c.h.b16 %v528
  %v1231 = vunpack.c.l.b16 %v529
  %v1232 = vunpack.c.h.b16 %v529
  %v1233 = vunpack.c.l.b16 %v530
  %v1234 = vunpack.c.h.b16 %v530
  %v1235 = vunpack.c.l.b16 %v531
  %v1236 = vunpack.c.h.b16 %v531
  %v1237 = vunpack.c.l.b16 %v532
  %v1238 = vunpack.c.h.b16 %v532
  %v1239 = vunpack.c.l.b16 %v533
  %v1240 = vunpack.c.h.b16 %v533
  %v1241 = vunpack.c.l.b16 %v534
  %v1242 = vunpack.c.h.b16 %v534
  %v1243 = vunpack.c.l.b16 %v535
  %v1244 = vunpack.c.h.b16 %v535
  %v1245 = vunpack.c.l.b16 %v536
  %v1246 = vunpack.c.h.b16 %v536
  %v1247 = vunpack.c.l.b16 %v537
  %v1248 = vunpack.c.h.b16 %v537
  %v1249 = vunpack.c.l.b16 %v538
  %v1250 = vunpack.c.h.b16 %v538
  %v1251 = vunpack.c.l.b16 %v539
  %v1252 = vunpack.c.h.b16 %v539
  %v1253 = vunpack.c.l.b16 %v540
  %v1254 = vunpack.c.h.b16 %v540
  %v1255 = vunpack.c.l.b16 %v541
  %v1256 = vunpack.c.h.b16 %v541
  %v1257 = vunpack.c.l.b16 %v542
  %v1258 = vunpack.c.h.b16 %v542
  %v1259 = vunpack.c.l.b16 %v543
  %v1260 = vunpack.c.h.b16 %v543
  %v1261 = vunpack.c.l.b16 %v544
  %v1262 = vunpack.c.h.b16 %v544
  %v1263 = vunpack.c.l.b16 %v545
  %v1264 = vunpack.c.h.b16 %v545
  %v1265 = vunpack.c.l.b16 %v546
  %v1266 = vunpack.c.h.b16 %v546
  %v1267 = vunpack.c.l.b16 %v547
  %v1268 = vunpack.c.h.b16 %v547
  %v1269 = vunpack.c.l.b16 %v548
  %v1270 = vunpack.c.h.b16 %v548
  %v1271 = vunpack.c.l.b16 %v549
  %v1272 = vunpack.c.h.b16 %v549
  %v1273 = vunpack.c.l.b16 %v550
  %v1274 = vunpack.c.h.b16 %v550
  %v1275 = vunpack.c.l.b16 %v551
  %v1276 = vunpack.c.h.b16 %v551
  %v1277 = vunpack.c.l.b16 %v552
  %v1278 = vunpack.c.h.b16 %v552
  %v1279 = vunpack.c.l.b16 %v553
  %v1280 = vunpack.c.h.b16 %v553
  %v1281 = vunpack.c.l.b16 %v554
  %v1282 = vunpack.c.h.b16 %v554
  %v1283 = vunpack.c.l.b16 %v555
  %v1284 = vunpack.c.h.b16 %v555
  %v1285 = vunpack.c.l.b16 %v556
  %v1286 = vunpack.c.h.b16 %v556
  %v1287 = vunpack.c.l.b16 %v557
  %v1288 = vunpack.c.h.b16 %v557
  %v1289 = vunpack.c.l.b16 %v558
  %v1290 = vunpack.c.h.b16 %v558
  %v1291 = vunpack.c.l.b16 %v559
  %v1292 = vunpack.c.h.b16 %v559
  %v1293 = vpack.c.b16 %v1231, %v1229
  %v1294 = vpack.c.b16 %v1232, %v1230
  %v1295 = vpack.c.b16 %v1235, %v1233
  %v1296 = vpack.c.b16 %v1236, %v1234
  %v1297 = vpack.c.b16 %v1239, %v1237
  %v1298 = vpack.c.b16 %v1240, %v1238
  %v1299 = vpack.c.b16 %v1243, %v1241
  %v1300 = vpack.c.b16 %v1244, %v1242
  %v1301 = vpack.c.b16 %v1247, %v1245
  %v1302 = vpack.c.b16 %v1248, %v1246
  %v1303 = vpack.c.b16 %v1251, %v1249
  %v1304 = vpack.c.b16 %v1252, %v1250
  %v1305 = vpack.c.b16 %v1255, %v1253
  %v1306 = vpack.c.b16 %v1256, %v1254
  %v1307 = vpack.c.b16 %v1259, %v1257
  %v1308 = vpack.c.b16 %v1260, %v1258
  %v1309 = vpack.c.b16 %v1263, %v1261
  %v1310 = vpack.c.b16 %v1264, %v1262
  %v1311 = vpack.c.b16 %v1267, %v1265
  %v1312 = vpack.c.b16 %v1268, %v1266
  %v1313 = vpack.c.b16 %v1271, %v1269
  %v1314 = vpack.c.b16 %v1272, %v1270
  %v1315 = vpack.c.b16 %v1275, %v1273
  %v1316 = vpack.c.b16 %v1276, %v1274
  %v1317 = vpack.c.b16 %v1279, %v1277
  %v1318 = vpack.c.b16 %v1280, %v1278
  %v1319 = vpack.c.b16 %v1283, %v1281
  %v1320 = vpack.c.b16 %v1284, %v1282
  %v1321 = vpack.c.b16 %v1287, %v1285
  %v1322 = vpack.c.b16 %v1288, %v1286
  %v1323 = vpack.c.b16 %v1291, %v1289
  %v1324 = vpack.c.b16 %v1292, %v1290
  %1357 = vmatpush.bf16.msra.mxu0 %v1307
  %1358 = vmatpush.bf16.msra.mxu0 %v1305
  %1359 = vmatpush.bf16.msra.mxu0 %v1303
  %1360 = vmatpush.bf16.msra.mxu0 %v1301
  %1361 = vmatpush.bf16.msra.mxu0 %v1299
  %1362 = vmatpush.bf16.msra.mxu0 %v1297
  %1363 = vmatpush.bf16.msra.mxu0 %v1295
  %1364 = vmatpush.bf16.msra.mxu0 %v1293
  %1365 = vmatmul.bf16.gmra.mxu0 %v383
  %v1366 = vpop.f32.mrf.mxu0
  %v1367 = vadd.f32 %v1060, %v1366
  %v1368 = vpop.f32.mrf.mxu0
  %v1369 = vadd.f32 %v1062, %v1368
  %1370 = vmatmul.bf16.gmra.mxu0 %v384
  %v1371 = vpop.f32.mrf.mxu0
  %v1372 = vadd.f32 %v1065, %v1371
  %v1373 = vpop.f32.mrf.mxu0
  %v1374 = vadd.f32 %v1067, %v1373
  %1375 = vmatmul.bf16.gmra.mxu0 %v385
  %v1376 = vpop.f32.mrf.mxu0
  %v1377 = vadd.f32 %v1070, %v1376
  %v1378 = vpop.f32.mrf.mxu0
  %v1379 = vadd.f32 %v1072, %v1378
  %1380 = vmatmul.bf16.gmra.mxu0 %v386
  %v1381 = vpop.f32.mrf.mxu0
  %v1382 = vadd.f32 %v1075, %v1381
  %v1383 = vpop.f32.mrf.mxu0
  %v1384 = vadd.f32 %v1077, %v1383
  %1385 = vmatmul.bf16.gmra.mxu0 %v387
  %v1386 = vpop.f32.mrf.mxu0
  %v1387 = vadd.f32 %v1080, %v1386
  %v1388 = vpop.f32.mrf.mxu0
  %v1389 = vadd.f32 %v1082, %v1388
  %1390 = vmatmul.bf16.gmra.mxu0 %v388
  %v1391 = vpop.f32.mrf.mxu0
  %v1392 = vadd.f32 %v1085, %v1391
  %v1393 = vpop.f32.mrf.mxu0
  %v1394 = vadd.f32 %v1087, %v1393
  %1395 = vmatmul.bf16.gmra.mxu0 %v389
  %v1396 = vpop.f32.mrf.mxu0
  %v1397 = vadd.f32 %v1090, %v1396
  %v1398 = vpop.f32.mrf.mxu0
  %v1399 = vadd.f32 %v1092, %v1398
  %1400 = vmatmul.bf16.gmra.mxu0 %v390
  %v1401 = vpop.f32.mrf.mxu0
  %v1402 = vadd.f32 %v1095, %v1401
  %v1403 = vpop.f32.mrf.mxu0
  %v1404 = vadd.f32 %v1097, %v1403
  %1405 = vdwg.mxu0
  %1406 = vmatpush.bf16.msra.mxu0 %v1323
  %1407 = vmatpush.bf16.msra.mxu0 %v1321
  %1408 = vmatpush.bf16.msra.mxu0 %v1319
  %1409 = vmatpush.bf16.msra.mxu0 %v1317
  %1410 = vmatpush.bf16.msra.mxu0 %v1315
  %1411 = vmatpush.bf16.msra.mxu0 %v1313
  %1412 = vmatpush.bf16.msra.mxu0 %v1311
  %1413 = vmatpush.bf16.msra.mxu0 %v1309
  %1414 = vmatmul.bf16.gmra.mxu0 %v435
  %v1415 = vpop.f32.mrf.mxu0
  %v1416 = vadd.f32 %v1367, %v1415
  %v1417 = vpop.f32.mrf.mxu0
  %v1418 = vadd.f32 %v1369, %v1417
  %1419 = vmatmul.bf16.gmra.mxu0 %v447
  %v1420 = vpop.f32.mrf.mxu0
  %v1421 = vadd.f32 %v1372, %v1420
  %v1422 = vpop.f32.mrf.mxu0
  %v1423 = vadd.f32 %v1374, %v1422
  %1424 = vmatmul.bf16.gmra.mxu0 %v459
  %v1425 = vpop.f32.mrf.mxu0
  %v1426 = vadd.f32 %v1377, %v1425
  %v1427 = vpop.f32.mrf.mxu0
  %v1428 = vadd.f32 %v1379, %v1427
  %1429 = vmatmul.bf16.gmra.mxu0 %v471
  %v1430 = vpop.f32.mrf.mxu0
  %v1431 = vadd.f32 %v1382, %v1430
  %v1432 = vpop.f32.mrf.mxu0
  %v1433 = vadd.f32 %v1384, %v1432
  %1434 = vmatmul.bf16.gmra.mxu0 %v483
  %v1435 = vpop.f32.mrf.mxu0
  %v1436 = vadd.f32 %v1387, %v1435
  %v1437 = vpop.f32.mrf.mxu0
  %v1438 = vadd.f32 %v1389, %v1437
  %1439 = vmatmul.bf16.gmra.mxu0 %v495
  %v1440 = vpop.f32.mrf.mxu0
  %v1441 = vadd.f32 %v1392, %v1440
  %v1442 = vpop.f32.mrf.mxu0
  %v1443 = vadd.f32 %v1394, %v1442
  %1444 = vmatmul.bf16.gmra.mxu0 %v507
  %v1445 = vpop.f32.mrf.mxu0
  %v1446 = vadd.f32 %v1397, %v1445
  %v1447 = vpop.f32.mrf.mxu0
  %v1448 = vadd.f32 %v1399, %v1447
  %1449 = vmatmul.bf16.gmra.mxu0 %v519
  %v1450 = vpop.f32.mrf.mxu0
  %v1451 = vadd.f32 %v1402, %v1450
  %v1452 = vpop.f32.mrf.mxu0
  %v1453 = vadd.f32 %v1404, %v1452
  %1454 = vdwg.mxu0
  %1455 = vmatpush.bf16.msra.mxu0 %v1308
  %1456 = vmatpush.bf16.msra.mxu0 %v1306
  %1457 = vmatpush.bf16.msra.mxu0 %v1304
  %1458 = vmatpush.bf16.msra.mxu0 %v1302
  %1459 = vmatpush.bf16.msra.mxu0 %v1300
  %1460 = vmatpush.bf16.msra.mxu0 %v1298
  %1461 = vmatpush.bf16.msra.mxu0 %v1296
  %1462 = vmatpush.bf16.msra.mxu0 %v1294
  %1463 = vmatmul.bf16.gmra.mxu0 %v383
  %v1464 = vpop.f32.mrf.mxu0
  %v1465 = vadd.f32 %v1158, %v1464
  %v1466 = vpop.f32.mrf.mxu0
  %v1467 = vadd.f32 %v1160, %v1466
  %1468 = vmatmul.bf16.gmra.mxu0 %v384
  %v1469 = vpop.f32.mrf.mxu0
  %v1470 = vadd.f32 %v1163, %v1469
  %v1471 = vpop.f32.mrf.mxu0
  %v1472 = vadd.f32 %v1165, %v1471
  %1473 = vmatmul.bf16.gmra.mxu0 %v385
  %v1474 = vpop.f32.mrf.mxu0
  %v1475 = vadd.f32 %v1168, %v1474
  %v1476 = vpop.f32.mrf.mxu0
  %v1477 = vadd.f32 %v1170, %v1476
  %1478 = vmatmul.bf16.gmra.mxu0 %v386
  %v1479 = vpop.f32.mrf.mxu0
  %v1480 = vadd.f32 %v1173, %v1479
  %v1481 = vpop.f32.mrf.mxu0
  %v1482 = vadd.f32 %v1175, %v1481
  %1483 = vmatmul.bf16.gmra.mxu0 %v387
  %v1484 = vpop.f32.mrf.mxu0
  %v1485 = vadd.f32 %v1178, %v1484
  %v1486 = vpop.f32.mrf.mxu0
  %v1487 = vadd.f32 %v1180, %v1486
  %1488 = vmatmul.bf16.gmra.mxu0 %v388
  %v1489 = vpop.f32.mrf.mxu0
  %v1490 = vadd.f32 %v1183, %v1489
  %v1491 = vpop.f32.mrf.mxu0
  %v1492 = vadd.f32 %v1185, %v1491
  %1493 = vmatmul.bf16.gmra.mxu0 %v389
  %v1494 = vpop.f32.mrf.mxu0
  %v1495 = vadd.f32 %v1188, %v1494
  %v1496 = vpop.f32.mrf.mxu0
  %v1497 = vadd.f32 %v1190, %v1496
  %1498 = vmatmul.bf16.gmra.mxu0 %v390
  %v1499 = vpop.f32.mrf.mxu0
  %v1500 = vadd.f32 %v1193, %v1499
  %v1501 = vpop.f32.mrf.mxu0
  %v1502 = vadd.f32 %v1195, %v1501
  %1503 = vdwg.mxu0
  %1504 = vmatpush.bf16.msra.mxu0 %v1324
  %1505 = vmatpush.bf16.msra.mxu0 %v1322
  %1506 = vmatpush.bf16.msra.mxu0 %v1320
  %1507 = vmatpush.bf16.msra.mxu0 %v1318
  %1508 = vmatpush.bf16.msra.mxu0 %v1316
  %1509 = vmatpush.bf16.msra.mxu0 %v1314
  %1510 = vmatpush.bf16.msra.mxu0 %v1312
  %1511 = vmatpush.bf16.msra.mxu0 %v1310
  %1512 = vmatmul.bf16.gmra.mxu0 %v435
  %v1513 = vpop.f32.mrf.mxu0
  %v1514 = vadd.f32 %v1465, %v1513
  %v1515 = vpop.f32.mrf.mxu0
  %v1516 = vadd.f32 %v1467, %v1515
  %1517 = vmatmul.bf16.gmra.mxu0 %v447
  %v1518 = vpop.f32.mrf.mxu0
  %v1519 = vadd.f32 %v1470, %v1518
  %v1520 = vpop.f32.mrf.mxu0
  %v1521 = vadd.f32 %v1472, %v1520
  %1522 = vmatmul.bf16.gmra.mxu0 %v459
  %v1523 = vpop.f32.mrf.mxu0
  %v1524 = vadd.f32 %v1475, %v1523
  %v1525 = vpop.f32.mrf.mxu0
  %v1526 = vadd.f32 %v1477, %v1525
  %1527 = vmatmul.bf16.gmra.mxu0 %v471
  %v1528 = vpop.f32.mrf.mxu0
  %v1529 = vadd.f32 %v1480, %v1528
  %v1530 = vpop.f32.mrf.mxu0
  %v1531 = vadd.f32 %v1482, %v1530
  %1532 = vmatmul.bf16.gmra.mxu0 %v483
  %v1533 = vpop.f32.mrf.mxu0
  %v1534 = vadd.f32 %v1485, %v1533
  %v1535 = vpop.f32.mrf.mxu0
  %v1536 = vadd.f32 %v1487, %v1535
  %1537 = vmatmul.bf16.gmra.mxu0 %v495
  %v1538 = vpop.f32.mrf.mxu0
  %v1539 = vadd.f32 %v1490, %v1538
  %v1540 = vpop.f32.mrf.mxu0
  %v1541 = vadd.f32 %v1492, %v1540
  %1542 = vmatmul.bf16.gmra.mxu0 %v507
  %v1543 = vpop.f32.mrf.mxu0
  %v1544 = vadd.f32 %v1495, %v1543
  %v1545 = vpop.f32.mrf.mxu0
  %v1546 = vadd.f32 %v1497, %v1545
  %1547 = vmatmul.bf16.gmra.mxu0 %v519
  %v1548 = vpop.f32.mrf.mxu0
  %v1549 = vadd.f32 %v1500, %v1548
  %v1550 = vpop.f32.mrf.mxu0
  %v1551 = vadd.f32 %v1502, %v1550
  %1552 = vdwg.mxu0
  %v1553 = vld [vmem:[#allocation2] sm:$0xc]
  %v1554 = vld [vmem:[#allocation2 + $0xc] sm:$0xc]
  %v1555 = vld [vmem:[#allocation2 + $0x18] sm:$0xc]
  %v1556 = vld [vmem:[#allocation2 + $0x24] sm:$0xc]
  %v1557 = vld [vmem:[#allocation2 + $0x30] sm:$0xc]
  %v1558 = vld [vmem:[#allocation2 + $0x3c] sm:$0xc]
  %v1559 = vld [vmem:[#allocation2 + $0x48] sm:$0xc]
  %v1560 = vld [vmem:[#allocation2 + $0x54] sm:$0xc]
  %vm1569 = vcmask 1041408
  %vm1570 = vcmask 1045508
  %vm1571 = vmor %vm1569, %vm1570
  %v1572 = vrot.slane %v1553, 6
  %v1573 = vrot.slane %v1572, 4
  %v1574 = vrot.slane %v328, 6
  %v1575 = vsel %vm1571, %v1573, %v1574
  %v1576 = vrot.slane %v1574, 4
  %v1577 = vrot.slane %v568, 6
  %v1578 = vsel %vm1571, %v1576, %v1577
  %v1579 = vrot.slane %v1554, 6
  %v1580 = vrot.slane %v1579, 4
  %v1581 = vrot.slane %v330, 6
  %v1582 = vsel %vm1571, %v1580, %v1581
  %v1583 = vrot.slane %v1581, 4
  %v1584 = vrot.slane %v569, 6
  %v1585 = vsel %vm1571, %v1583, %v1584
  %v1586 = vrot.slane %v1555, 6
  %v1587 = vrot.slane %v1586, 4
  %v1588 = vrot.slane %v332, 6
  %v1589 = vsel %vm1571, %v1587, %v1588
  %v1590 = vrot.slane %v1588, 4
  %v1591 = vrot.slane %v570, 6
  %v1592 = vsel %vm1571, %v1590, %v1591
  %v1593 = vrot.slane %v1556, 6
  %v1594 = vrot.slane %v1593, 4
  %v1595 = vrot.slane %v334, 6
  %v1596 = vsel %vm1571, %v1594, %v1595
  %v1597 = vrot.slane %v1595, 4
  %v1598 = vrot.slane %v571, 6
  %v1599 = vsel %vm1571, %v1597, %v1598
  %v1600 = vrot.slane %v1557, 6
  %v1601 = vrot.slane %v1600, 4
  %v1602 = vrot.slane %v336, 6
  %v1603 = vsel %vm1571, %v1601, %v1602
  %v1604 = vrot.slane %v1602, 4
  %v1605 = vrot.slane %v572, 6
  %v1606 = vsel %vm1571, %v1604, %v1605
  %v1607 = vrot.slane %v1558, 6
  %v1608 = vrot.slane %v1607, 4
  %v1609 = vrot.slane %v338, 6
  %v1610 = vsel %vm1571, %v1608, %v1609
  %v1611 = vrot.slane %v1609, 4
  %v1612 = vrot.slane %v573, 6
  %v1613 = vsel %vm1571, %v1611, %v1612
  %v1614 = vrot.slane %v1559, 6
  %v1615 = vrot.slane %v1614, 4
  %v1616 = vrot.slane %v340, 6
  %v1617 = vsel %vm1571, %v1615, %v1616
  %v1618 = vrot.slane %v1616, 4
  %v1619 = vrot.slane %v574, 6
  %v1620 = vsel %vm1571, %v1618, %v1619
  %v1621 = vrot.slane %v1560, 6
  %v1622 = vrot.slane %v1621, 4
  %v1623 = vrot.slane %v342, 6
  %v1624 = vsel %vm1571, %v1622, %v1623
  %v1625 = vrot.slane %v1623, 4
  %v1626 = vrot.slane %v575, 6
  %v1627 = vsel %vm1571, %v1625, %v1626
  %v1628 = vld [vmem:[%s3 + $0x200] sm:$0xff]
  %v1629 = vld [vmem:[%s3 + $0x208] sm:$0xff]
  %v1630 = vld [vmem:[%s3 + $0x210] sm:$0xff]
  %v1631 = vld [vmem:[%s3 + $0x218] sm:$0xff]
  %v1632 = vld [vmem:[%s3 + $0x220] sm:$0xff]
  %v1633 = vld [vmem:[%s3 + $0x228] sm:$0xff]
  %v1634 = vld [vmem:[%s3 + $0x230] sm:$0xff]
  %v1635 = vld [vmem:[%s3 + $0x238] sm:$0xff]
  %v1636 = vld [vmem:[%s3 + $0x240] sm:$0xff]
  %v1637 = vld [vmem:[%s3 + $0x248] sm:$0xff]
  %v1638 = vld [vmem:[%s3 + $0x250] sm:$0xff]
  %v1639 = vld [vmem:[%s3 + $0x258] sm:$0xff]
  %v1640 = vld [vmem:[%s3 + $0x260] sm:$0xff]
  %v1641 = vld [vmem:[%s3 + $0x268] sm:$0xff]
  %v1642 = vld [vmem:[%s3 + $0x270] sm:$0xff]
  %v1643 = vld [vmem:[%s3 + $0x278] sm:$0xff]
  %v1644 = vunpack.c.l.b16 %v1575
  %v1645 = vunpack.c.l.b16 %v1578
  %v1646 = vunpack.c.l.b16 %v1582
  %v1647 = vunpack.c.l.b16 %v1585
  %v1648 = vunpack.c.l.b16 %v1589
  %v1649 = vunpack.c.l.b16 %v1592
  %v1650 = vunpack.c.l.b16 %v1596
  %v1651 = vunpack.c.l.b16 %v1599
  %v1652 = vunpack.c.l.b16 %v1603
  %v1653 = vunpack.c.l.b16 %v1606
  %v1654 = vunpack.c.l.b16 %v1610
  %v1655 = vunpack.c.l.b16 %v1613
  %v1656 = vunpack.c.l.b16 %v1617
  %v1657 = vunpack.c.l.b16 %v1620
  %v1658 = vunpack.c.l.b16 %v1624
  %v1659 = vunpack.c.l.b16 %v1627
  %v1660 = vpack.c.b16 %v1645, %v1644
  %v1661 = vpack.c.b16 %v1647, %v1646
  %v1662 = vpack.c.b16 %v1649, %v1648
  %v1663 = vpack.c.b16 %v1651, %v1650
  %v1664 = vpack.c.b16 %v1653, %v1652
  %v1665 = vpack.c.b16 %v1655, %v1654
  %v1666 = vpack.c.b16 %v1657, %v1656
  %v1667 = vpack.c.b16 %v1659, %v1658
  %v1692 = vunpack.c.l.b16 %v1628
  %v1693 = vunpack.c.h.b16 %v1628
  %v1694 = vunpack.c.l.b16 %v1629
  %v1695 = vunpack.c.h.b16 %v1629
  %v1696 = vunpack.c.l.b16 %v1630
  %v1697 = vunpack.c.h.b16 %v1630
  %v1698 = vunpack.c.l.b16 %v1631
  %v1699 = vunpack.c.h.b16 %v1631
  %v1700 = vunpack.c.l.b16 %v1632
  %v1701 = vunpack.c.h.b16 %v1632
  %v1702 = vunpack.c.l.b16 %v1633
  %v1703 = vunpack.c.h.b16 %v1633
  %v1704 = vunpack.c.l.b16 %v1634
  %v1705 = vunpack.c.h.b16 %v1634
  %v1706 = vunpack.c.l.b16 %v1635
  %v1707 = vunpack.c.h.b16 %v1635
  %v1708 = vunpack.c.l.b16 %v1636
  %v1709 = vunpack.c.h.b16 %v1636
  %v1710 = vunpack.c.l.b16 %v1637
  %v1711 = vunpack.c.h.b16 %v1637
  %v1712 = vunpack.c.l.b16 %v1638
  %v1713 = vunpack.c.h.b16 %v1638
  %v1714 = vunpack.c.l.b16 %v1639
  %v1715 = vunpack.c.h.b16 %v1639
  %v1716 = vunpack.c.l.b16 %v1640
  %v1717 = vunpack.c.h.b16 %v1640
  %v1718 = vunpack.c.l.b16 %v1641
  %v1719 = vunpack.c.h.b16 %v1641
  %v1720 = vunpack.c.l.b16 %v1642
  %v1721 = vunpack.c.h.b16 %v1642
  %v1722 = vunpack.c.l.b16 %v1643
  %v1723 = vunpack.c.h.b16 %v1643
  %v1724 = vpack.c.b16 %v1694, %v1692
  %v1725 = vpack.c.b16 %v1695, %v1693
  %v1726 = vpack.c.b16 %v1698, %v1696
  %v1727 = vpack.c.b16 %v1699, %v1697
  %v1728 = vpack.c.b16 %v1702, %v1700
  %v1729 = vpack.c.b16 %v1703, %v1701
  %v1730 = vpack.c.b16 %v1706, %v1704
  %v1731 = vpack.c.b16 %v1707, %v1705
  %v1732 = vpack.c.b16 %v1710, %v1708
  %v1733 = vpack.c.b16 %v1711, %v1709
  %v1734 = vpack.c.b16 %v1714, %v1712
  %v1735 = vpack.c.b16 %v1715, %v1713
  %v1736 = vpack.c.b16 %v1718, %v1716
  %v1737 = vpack.c.b16 %v1719, %v1717
  %v1738 = vpack.c.b16 %v1722, %v1720
  %v1739 = vpack.c.b16 %v1723, %v1721
  %1756 = vmatpush.bf16.msra.mxu0 %v1738
  %1757 = vmatpush.bf16.msra.mxu0 %v1736
  %1758 = vmatpush.bf16.msra.mxu0 %v1734
  %1759 = vmatpush.bf16.msra.mxu0 %v1732
  %1760 = vmatpush.bf16.msra.mxu0 %v1730
  %1761 = vmatpush.bf16.msra.mxu0 %v1728
  %1762 = vmatpush.bf16.msra.mxu0 %v1726
  %1763 = vmatpush.bf16.msra.mxu0 %v1724
  %1764 = vmatmul.bf16.gmra.mxu0 %v1660
  %v1765 = vpop.f32.mrf.mxu0
  %v1766 = vadd.f32 0.0, %v1765
  %v1767 = vpop.f32.mrf.mxu0
  %v1768 = vadd.f32 0.0, %v1767
  %1769 = vmatmul.bf16.gmra.mxu0 %v1661
  %v1770 = vpop.f32.mrf.mxu0
  %v1771 = vadd.f32 0.0, %v1770
  %v1772 = vpop.f32.mrf.mxu0
  %v1773 = vadd.f32 0.0, %v1772
  %1774 = vmatmul.bf16.gmra.mxu0 %v1662
  %v1775 = vpop.f32.mrf.mxu0
  %v1776 = vadd.f32 0.0, %v1775
  %v1777 = vpop.f32.mrf.mxu0
  %v1778 = vadd.f32 0.0, %v1777
  %1779 = vmatmul.bf16.gmra.mxu0 %v1663
  %v1780 = vpop.f32.mrf.mxu0
  %v1781 = vadd.f32 0.0, %v1780
  %v1782 = vpop.f32.mrf.mxu0
  %v1783 = vadd.f32 0.0, %v1782
  %1784 = vmatmul.bf16.gmra.mxu0 %v1664
  %v1785 = vpop.f32.mrf.mxu0
  %v1786 = vadd.f32 0.0, %v1785
  %v1787 = vpop.f32.mrf.mxu0
  %v1788 = vadd.f32 0.0, %v1787
  %1789 = vmatmul.bf16.gmra.mxu0 %v1665
  %v1790 = vpop.f32.mrf.mxu0
  %v1791 = vadd.f32 0.0, %v1790
  %v1792 = vpop.f32.mrf.mxu0
  %v1793 = vadd.f32 0.0, %v1792
  %1794 = vmatmul.bf16.gmra.mxu0 %v1666
  %v1795 = vpop.f32.mrf.mxu0
  %v1796 = vadd.f32 0.0, %v1795
  %v1797 = vpop.f32.mrf.mxu0
  %v1798 = vadd.f32 0.0, %v1797
  %1799 = vmatmul.bf16.gmra.mxu0 %v1667
  %v1800 = vpop.f32.mrf.mxu0
  %v1801 = vadd.f32 0.0, %v1800
  %v1802 = vpop.f32.mrf.mxu0
  %v1803 = vadd.f32 0.0, %v1802
  %1804 = vdwg.mxu0
  %1805 = vmatpush.bf16.msra.mxu0 %v1739
  %1806 = vmatpush.bf16.msra.mxu0 %v1737
  %1807 = vmatpush.bf16.msra.mxu0 %v1735
  %1808 = vmatpush.bf16.msra.mxu0 %v1733
  %1809 = vmatpush.bf16.msra.mxu0 %v1731
  %1810 = vmatpush.bf16.msra.mxu0 %v1729
  %1811 = vmatpush.bf16.msra.mxu0 %v1727
  %1812 = vmatpush.bf16.msra.mxu0 %v1725
  %1813 = vmatmul.bf16.gmra.mxu0 %v1660
  %v1814 = vpop.f32.mrf.mxu0
  %v1815 = vadd.f32 0.0, %v1814
  %v1816 = vpop.f32.mrf.mxu0
  %v1817 = vadd.f32 0.0, %v1816
  %1818 = vmatmul.bf16.gmra.mxu0 %v1661
  %v1819 = vpop.f32.mrf.mxu0
  %v1820 = vadd.f32 0.0, %v1819
  %v1821 = vpop.f32.mrf.mxu0
  %v1822 = vadd.f32 0.0, %v1821
  %1823 = vmatmul.bf16.gmra.mxu0 %v1662
  %v1824 = vpop.f32.mrf.mxu0
  %v1825 = vadd.f32 0.0, %v1824
  %v1826 = vpop.f32.mrf.mxu0
  %v1827 = vadd.f32 0.0, %v1826
  %1828 = vmatmul.bf16.gmra.mxu0 %v1663
  %v1829 = vpop.f32.mrf.mxu0
  %v1830 = vadd.f32 0.0, %v1829
  %v1831 = vpop.f32.mrf.mxu0
  %v1832 = vadd.f32 0.0, %v1831
  %1833 = vmatmul.bf16.gmra.mxu0 %v1664
  %v1834 = vpop.f32.mrf.mxu0
  %v1835 = vadd.f32 0.0, %v1834
  %v1836 = vpop.f32.mrf.mxu0
  %v1837 = vadd.f32 0.0, %v1836
  %1838 = vmatmul.bf16.gmra.mxu0 %v1665
  %v1839 = vpop.f32.mrf.mxu0
  %v1840 = vadd.f32 0.0, %v1839
  %v1841 = vpop.f32.mrf.mxu0
  %v1842 = vadd.f32 0.0, %v1841
  %1843 = vmatmul.bf16.gmra.mxu0 %v1666
  %v1844 = vpop.f32.mrf.mxu0
  %v1845 = vadd.f32 0.0, %v1844
  %v1846 = vpop.f32.mrf.mxu0
  %v1847 = vadd.f32 0.0, %v1846
  %1848 = vmatmul.bf16.gmra.mxu0 %v1667
  %v1849 = vpop.f32.mrf.mxu0
  %v1850 = vadd.f32 0.0, %v1849
  %v1851 = vpop.f32.mrf.mxu0
  %v1852 = vadd.f32 0.0, %v1851
  %1853 = vdwg.mxu0
  %v1854 = vadd.f32 %v1416, %v1766
  %v1855 = vadd.f32 %v1514, %v1815
  %v1856 = vadd.f32 %v1418, %v1768
  %v1857 = vadd.f32 %v1516, %v1817
  %v1858 = vadd.f32 %v1421, %v1771
  %v1859 = vadd.f32 %v1519, %v1820
  %v1860 = vadd.f32 %v1423, %v1773
  %v1861 = vadd.f32 %v1521, %v1822
  %v1862 = vadd.f32 %v1426, %v1776
  %v1863 = vadd.f32 %v1524, %v1825
  %v1864 = vadd.f32 %v1428, %v1778
  %v1865 = vadd.f32 %v1526, %v1827
  %v1866 = vadd.f32 %v1431, %v1781
  %v1867 = vadd.f32 %v1529, %v1830
  %v1868 = vadd.f32 %v1433, %v1783
  %v1869 = vadd.f32 %v1531, %v1832
  %v1870 = vadd.f32 %v1436, %v1786
  %v1871 = vadd.f32 %v1534, %v1835
  %v1872 = vadd.f32 %v1438, %v1788
  %v1873 = vadd.f32 %v1536, %v1837
  %v1874 = vadd.f32 %v1441, %v1791
  %v1875 = vadd.f32 %v1539, %v1840
  %v1876 = vadd.f32 %v1443, %v1793
  %v1877 = vadd.f32 %v1541, %v1842
  %v1878 = vadd.f32 %v1446, %v1796
  %v1879 = vadd.f32 %v1544, %v1845
  %v1880 = vadd.f32 %v1448, %v1798
  %v1881 = vadd.f32 %v1546, %v1847
  %v1882 = vadd.f32 %v1451, %v1801
  %v1883 = vadd.f32 %v1549, %v1850
  %v1884 = vadd.f32 %v1453, %v1803
  %v1885 = vadd.f32 %v1551, %v1852
  %v1886 = vld [vmem:[%s4] sm:$0x3]
  %v1888 = vperm.slane %v1886, 0
  %v1889 = vperm.slane %v1886, 1
  %v1892 = vadd.f32 %v1854, %v1888
  %v1893 = vadd.f32 %v1855, %v1889
  %v1894 = vadd.f32 %v1856, %v1888
  %v1895 = vadd.f32 %v1857, %v1889
  %v1896 = vadd.f32 %v1858, %v1888
  %v1897 = vadd.f32 %v1859, %v1889
  %v1898 = vadd.f32 %v1860, %v1888
  %v1899 = vadd.f32 %v1861, %v1889
  %v1900 = vadd.f32 %v1862, %v1888
  %v1901 = vadd.f32 %v1863, %v1889
  %v1902 = vadd.f32 %v1864, %v1888
  %v1903 = vadd.f32 %v1865, %v1889
  %v1904 = vadd.f32 %v1866, %v1888
  %v1905 = vadd.f32 %v1867, %v1889
  %v1906 = vadd.f32 %v1868, %v1888
  %v1907 = vadd.f32 %v1869, %v1889
  %v1908 = vadd.f32 %v1870, %v1888
  %v1909 = vadd.f32 %v1871, %v1889
  %v1910 = vadd.f32 %v1872, %v1888
  %v1911 = vadd.f32 %v1873, %v1889
  %v1912 = vadd.f32 %v1874, %v1888
  %v1913 = vadd.f32 %v1875, %v1889
  %v1914 = vadd.f32 %v1876, %v1888
  %v1915 = vadd.f32 %v1877, %v1889
  %v1916 = vadd.f32 %v1878, %v1888
  %v1917 = vadd.f32 %v1879, %v1889
  %v1918 = vadd.f32 %v1880, %v1888
  %v1919 = vadd.f32 %v1881, %v1889
  %v1920 = vadd.f32 %v1882, %v1888
  %v1921 = vadd.f32 %v1883, %v1889
  %v1922 = vadd.f32 %v1884, %v1888
  %v1923 = vadd.f32 %v1885, %v1889
  %v1924 = vmax.f32 %v1892, 0.0
  %v1925 = vmax.f32 %v1893, 0.0
  %v1926 = vmax.f32 %v1894, 0.0
  %v1927 = vmax.f32 %v1895, 0.0
  %v1928 = vmax.f32 %v1896, 0.0
  %v1929 = vmax.f32 %v1897, 0.0
  %v1930 = vmax.f32 %v1898, 0.0
  %v1931 = vmax.f32 %v1899, 0.0
  %v1932 = vmax.f32 %v1900, 0.0
  %v1933 = vmax.f32 %v1901, 0.0
  %v1934 = vmax.f32 %v1902, 0.0
  %v1935 = vmax.f32 %v1903, 0.0
  %v1936 = vmax.f32 %v1904, 0.0
  %v1937 = vmax.f32 %v1905, 0.0
  %v1938 = vmax.f32 %v1906, 0.0
  %v1939 = vmax.f32 %v1907, 0.0
  %v1940 = vmax.f32 %v1908, 0.0
  %v1941 = vmax.f32 %v1909, 0.0
  %v1942 = vmax.f32 %v1910, 0.0
  %v1943 = vmax.f32 %v1911, 0.0
  %v1944 = vmax.f32 %v1912, 0.0
  %v1945 = vmax.f32 %v1913, 0.0
  %v1946 = vmax.f32 %v1914, 0.0
  %v1947 = vmax.f32 %v1915, 0.0
  %v1948 = vmax.f32 %v1916, 0.0
  %v1949 = vmax.f32 %v1917, 0.0
  %v1950 = vmax.f32 %v1918, 0.0
  %v1951 = vmax.f32 %v1919, 0.0
  %v1952 = vmax.f32 %v1920, 0.0
  %v1953 = vmax.f32 %v1921, 0.0
  %v1954 = vmax.f32 %v1922, 0.0
  %v1955 = vmax.f32 %v1923, 0.0
  %vm1956 = vsmask.f32 256
  %vm1957 = vmand %vm228, %vm1956
  %vm1958 = vsmask.f32 4352
  %vm1959 = vmand %vm229, %vm1958
  %vm1960 = vmor %vm1959, %vm1957
  %v1961 = vld [vmem:[#allocation3] sm:$0x11]
  %v1962 = vsel %vm1960, 0, %v1961
  %1963 = vst [vmem:[#allocation3] sm:$0x11] %v1962
  %v1964 = vld [vmem:[#allocation3 + $0x18] sm:$0x11]
  %v1965 = vsel %vm1960, 0, %v1964
  %1966 = vst [vmem:[#allocation3 + $0x18] sm:$0x11] %v1965
  %v1967 = vld [vmem:[#allocation3 + $0x30] sm:$0x11]
  %v1968 = vsel %vm1960, 0, %v1967
  %1969 = vst [vmem:[#allocation3 + $0x30] sm:$0x11] %v1968
  %v1970 = vld [vmem:[#allocation3 + $0x48] sm:$0x11]
  %v1971 = vsel %vm1960, 0, %v1970
  %1972 = vst [vmem:[#allocation3 + $0x48] sm:$0x11] %v1971
  %v1973 = vld [vmem:[#allocation3 + $0x60] sm:$0x11]
  %v1974 = vsel %vm1960, 0, %v1973
  %1975 = vst [vmem:[#allocation3 + $0x60] sm:$0x11] %v1974
  %v1976 = vld [vmem:[#allocation3 + $0x78] sm:$0x11]
  %v1977 = vsel %vm1960, 0, %v1976
  %1978 = vst [vmem:[#allocation3 + $0x78] sm:$0x11] %v1977
  %v1979 = vld [vmem:[#allocation3 + $0x90] sm:$0x11]
  %v1980 = vsel %vm1960, 0, %v1979
  %1981 = vst [vmem:[#allocation3 + $0x90] sm:$0x11] %v1980
  %v1982 = vld [vmem:[#allocation3 + $0xa8] sm:$0x11]
  %v1983 = vsel %vm1960, 0, %v1982
  %1984 = vst [vmem:[#allocation3 + $0xa8] sm:$0x11] %v1983
  %v1985 = vpack.c.bf16 %v1925, %v1924
  %v1986 = vpack.c.bf16 %v1927, %v1926
  %v1987 = vpack.c.bf16 %v1929, %v1928
  %v1988 = vpack.c.bf16 %v1931, %v1930
  %v1989 = vpack.c.bf16 %v1933, %v1932
  %v1990 = vpack.c.bf16 %v1935, %v1934
  %v1991 = vpack.c.bf16 %v1937, %v1936
  %v1992 = vpack.c.bf16 %v1939, %v1938
  %v1993 = vpack.c.bf16 %v1941, %v1940
  %v1994 = vpack.c.bf16 %v1943, %v1942
  %v1995 = vpack.c.bf16 %v1945, %v1944
  %v1996 = vpack.c.bf16 %v1947, %v1946
  %v1997 = vpack.c.bf16 %v1949, %v1948
  %v1998 = vpack.c.bf16 %v1951, %v1950
  %v1999 = vpack.c.bf16 %v1953, %v1952
  %v2000 = vpack.c.bf16 %v1955, %v1954
  %vm2001 = vsmask.f32 4368
  %vm2002 = vmor %vm1956, %vm2001
  %v2004 = vshrl.u32 %v1985, 16
  %v2006 = vrot.slane %v2004, 7
  %v2007 = vshll.u32 %v1985, 16
  %v2009 = vor.u32 %v2006, %v2007
  %v2010 = vrot.slane %v2006, 4
  %v2012 = vshrl.u32 %v1986, 16
  %v2014 = vrot.slane %v2012, 7
  %v2015 = vshll.u32 %v1986, 16
  %v2017 = vor.u32 %v2014, %v2015
  %v2018 = vsel %vm2002, %v2010, %v2017
  %v2019 = vrot.slane %v2014, 4
  %v2021 = vshrl.u32 %v1987, 16
  %v2023 = vrot.slane %v2021, 7
  %v2024 = vshll.u32 %v1987, 16
  %v2026 = vor.u32 %v2023, %v2024
  %v2027 = vrot.slane %v2023, 4
  %v2029 = vshrl.u32 %v1988, 16
  %v2031 = vrot.slane %v2029, 7
  %v2032 = vshll.u32 %v1988, 16
  %v2034 = vor.u32 %v2031, %v2032
  %v2035 = vsel %vm2002, %v2027, %v2034
  %v2036 = vrot.slane %v2031, 4
  %v2038 = vshrl.u32 %v1989, 16
  %v2040 = vrot.slane %v2038, 7
  %v2041 = vshll.u32 %v1989, 16
  %v2043 = vor.u32 %v2040, %v2041
  %v2044 = vrot.slane %v2040, 4
  %v2046 = vshrl.u32 %v1990, 16
  %v2048 = vrot.slane %v2046, 7
  %v2049 = vshll.u32 %v1990, 16
  %v2051 = vor.u32 %v2048, %v2049
  %v2052 = vsel %vm2002, %v2044, %v2051
  %v2053 = vrot.slane %v2048, 4
  %v2055 = vshrl.u32 %v1991, 16
  %v2057 = vrot.slane %v2055, 7
  %v2058 = vshll.u32 %v1991, 16
  %v2060 = vor.u32 %v2057, %v2058
  %v2061 = vrot.slane %v2057, 4
  %v2063 = vshrl.u32 %v1992, 16
  %v2065 = vrot.slane %v2063, 7
  %v2066 = vshll.u32 %v1992, 16
  %v2068 = vor.u32 %v2065, %v2066
  %v2069 = vsel %vm2002, %v2061, %v2068
  %v2070 = vrot.slane %v2065, 4
  %v2072 = vshrl.u32 %v1993, 16
  %v2074 = vrot.slane %v2072, 7
  %v2075 = vshll.u32 %v1993, 16
  %v2077 = vor.u32 %v2074, %v2075
  %v2078 = vrot.slane %v2074, 4
  %v2080 = vshrl.u32 %v1994, 16
  %v2082 = vrot.slane %v2080, 7
  %v2083 = vshll.u32 %v1994, 16
  %v2085 = vor.u32 %v2082, %v2083
  %v2086 = vsel %vm2002, %v2078, %v2085
  %v2087 = vrot.slane %v2082, 4
  %v2089 = vshrl.u32 %v1995, 16
  %v2091 = vrot.slane %v2089, 7
  %v2092 = vshll.u32 %v1995, 16
  %v2094 = vor.u32 %v2091, %v2092
  %v2095 = vrot.slane %v2091, 4
  %v2097 = vshrl.u32 %v1996, 16
  %v2099 = vrot.slane %v2097, 7
  %v2100 = vshll.u32 %v1996, 16
  %v2102 = vor.u32 %v2099, %v2100
  %v2103 = vsel %vm2002, %v2095, %v2102
  %v2104 = vrot.slane %v2099, 4
  %v2106 = vshrl.u32 %v1997, 16
  %v2108 = vrot.slane %v2106, 7
  %v2109 = vshll.u32 %v1997, 16
  %v2111 = vor.u32 %v2108, %v2109
  %v2112 = vrot.slane %v2108, 4
  %v2114 = vshrl.u32 %v1998, 16
  %v2116 = vrot.slane %v2114, 7
  %v2117 = vshll.u32 %v1998, 16
  %v2119 = vor.u32 %v2116, %v2117
  %v2120 = vsel %vm2002, %v2112, %v2119
  %v2121 = vrot.slane %v2116, 4
  %v2123 = vshrl.u32 %v1999, 16
  %v2125 = vrot.slane %v2123, 7
  %v2126 = vshll.u32 %v1999, 16
  %v2128 = vor.u32 %v2125, %v2126
  %v2129 = vrot.slane %v2125, 4
  %v2131 = vshrl.u32 %v2000, 16
  %v2133 = vrot.slane %v2131, 7
  %v2134 = vshll.u32 %v2000, 16
  %v2136 = vor.u32 %v2133, %v2134
  %v2137 = vsel %vm2002, %v2129, %v2136
  %v2138 = vrot.slane %v2133, 4
  %vm2163 = vcmask 1043456
  %vm2164 = vsmask.f32 7938
  %vm2165 = vmand %vm2163, %vm2164
  %vm2166 = vcmask 1047556
  %vm2167 = vsmask.f32 7954
  %vm2168 = vmand %vm2166, %vm2167
  %vm2169 = vmor %vm2168, %vm2165
  %v2170 = vld [vmem:[#allocation3] sm:$0xff]
  %v2171 = vsel %vm2169, %v2009, %v2170
  %2172 = vst [vmem:[#allocation3] sm:$0xff] %v2171
  %2173 = vst [vmem:[#allocation3 + $0x8] sm:$0xff] %v2018
  %v2174 = vld [vmem:[#allocation3 + $0x10] sm:$0x11]
  %v2175 = vsel %vm1960, %v2019, %v2174
  %2176 = vst [vmem:[#allocation3 + $0x10] sm:$0x11] %v2175
  %v2177 = vld [vmem:[#allocation3 + $0x18] sm:$0xff]
  %v2178 = vsel %vm2169, %v2026, %v2177
  %2179 = vst [vmem:[#allocation3 + $0x18] sm:$0xff] %v2178
  %2180 = vst [vmem:[#allocation3 + $0x20] sm:$0xff] %v2035
  %v2181 = vld [vmem:[#allocation3 + $0x28] sm:$0x11]
  %v2182 = vsel %vm1960, %v2036, %v2181
  %2183 = vst [vmem:[#allocation3 + $0x28] sm:$0x11] %v2182
  %v2184 = vld [vmem:[#allocation3 + $0x30] sm:$0xff]
  %v2185 = vsel %vm2169, %v2043, %v2184
  %2186 = vst [vmem:[#allocation3 + $0x30] sm:$0xff] %v2185
  %2187 = vst [vmem:[#allocation3 + $0x38] sm:$0xff] %v2052
  %v2188 = vld [vmem:[#allocation3 + $0x40] sm:$0x11]
  %v2189 = vsel %vm1960, %v2053, %v2188
  %2190 = vst [vmem:[#allocation3 + $0x40] sm:$0x11] %v2189
  %v2191 = vld [vmem:[#allocation3 + $0x48] sm:$0xff]
  %v2192 = vsel %vm2169, %v2060, %v2191
  %2193 = vst [vmem:[#allocation3 + $0x48] sm:$0xff] %v2192
  %2194 = vst [vmem:[#allocation3 + $0x50] sm:$0xff] %v2069
  %v2195 = vld [vmem:[#allocation3 + $0x58] sm:$0x11]
  %v2196 = vsel %vm1960, %v2070, %v2195
  %2197 = vst [vmem:[#allocation3 + $0x58] sm:$0x11] %v2196
  %v2198 = vld [vmem:[#allocation3 + $0x60] sm:$0xff]
  %v2199 = vsel %vm2169, %v2077, %v2198
  %2200 = vst [vmem:[#allocation3 + $0x60] sm:$0xff] %v2199
  %2201 = vst [vmem:[#allocation3 + $0x68] sm:$0xff] %v2086
  %v2202 = vld [vmem:[#allocation3 + $0x70] sm:$0x11]
  %v2203 = vsel %vm1960, %v2087, %v2202
  %2204 = vst [vmem:[#allocation3 + $0x70] sm:$0x11] %v2203
  %v2205 = vld [vmem:[#allocation3 + $0x78] sm:$0xff]
  %v2206 = vsel %vm2169, %v2094, %v2205
  %2207 = vst [vmem:[#allocation3 + $0x78] sm:$0xff] %v2206
  %2208 = vst [vmem:[#allocation3 + $0x80] sm:$0xff] %v2103
  %v2209 = vld [vmem:[#allocation3 + $0x88] sm:$0x11]
  %v2210 = vsel %vm1960, %v2104, %v2209
  %2211 = vst [vmem:[#allocation3 + $0x88] sm:$0x11] %v2210
  %v2212 = vld [vmem:[#allocation3 + $0x90] sm:$0xff]
  %v2213 = vsel %vm2169, %v2111, %v2212
  %2214 = vst [vmem:[#allocation3 + $0x90] sm:$0xff] %v2213
  %2215 = vst [vmem:[#allocation3 + $0x98] sm:$0xff] %v2120
  %v2216 = vld [vmem:[#allocation3 + $0xa0] sm:$0x11]
  %v2217 = vsel %vm1960, %v2121, %v2216
  %2218 = vst [vmem:[#allocation3 + $0xa0] sm:$0x11] %v2217
  %v2219 = vld [vmem:[#allocation3 + $0xa8] sm:$0xff]
  %v2220 = vsel %vm2169, %v2128, %v2219
  %2221 = vst [vmem:[#allocation3 + $0xa8] sm:$0xff] %v2220
  %2222 = vst [vmem:[#allocation3 + $0xb0] sm:$0xff] %v2137
  %v2223 = vld [vmem:[#allocation3 + $0xb8] sm:$0x11]
  %v2224 = vsel %vm1960, %v2138, %v2223
  %2225 = vst [vmem:[#allocation3 + $0xb8] sm:$0x11] %v2224
  %vm2226 = vmand %vm228, %vm2164
  %vm2227 = vmand %vm229, %vm2167
  %vm2228 = vmor %vm2227, %vm2226
  %v2229 = vld [vmem:[#allocation3 + $0x10] sm:$0x11]
  %v2230 = vsel %vm2228, 0, %v2229
  %2231 = vst [vmem:[#allocation3 + $0x10] sm:$0x11] %v2230
  %v2232 = vld [vmem:[#allocation3 + $0x28] sm:$0x11]
  %v2233 = vsel %vm2228, 0, %v2232
  %2234 = vst [vmem:[#allocation3 + $0x28] sm:$0x11] %v2233
  %v2235 = vld [vmem:[#allocation3 + $0x40] sm:$0x11]
  %v2236 = vsel %vm2228, 0, %v2235
  %2237 = vst [vmem:[#allocation3 + $0x40] sm:$0x11] %v2236
  %v2238 = vld [vmem:[#allocation3 + $0x58] sm:$0x11]
  %v2239 = vsel %vm2228, 0, %v2238
  %2240 = vst [vmem:[#allocation3 + $0x58] sm:$0x11] %v2239
  %v2241 = vld [vmem:[#allocation3 + $0x70] sm:$0x11]
  %v2242 = vsel %vm2228, 0, %v2241
  %2243 = vst [vmem:[#allocation3 + $0x70] sm:$0x11] %v2242
  %v2244 = vld [vmem:[#allocation3 + $0x88] sm:$0x11]
  %v2245 = vsel %vm2228, 0, %v2244
  %2246 = vst [vmem:[#allocation3 + $0x88] sm:$0x11] %v2245
  %v2247 = vld [vmem:[#allocation3 + $0xa0] sm:$0x11]
  %v2248 = vsel %vm2228, 0, %v2247
  %2249 = vst [vmem:[#allocation3 + $0xa0] sm:$0x11] %v2248
  %v2250 = vld [vmem:[#allocation3 + $0xb8] sm:$0x11]
  %v2251 = vsel %vm2228, 0, %v2250
  %2252 = vst [vmem:[#allocation3 + $0xb8] sm:$0x11] %v2251
  %v2253 = vld [vmem:[#allocation3] sm:$0xff]
  %v2254 = vld [vmem:[#allocation3 + $0x8] sm:$0xff]
  %v2255 = vld [vmem:[#allocation3 + $0x18] sm:$0xff]
  %v2256 = vld [vmem:[#allocation3 + $0x20] sm:$0xff]
  %v2257 = vld [vmem:[#allocation3 + $0x30] sm:$0xff]
  %v2258 = vld [vmem:[#allocation3 + $0x38] sm:$0xff]
  %v2259 = vld [vmem:[#allocation3 + $0x48] sm:$0xff]
  %v2260 = vld [vmem:[#allocation3 + $0x50] sm:$0xff]
  %v2261 = vld [vmem:[#allocation3 + $0x60] sm:$0xff]
  %v2262 = vld [vmem:[#allocation3 + $0x68] sm:$0xff]
  %v2263 = vld [vmem:[#allocation3 + $0x78] sm:$0xff]
  %v2264 = vld [vmem:[#allocation3 + $0x80] sm:$0xff]
  %v2265 = vld [vmem:[#allocation3 + $0x90] sm:$0xff]
  %v2266 = vld [vmem:[#allocation3 + $0x98] sm:$0xff]
  %v2267 = vld [vmem:[#allocation3 + $0xa8] sm:$0xff]
  %v2268 = vld [vmem:[#allocation3 + $0xb0] sm:$0xff]
  %v2269 = vld [vmem:[%s5] sm:$0xf]
  %v2270 = vld [vmem:[%s5 + $0x4] sm:$0xf]
  %v2271 = vld [vmem:[%s5 + $0x8] sm:$0xf]
  %v2272 = vld [vmem:[%s5 + $0xc] sm:$0xf]
  %v2273 = vld [vmem:[%s5 + $0x10] sm:$0xf]
  %v2274 = vld [vmem:[%s5 + $0x14] sm:$0xf]
  %v2275 = vld [vmem:[%s5 + $0x18] sm:$0xf]
  %v2276 = vld [vmem:[%s5 + $0x1c] sm:$0xf]
  %v2277 = vld [vmem:[%s5 + $0x20] sm:$0xf]
  %v2278 = vld [vmem:[%s5 + $0x24] sm:$0xf]
  %v2279 = vld [vmem:[%s5 + $0x28] sm:$0xf]
  %v2280 = vld [vmem:[%s5 + $0x2c] sm:$0xf]
  %v2281 = vld [vmem:[%s5 + $0x30] sm:$0xf]
  %v2282 = vld [vmem:[%s5 + $0x34] sm:$0xf]
  %v2283 = vld [vmem:[%s5 + $0x38] sm:$0xf]
  %v2284 = vld [vmem:[%s5 + $0x3c] sm:$0xf]
  %v2285 = vld [vmem:[%s5 + $0x40] sm:$0xf]
  %v2286 = vld [vmem:[%s5 + $0x44] sm:$0xf]
  %v2287 = vld [vmem:[%s5 + $0x48] sm:$0xf]
  %v2288 = vld [vmem:[%s5 + $0x4c] sm:$0xf]
  %v2289 = vld [vmem:[%s5 + $0x50] sm:$0xf]
  %v2290 = vld [vmem:[%s5 + $0x54] sm:$0xf]
  %v2291 = vld [vmem:[%s5 + $0x58] sm:$0xf]
  %v2292 = vld [vmem:[%s5 + $0x5c] sm:$0xf]
  %v2293 = vld [vmem:[%s5 + $0x60] sm:$0xf]
  %v2294 = vld [vmem:[%s5 + $0x64] sm:$0xf]
  %v2295 = vld [vmem:[%s5 + $0x68] sm:$0xf]
  %v2296 = vld [vmem:[%s5 + $0x6c] sm:$0xf]
  %v2297 = vld [vmem:[%s5 + $0x70] sm:$0xf]
  %v2298 = vld [vmem:[%s5 + $0x74] sm:$0xf]
  %v2299 = vld [vmem:[%s5 + $0x78] sm:$0xf]
  %v2300 = vld [vmem:[%s5 + $0x7c] sm:$0xf]
  %v2301 = vld [vmem:[#allocation3 + $0x10] sm:$0x11]
  %v2302 = vld [vmem:[#allocation3 + $0x28] sm:$0x11]
  %v2303 = vld [vmem:[#allocation3 + $0x40] sm:$0x11]
  %v2304 = vld [vmem:[#allocation3 + $0x58] sm:$0x11]
  %v2305 = vld [vmem:[#allocation3 + $0x70] sm:$0x11]
  %v2306 = vld [vmem:[#allocation3 + $0x88] sm:$0x11]
  %v2307 = vld [vmem:[#allocation3 + $0xa0] sm:$0x11]
  %v2308 = vld [vmem:[#allocation3 + $0xb8] sm:$0x11]
  %vm2309 = vsmask.f32 3328
  %vm2310 = vsmask.f32 7440
  %vm2311 = vmor %vm2309, %vm2310
  %v2313 = vshrl.u32 %v2253, 16
  %v2315 = vrot.slane %v2313, 4
  %v2316 = vshll.u32 %v2253, 16
  %v2318 = vrot.slane %v2316, 5
  %v2319 = vor.u32 %v2315, %v2318
  %v2320 = vrot.slane %v2319, 4
  %v2322 = vshll.u32 %v2254, 16
  %v2324 = vrot.slane %v2322, 5
  %v2325 = vsel %vm2311, %v2320, %v2324
  %v2326 = vshrl.u32 %v2254, 16
  %v2328 = vrot.slane %v2326, 4
  %v2329 = vor.u32 %v2328, %v2324
  %v2330 = vrot.slane %v2329, 4
  %v2332 = vshll.u32 %v2301, 16
  %v2334 = vrot.slane %v2332, 5
  %v2335 = vsel %vm2311, %v2330, %v2334
  %v2337 = vshrl.u32 %v2255, 16
  %v2339 = vrot.slane %v2337, 4
  %v2340 = vshll.u32 %v2255, 16
  %v2342 = vrot.slane %v2340, 5
  %v2343 = vor.u32 %v2339, %v2342
  %v2344 = vrot.slane %v2343, 4
  %v2346 = vshll.u32 %v2256, 16
  %v2348 = vrot.slane %v2346, 5
  %v2349 = vsel %vm2311, %v2344, %v2348
  %v2350 = vshrl.u32 %v2256, 16
  %v2352 = vrot.slane %v2350, 4
  %v2353 = vor.u32 %v2352, %v2348
  %v2354 = vrot.slane %v2353, 4
  %v2356 = vshll.u32 %v2302, 16
  %v2358 = vrot.slane %v2356, 5
  %v2359 = vsel %vm2311, %v2354, %v2358
  %v2361 = vshrl.u32 %v2257, 16
  %v2363 = vrot.slane %v2361, 4
  %v2364 = vshll.u32 %v2257, 16
  %v2366 = vrot.slane %v2364, 5
  %v2367 = vor.u32 %v2363, %v2366
  %v2368 = vrot.slane %v2367, 4
  %v2370 = vshll.u32 %v2258, 16
  %v2372 = vrot.slane %v2370, 5
  %v2373 = vsel %vm2311, %v2368, %v2372
  %v2374 = vshrl.u32 %v2258, 16
  %v2376 = vrot.slane %v2374, 4
  %v2377 = vor.u32 %v2376, %v2372
  %v2378 = vrot.slane %v2377, 4
  %v2380 = vshll.u32 %v2303, 16
  %v2382 = vrot.slane %v2380, 5
  %v2383 = vsel %vm2311, %v2378, %v2382
  %v2385 = vshrl.u32 %v2259, 16
  %v2387 = vrot.slane %v2385, 4
  %v2388 = vshll.u32 %v2259, 16
  %v2390 = vrot.slane %v2388, 5
  %v2391 = vor.u32 %v2387, %v2390
  %v2392 = vrot.slane %v2391, 4
  %v2394 = vshll.u32 %v2260, 16
  %v2396 = vrot.slane %v2394, 5
  %v2397 = vsel %vm2311, %v2392, %v2396
  %v2398 = vshrl.u32 %v2260, 16
  %v2400 = vrot.slane %v2398, 4
  %v2401 = vor.u32 %v2400, %v2396
  %v2402 = vrot.slane %v2401, 4
  %v2404 = vshll.u32 %v2304, 16
  %v2406 = vrot.slane %v2404, 5
  %v2407 = vsel %vm2311, %v2402, %v2406
  %v2409 = vshrl.u32 %v2261, 16
  %v2411 = vrot.slane %v2409, 4
  %v2412 = vshll.u32 %v2261, 16
  %v2414 = vrot.slane %v2412, 5
  %v2415 = vor.u32 %v2411, %v2414
  %v2416 = vrot.slane %v2415, 4
  %v2418 = vshll.u32 %v2262, 16
  %v2420 = vrot.slane %v2418, 5
  %v2421 = vsel %vm2311, %v2416, %v2420
  %v2422 = vshrl.u32 %v2262, 16
  %v2424 = vrot.slane %v2422, 4
  %v2425 = vor.u32 %v2424, %v2420
  %v2426 = vrot.slane %v2425, 4
  %v2428 = vshll.u32 %v2305, 16
  %v2430 = vrot.slane %v2428, 5
  %v2431 = vsel %vm2311, %v2426, %v2430
  %v2433 = vshrl.u32 %v2263, 16
  %v2435 = vrot.slane %v2433, 4
  %v2436 = vshll.u32 %v2263, 16
  %v2438 = vrot.slane %v2436, 5
  %v2439 = vor.u32 %v2435, %v2438
  %v2440 = vrot.slane %v2439, 4
  %v2442 = vshll.u32 %v2264, 16
  %v2444 = vrot.slane %v2442, 5
  %v2445 = vsel %vm2311, %v2440, %v2444
  %v2446 = vshrl.u32 %v2264, 16
  %v2448 = vrot.slane %v2446, 4
  %v2449 = vor.u32 %v2448, %v2444
  %v2450 = vrot.slane %v2449, 4
  %v2452 = vshll.u32 %v2306, 16
  %v2454 = vrot.slane %v2452, 5
  %v2455 = vsel %vm2311, %v2450, %v2454
  %v2457 = vshrl.u32 %v2265, 16
  %v2459 = vrot.slane %v2457, 4
  %v2460 = vshll.u32 %v2265, 16
  %v2462 = vrot.slane %v2460, 5
  %v2463 = vor.u32 %v2459, %v2462
  %v2464 = vrot.slane %v2463, 4
  %v2466 = vshll.u32 %v2266, 16
  %v2468 = vrot.slane %v2466, 5
  %v2469 = vsel %vm2311, %v2464, %v2468
  %v2470 = vshrl.u32 %v2266, 16
  %v2472 = vrot.slane %v2470, 4
  %v2473 = vor.u32 %v2472, %v2468
  %v2474 = vrot.slane %v2473, 4
  %v2476 = vshll.u32 %v2307, 16
  %v2478 = vrot.slane %v2476, 5
  %v2479 = vsel %vm2311, %v2474, %v2478
  %v2481 = vshrl.u32 %v2267, 16
  %v2483 = vrot.slane %v2481, 4
  %v2484 = vshll.u32 %v2267, 16
  %v2486 = vrot.slane %v2484, 5
  %v2487 = vor.u32 %v2483, %v2486
  %v2488 = vrot.slane %v2487, 4
  %v2490 = vshll.u32 %v2268, 16
  %v2492 = vrot.slane %v2490, 5
  %v2493 = vsel %vm2311, %v2488, %v2492
  %v2494 = vshrl.u32 %v2268, 16
  %v2496 = vrot.slane %v2494, 4
  %v2497 = vor.u32 %v2496, %v2492
  %v2498 = vrot.slane %v2497, 4
  %v2500 = vshll.u32 %v2308, 16
  %v2502 = vrot.slane %v2500, 5
  %v2503 = vsel %vm2311, %v2498, %v2502
  %v2504 = vld [vmem:[%s5 + $0x80] sm:$0xf]
  %v2505 = vld [vmem:[%s5 + $0x84] sm:$0xf]
  %v2506 = vld [vmem:[%s5 + $0x88] sm:$0xf]
  %v2507 = vld [vmem:[%s5 + $0x8c] sm:$0xf]
  %v2508 = vld [vmem:[%s5 + $0x90] sm:$0xf]
  %v2509 = vld [vmem:[%s5 + $0x94] sm:$0xf]
  %v2510 = vld [vmem:[%s5 + $0x98] sm:$0xf]
  %v2511 = vld [vmem:[%s5 + $0x9c] sm:$0xf]
  %v2512 = vld [vmem:[%s5 + $0xa0] sm:$0xf]
  %v2513 = vld [vmem:[%s5 + $0xa4] sm:$0xf]
  %v2514 = vld [vmem:[%s5 + $0xa8] sm:$0xf]
  %v2515 = vld [vmem:[%s5 + $0xac] sm:$0xf]
  %v2516 = vld [vmem:[%s5 + $0xb0] sm:$0xf]
  %v2517 = vld [vmem:[%s5 + $0xb4] sm:$0xf]
  %v2518 = vld [vmem:[%s5 + $0xb8] sm:$0xf]
  %v2519 = vld [vmem:[%s5 + $0xbc] sm:$0xf]
  %v2520 = vld [vmem:[%s5 + $0xc0] sm:$0xf]
  %v2521 = vld [vmem:[%s5 + $0xc4] sm:$0xf]
  %v2522 = vld [vmem:[%s5 + $0xc8] sm:$0xf]
  %v2523 = vld [vmem:[%s5 + $0xcc] sm:$0xf]
  %v2524 = vld [vmem:[%s5 + $0xd0] sm:$0xf]
  %v2525 = vld [vmem:[%s5 + $0xd4] sm:$0xf]
  %v2526 = vld [vmem:[%s5 + $0xd8] sm:$0xf]
  %v2527 = vld [vmem:[%s5 + $0xdc] sm:$0xf]
  %v2528 = vld [vmem:[%s5 + $0xe0] sm:$0xf]
  %v2529 = vld [vmem:[%s5 + $0xe4] sm:$0xf]
  %v2530 = vld [vmem:[%s5 + $0xe8] sm:$0xf]
  %v2531 = vld [vmem:[%s5 + $0xec] sm:$0xf]
  %v2532 = vld [vmem:[%s5 + $0xf0] sm:$0xf]
  %v2533 = vld [vmem:[%s5 + $0xf4] sm:$0xf]
  %v2534 = vld [vmem:[%s5 + $0xf8] sm:$0xf]
  %v2535 = vld [vmem:[%s5 + $0xfc] sm:$0xf]
  %v2536 = vunpack.c.l.b16 %v2325
  %v2537 = vunpack.c.h.b16 %v2325
  %v2538 = vunpack.c.l.b16 %v2335
  %v2539 = vunpack.c.h.b16 %v2335
  %v2540 = vunpack.c.l.b16 %v2349
  %v2541 = vunpack.c.h.b16 %v2349
  %v2542 = vunpack.c.l.b16 %v2359
  %v2543 = vunpack.c.h.b16 %v2359
  %v2544 = vunpack.c.l.b16 %v2373
  %v2545 = vunpack.c.h.b16 %v2373
  %v2546 = vunpack.c.l.b16 %v2383
  %v2547 = vunpack.c.h.b16 %v2383
  %v2548 = vunpack.c.l.b16 %v2397
  %v2549 = vunpack.c.h.b16 %v2397
  %v2550 = vunpack.c.l.b16 %v2407
  %v2551 = vunpack.c.h.b16 %v2407
  %v2552 = vunpack.c.l.b16 %v2421
  %v2553 = vunpack.c.h.b16 %v2421
  %v2554 = vunpack.c.l.b16 %v2431
  %v2555 = vunpack.c.h.b16 %v2431
  %v2556 = vunpack.c.l.b16 %v2445
  %v2557 = vunpack.c.h.b16 %v2445
  %v2558 = vunpack.c.l.b16 %v2455
  %v2559 = vunpack.c.h.b16 %v2455
  %v2560 = vunpack.c.l.b16 %v2469
  %v2561 = vunpack.c.h.b16 %v2469
  %v2562 = vunpack.c.l.b16 %v2479
  %v2563 = vunpack.c.h.b16 %v2479
  %v2564 = vunpack.c.l.b16 %v2493
  %v2565 = vunpack.c.h.b16 %v2493
  %v2566 = vunpack.c.l.b16 %v2503
  %v2567 = vunpack.c.h.b16 %v2503
  %v2568 = vpack.c.b16 %v2538, %v2536
  %v2569 = vpack.c.b16 %v2539, %v2537
  %v2570 = vpack.c.b16 %v2542, %v2540
  %v2571 = vpack.c.b16 %v2543, %v2541
  %v2572 = vpack.c.b16 %v2546, %v2544
  %v2573 = vpack.c.b16 %v2547, %v2545
  %v2574 = vpack.c.b16 %v2550, %v2548
  %v2575 = vpack.c.b16 %v2551, %v2549
  %v2576 = vpack.c.b16 %v2554, %v2552
  %v2577 = vpack.c.b16 %v2555, %v2553
  %v2578 = vpack.c.b16 %v2558, %v2556
  %v2579 = vpack.c.b16 %v2559, %v2557
  %v2580 = vpack.c.b16 %v2562, %v2560
  %v2581 = vpack.c.b16 %v2563, %v2561
  %v2582 = vpack.c.b16 %v2566, %v2564
  %v2583 = vpack.c.b16 %v2567, %v2565
  %v2632 = vunpack.c.l.b16 %v2504
  %v2633 = vunpack.c.l.b16 %v2505
  %v2634 = vunpack.c.l.b16 %v2506
  %v2635 = vunpack.c.l.b16 %v2507
  %v2636 = vunpack.c.l.b16 %v2508
  %v2637 = vunpack.c.l.b16 %v2509
  %v2638 = vunpack.c.l.b16 %v2510
  %v2639 = vunpack.c.l.b16 %v2511
  %v2640 = vunpack.c.l.b16 %v2512
  %v2641 = vunpack.c.l.b16 %v2513
  %v2642 = vunpack.c.l.b16 %v2514
  %v2643 = vunpack.c.l.b16 %v2515
  %v2644 = vunpack.c.l.b16 %v2516
  %v2645 = vunpack.c.l.b16 %v2517
  %v2646 = vunpack.c.l.b16 %v2518
  %v2647 = vunpack.c.l.b16 %v2519
  %v2648 = vunpack.c.l.b16 %v2520
  %v2649 = vunpack.c.l.b16 %v2521
  %v2650 = vunpack.c.l.b16 %v2522
  %v2651 = vunpack.c.l.b16 %v2523
  %v2652 = vunpack.c.l.b16 %v2524
  %v2653 = vunpack.c.l.b16 %v2525
  %v2654 = vunpack.c.l.b16 %v2526
  %v2655 = vunpack.c.l.b16 %v2527
  %v2656 = vunpack.c.l.b16 %v2528
  %v2657 = vunpack.c.l.b16 %v2529
  %v2658 = vunpack.c.l.b16 %v2530
  %v2659 = vunpack.c.l.b16 %v2531
  %v2660 = vunpack.c.l.b16 %v2532
  %v2661 = vunpack.c.l.b16 %v2533
  %v2662 = vunpack.c.l.b16 %v2534
  %v2663 = vunpack.c.l.b16 %v2535
  %v2664 = vpack.c.b16 %v2633, %v2632
  %v2665 = vpack.c.b16 %v2635, %v2634
  %v2666 = vpack.c.b16 %v2637, %v2636
  %v2667 = vpack.c.b16 %v2639, %v2638
  %v2668 = vpack.c.b16 %v2641, %v2640
  %v2669 = vpack.c.b16 %v2643, %v2642
  %v2670 = vpack.c.b16 %v2645, %v2644
  %v2671 = vpack.c.b16 %v2647, %v2646
  %v2672 = vpack.c.b16 %v2649, %v2648
  %v2673 = vpack.c.b16 %v2651, %v2650
  %v2674 = vpack.c.b16 %v2653, %v2652
  %v2675 = vpack.c.b16 %v2655, %v2654
  %v2676 = vpack.c.b16 %v2657, %v2656
  %v2677 = vpack.c.b16 %v2659, %v2658
  %v2678 = vpack.c.b16 %v2661, %v2660
  %v2679 = vpack.c.b16 %v2663, %v2662
  %2696 = vmatpush.bf16.msra.mxu0 %v2671
  %2697 = vmatpush.bf16.msra.mxu0 %v2670
  %2698 = vmatpush.bf16.msra.mxu0 %v2669
  %2699 = vmatpush.bf16.msra.mxu0 %v2668
  %2700 = vmatpush.bf16.msra.mxu0 %v2667
  %2701 = vmatpush.bf16.msra.mxu0 %v2666
  %2702 = vmatpush.bf16.msra.mxu0 %v2665
  %2703 = vmatpush.bf16.msra.mxu0 %v2664
  %2704 = vmatmul.bf16.gmra.mxu0 %v2568
  %v2705 = vpop.f32.mrf.mxu0
  %v2706 = vadd.f32 0.0, %v2705
  %v2707 = vpop.f32.mrf.mxu0
  %v2708 = vadd.f32 0.0, %v2707
  %2709 = vmatmul.bf16.gmra.mxu0 %v2570
  %v2710 = vpop.f32.mrf.mxu0
  %v2711 = vadd.f32 0.0, %v2710
  %v2712 = vpop.f32.mrf.mxu0
  %v2713 = vadd.f32 0.0, %v2712
  %2714 = vmatmul.bf16.gmra.mxu0 %v2572
  %v2715 = vpop.f32.mrf.mxu0
  %v2716 = vadd.f32 0.0, %v2715
  %v2717 = vpop.f32.mrf.mxu0
  %v2718 = vadd.f32 0.0, %v2717
  %2719 = vmatmul.bf16.gmra.mxu0 %v2574
  %v2720 = vpop.f32.mrf.mxu0
  %v2721 = vadd.f32 0.0, %v2720
  %v2722 = vpop.f32.mrf.mxu0
  %v2723 = vadd.f32 0.0, %v2722
  %2724 = vmatmul.bf16.gmra.mxu0 %v2576
  %v2725 = vpop.f32.mrf.mxu0
  %v2726 = vadd.f32 0.0, %v2725
  %v2727 = vpop.f32.mrf.mxu0
  %v2728 = vadd.f32 0.0, %v2727
  %2729 = vmatmul.bf16.gmra.mxu0 %v2578
  %v2730 = vpop.f32.mrf.mxu0
  %v2731 = vadd.f32 0.0, %v2730
  %v2732 = vpop.f32.mrf.mxu0
  %v2733 = vadd.f32 0.0, %v2732
  %2734 = vmatmul.bf16.gmra.mxu0 %v2580
  %v2735 = vpop.f32.mrf.mxu0
  %v2736 = vadd.f32 0.0, %v2735
  %v2737 = vpop.f32.mrf.mxu0
  %v2738 = vadd.f32 0.0, %v2737
  %2739 = vmatmul.bf16.gmra.mxu0 %v2582
  %v2740 = vpop.f32.mrf.mxu0
  %v2741 = vadd.f32 0.0, %v2740
  %v2742 = vpop.f32.mrf.mxu0
  %v2743 = vadd.f32 0.0, %v2742
  %2744 = vdwg.mxu0
  %2745 = vmatpush.bf16.msra.mxu0 %v2679
  %2746 = vmatpush.bf16.msra.mxu0 %v2678
  %2747 = vmatpush.bf16.msra.mxu0 %v2677
  %2748 = vmatpush.bf16.msra.mxu0 %v2676
  %2749 = vmatpush.bf16.msra.mxu0 %v2675
  %2750 = vmatpush.bf16.msra.mxu0 %v2674
  %2751 = vmatpush.bf16.msra.mxu0 %v2673
  %2752 = vmatpush.bf16.msra.mxu0 %v2672
  %2753 = vmatmul.bf16.gmra.mxu0 %v2569
  %v2754 = vpop.f32.mrf.mxu0
  %v2755 = vadd.f32 %v2706, %v2754
  %v2756 = vpop.f32.mrf.mxu0
  %v2757 = vadd.f32 %v2708, %v2756
  %2758 = vmatmul.bf16.gmra.mxu0 %v2571
  %v2759 = vpop.f32.mrf.mxu0
  %v2760 = vadd.f32 %v2711, %v2759
  %v2761 = vpop.f32.mrf.mxu0
  %v2762 = vadd.f32 %v2713, %v2761
  %2763 = vmatmul.bf16.gmra.mxu0 %v2573
  %v2764 = vpop.f32.mrf.mxu0
  %v2765 = vadd.f32 %v2716, %v2764
  %v2766 = vpop.f32.mrf.mxu0
  %v2767 = vadd.f32 %v2718, %v2766
  %2768 = vmatmul.bf16.gmra.mxu0 %v2575
  %v2769 = vpop.f32.mrf.mxu0
  %v2770 = vadd.f32 %v2721, %v2769
  %v2771 = vpop.f32.mrf.mxu0
  %v2772 = vadd.f32 %v2723, %v2771
  %2773 = vmatmul.bf16.gmra.mxu0 %v2577
  %v2774 = vpop.f32.mrf.mxu0
  %v2775 = vadd.f32 %v2726, %v2774
  %v2776 = vpop.f32.mrf.mxu0
  %v2777 = vadd.f32 %v2728, %v2776
  %2778 = vmatmul.bf16.gmra.mxu0 %v2579
  %v2779 = vpop.f32.mrf.mxu0
  %v2780 = vadd.f32 %v2731, %v2779
  %v2781 = vpop.f32.mrf.mxu0
  %v2782 = vadd.f32 %v2733, %v2781
  %2783 = vmatmul.bf16.gmra.mxu0 %v2581
  %v2784 = vpop.f32.mrf.mxu0
  %v2785 = vadd.f32 %v2736, %v2784
  %v2786 = vpop.f32.mrf.mxu0
  %v2787 = vadd.f32 %v2738, %v2786
  %2788 = vmatmul.bf16.gmra.mxu0 %v2583
  %v2789 = vpop.f32.mrf.mxu0
  %v2790 = vadd.f32 %v2741, %v2789
  %v2791 = vpop.f32.mrf.mxu0
  %v2792 = vadd.f32 %v2743, %v2791
  %2793 = vdwg.mxu0
  %v2810 = vunpack.c.l.b16 %v2253
  %v2811 = vunpack.c.h.b16 %v2253
  %v2812 = vunpack.c.l.b16 %v2254
  %v2813 = vunpack.c.h.b16 %v2254
  %v2814 = vunpack.c.l.b16 %v2255
  %v2815 = vunpack.c.h.b16 %v2255
  %v2816 = vunpack.c.l.b16 %v2256
  %v2817 = vunpack.c.h.b16 %v2256
  %v2818 = vunpack.c.l.b16 %v2257
  %v2819 = vunpack.c.h.b16 %v2257
  %v2820 = vunpack.c.l.b16 %v2258
  %v2821 = vunpack.c.h.b16 %v2258
  %v2822 = vunpack.c.l.b16 %v2259
  %v2823 = vunpack.c.h.b16 %v2259
  %v2824 = vunpack.c.l.b16 %v2260
  %v2825 = vunpack.c.h.b16 %v2260
  %v2826 = vunpack.c.l.b16 %v2261
  %v2827 = vunpack.c.h.b16 %v2261
  %v2828 = vunpack.c.l.b16 %v2262
  %v2829 = vunpack.c.h.b16 %v2262
  %v2830 = vunpack.c.l.b16 %v2263
  %v2831 = vunpack.c.h.b16 %v2263
  %v2832 = vunpack.c.l.b16 %v2264
  %v2833 = vunpack.c.h.b16 %v2264
  %v2834 = vunpack.c.l.b16 %v2265
  %v2835 = vunpack.c.h.b16 %v2265
  %v2836 = vunpack.c.l.b16 %v2266
  %v2837 = vunpack.c.h.b16 %v2266
  %v2838 = vunpack.c.l.b16 %v2267
  %v2839 = vunpack.c.h.b16 %v2267
  %v2840 = vunpack.c.l.b16 %v2268
  %v2841 = vunpack.c.h.b16 %v2268
  %v2842 = vpack.c.b16 %v2812, %v2810
  %v2843 = vpack.c.b16 %v2813, %v2811
  %v2844 = vpack.c.b16 %v2816, %v2814
  %v2845 = vpack.c.b16 %v2817, %v2815
  %v2846 = vpack.c.b16 %v2820, %v2818
  %v2847 = vpack.c.b16 %v2821, %v2819
  %v2848 = vpack.c.b16 %v2824, %v2822
  %v2849 = vpack.c.b16 %v2825, %v2823
  %v2850 = vpack.c.b16 %v2828, %v2826
  %v2851 = vpack.c.b16 %v2829, %v2827
  %v2852 = vpack.c.b16 %v2832, %v2830
  %v2853 = vpack.c.b16 %v2833, %v2831
  %v2854 = vpack.c.b16 %v2836, %v2834
  %v2855 = vpack.c.b16 %v2837, %v2835
  %v2856 = vpack.c.b16 %v2840, %v2838
  %v2857 = vpack.c.b16 %v2841, %v2839
  %v2906 = vunpack.c.l.b16 %v2269
  %v2907 = vunpack.c.l.b16 %v2270
  %v2908 = vunpack.c.l.b16 %v2271
  %v2909 = vunpack.c.l.b16 %v2272
  %v2910 = vunpack.c.l.b16 %v2273
  %v2911 = vunpack.c.l.b16 %v2274
  %v2912 = vunpack.c.l.b16 %v2275
  %v2913 = vunpack.c.l.b16 %v2276
  %v2914 = vunpack.c.l.b16 %v2277
  %v2915 = vunpack.c.l.b16 %v2278
  %v2916 = vunpack.c.l.b16 %v2279
  %v2917 = vunpack.c.l.b16 %v2280
  %v2918 = vunpack.c.l.b16 %v2281
  %v2919 = vunpack.c.l.b16 %v2282
  %v2920 = vunpack.c.l.b16 %v2283
  %v2921 = vunpack.c.l.b16 %v2284
  %v2922 = vunpack.c.l.b16 %v2285
  %v2923 = vunpack.c.l.b16 %v2286
  %v2924 = vunpack.c.l.b16 %v2287
  %v2925 = vunpack.c.l.b16 %v2288
  %v2926 = vunpack.c.l.b16 %v2289
  %v2927 = vunpack.c.l.b16 %v2290
  %v2928 = vunpack.c.l.b16 %v2291
  %v2929 = vunpack.c.l.b16 %v2292
  %v2930 = vunpack.c.l.b16 %v2293
  %v2931 = vunpack.c.l.b16 %v2294
  %v2932 = vunpack.c.l.b16 %v2295
  %v2933 = vunpack.c.l.b16 %v2296
  %v2934 = vunpack.c.l.b16 %v2297
  %v2935 = vunpack.c.l.b16 %v2298
  %v2936 = vunpack.c.l.b16 %v2299
  %v2937 = vunpack.c.l.b16 %v2300
  %v2938 = vpack.c.b16 %v2907, %v2906
  %v2939 = vpack.c.b16 %v2909, %v2908
  %v2940 = vpack.c.b16 %v2911, %v2910
  %v2941 = vpack.c.b16 %v2913, %v2912
  %v2942 = vpack.c.b16 %v2915, %v2914
  %v2943 = vpack.c.b16 %v2917, %v2916
  %v2944 = vpack.c.b16 %v2919, %v2918
  %v2945 = vpack.c.b16 %v2921, %v2920
  %v2946 = vpack.c.b16 %v2923, %v2922
  %v2947 = vpack.c.b16 %v2925, %v2924
  %v2948 = vpack.c.b16 %v2927, %v2926
  %v2949 = vpack.c.b16 %v2929, %v2928
  %v2950 = vpack.c.b16 %v2931, %v2930
  %v2951 = vpack.c.b16 %v2933, %v2932
  %v2952 = vpack.c.b16 %v2935, %v2934
  %v2953 = vpack.c.b16 %v2937, %v2936
  %2970 = vmatpush.bf16.msra.mxu0 %v2945
  %2971 = vmatpush.bf16.msra.mxu0 %v2944
  %2972 = vmatpush.bf16.msra.mxu0 %v2943
  %2973 = vmatpush.bf16.msra.mxu0 %v2942
  %2974 = vmatpush.bf16.msra.mxu0 %v2941
  %2975 = vmatpush.bf16.msra.mxu0 %v2940
  %2976 = vmatpush.bf16.msra.mxu0 %v2939
  %2977 = vmatpush.bf16.msra.mxu0 %v2938
  %2978 = vmatmul.bf16.gmra.mxu0 %v2842
  %v2979 = vpop.f32.mrf.mxu0
  %v2980 = vadd.f32 %v2755, %v2979
  %v2981 = vpop.f32.mrf.mxu0
  %v2982 = vadd.f32 %v2757, %v2981
  %2983 = vmatmul.bf16.gmra.mxu0 %v2844
  %v2984 = vpop.f32.mrf.mxu0
  %v2985 = vadd.f32 %v2760, %v2984
  %v2986 = vpop.f32.mrf.mxu0
  %v2987 = vadd.f32 %v2762, %v2986
  %2988 = vmatmul.bf16.gmra.mxu0 %v2846
  %v2989 = vpop.f32.mrf.mxu0
  %v2990 = vadd.f32 %v2765, %v2989
  %v2991 = vpop.f32.mrf.mxu0
  %v2992 = vadd.f32 %v2767, %v2991
  %2993 = vmatmul.bf16.gmra.mxu0 %v2848
  %v2994 = vpop.f32.mrf.mxu0
  %v2995 = vadd.f32 %v2770, %v2994
  %v2996 = vpop.f32.mrf.mxu0
  %v2997 = vadd.f32 %v2772, %v2996
  %2998 = vmatmul.bf16.gmra.mxu0 %v2850
  %v2999 = vpop.f32.mrf.mxu0
  %v3000 = vadd.f32 %v2775, %v2999
  %v3001 = vpop.f32.mrf.mxu0
  %v3002 = vadd.f32 %v2777, %v3001
  %3003 = vmatmul.bf16.gmra.mxu0 %v2852
  %v3004 = vpop.f32.mrf.mxu0
  %v3005 = vadd.f32 %v2780, %v3004
  %v3006 = vpop.f32.mrf.mxu0
  %v3007 = vadd.f32 %v2782, %v3006
  %3008 = vmatmul.bf16.gmra.mxu0 %v2854
  %v3009 = vpop.f32.mrf.mxu0
  %v3010 = vadd.f32 %v2785, %v3009
  %v3011 = vpop.f32.mrf.mxu0
  %v3012 = vadd.f32 %v2787, %v3011
  %3013 = vmatmul.bf16.gmra.mxu0 %v2856
  %v3014 = vpop.f32.mrf.mxu0
  %v3015 = vadd.f32 %v2790, %v3014
  %v3016 = vpop.f32.mrf.mxu0
  %v3017 = vadd.f32 %v2792, %v3016
  %3018 = vdwg.mxu0
  %3019 = vmatpush.bf16.msra.mxu0 %v2953
  %3020 = vmatpush.bf16.msra.mxu0 %v2952
  %3021 = vmatpush.bf16.msra.mxu0 %v2951
  %3022 = vmatpush.bf16.msra.mxu0 %v2950
  %3023 = vmatpush.bf16.msra.mxu0 %v2949
  %3024 = vmatpush.bf16.msra.mxu0 %v2948
  %3025 = vmatpush.bf16.msra.mxu0 %v2947
  %3026 = vmatpush.bf16.msra.mxu0 %v2946
  %3027 = vmatmul.bf16.gmra.mxu0 %v2843
  %v3028 = vpop.f32.mrf.mxu0
  %v3029 = vadd.f32 %v2980, %v3028
  %v3030 = vpop.f32.mrf.mxu0
  %v3031 = vadd.f32 %v2982, %v3030
  %3032 = vmatmul.bf16.gmra.mxu0 %v2845
  %v3033 = vpop.f32.mrf.mxu0
  %v3034 = vadd.f32 %v2985, %v3033
  %v3035 = vpop.f32.mrf.mxu0
  %v3036 = vadd.f32 %v2987, %v3035
  %3037 = vmatmul.bf16.gmra.mxu0 %v2847
  %v3038 = vpop.f32.mrf.mxu0
  %v3039 = vadd.f32 %v2990, %v3038
  %v3040 = vpop.f32.mrf.mxu0
  %v3041 = vadd.f32 %v2992, %v3040
  %3042 = vmatmul.bf16.gmra.mxu0 %v2849
  %v3043 = vpop.f32.mrf.mxu0
  %v3044 = vadd.f32 %v2995, %v3043
  %v3045 = vpop.f32.mrf.mxu0
  %v3046 = vadd.f32 %v2997, %v3045
  %3047 = vmatmul.bf16.gmra.mxu0 %v2851
  %v3048 = vpop.f32.mrf.mxu0
  %v3049 = vadd.f32 %v3000, %v3048
  %v3050 = vpop.f32.mrf.mxu0
  %v3051 = vadd.f32 %v3002, %v3050
  %3052 = vmatmul.bf16.gmra.mxu0 %v2853
  %v3053 = vpop.f32.mrf.mxu0
  %v3054 = vadd.f32 %v3005, %v3053
  %v3055 = vpop.f32.mrf.mxu0
  %v3056 = vadd.f32 %v3007, %v3055
  %3057 = vmatmul.bf16.gmra.mxu0 %v2855
  %v3058 = vpop.f32.mrf.mxu0
  %v3059 = vadd.f32 %v3010, %v3058
  %v3060 = vpop.f32.mrf.mxu0
  %v3061 = vadd.f32 %v3012, %v3060
  %3062 = vmatmul.bf16.gmra.mxu0 %v2857
  %v3063 = vpop.f32.mrf.mxu0
  %v3064 = vadd.f32 %v3015, %v3063
  %v3065 = vpop.f32.mrf.mxu0
  %v3066 = vadd.f32 %v3017, %v3065
  %3067 = vdwg.mxu0
  %v3068 = vld [vmem:[#allocation3] sm:$0xee]
  %v3069 = vld [vmem:[#allocation3 + $0x18] sm:$0xee]
  %v3070 = vld [vmem:[#allocation3 + $0x30] sm:$0xee]
  %v3071 = vld [vmem:[#allocation3 + $0x48] sm:$0xee]
  %v3072 = vld [vmem:[#allocation3 + $0x60] sm:$0xee]
  %v3073 = vld [vmem:[#allocation3 + $0x78] sm:$0xee]
  %v3074 = vld [vmem:[#allocation3 + $0x90] sm:$0xee]
  %v3075 = vld [vmem:[#allocation3 + $0xa8] sm:$0xee]
  %vm3092 = vcmask 1042432
  %vm3093 = vcmask 1046532
  %vm3094 = vmor %vm3092, %vm3093
  %v3095 = vrot.slane %v3068, 5
  %v3096 = vrot.slane %v3095, 4
  %v3097 = vrot.slane %v2254, 5
  %v3098 = vsel %vm3094, %v3096, %v3097
  %v3099 = vrot.slane %v3097, 4
  %v3100 = vrot.slane %v2301, 5
  %v3101 = vsel %vm3094, %v3099, %v3100
  %v3102 = vrot.slane %v3069, 5
  %v3103 = vrot.slane %v3102, 4
  %v3104 = vrot.slane %v2256, 5
  %v3105 = vsel %vm3094, %v3103, %v3104
  %v3106 = vrot.slane %v3104, 4
  %v3107 = vrot.slane %v2302, 5
  %v3108 = vsel %vm3094, %v3106, %v3107
  %v3109 = vrot.slane %v3070, 5
  %v3110 = vrot.slane %v3109, 4
  %v3111 = vrot.slane %v2258, 5
  %v3112 = vsel %vm3094, %v3110, %v3111
  %v3113 = vrot.slane %v3111, 4
  %v3114 = vrot.slane %v2303, 5
  %v3115 = vsel %vm3094, %v3113, %v3114
  %v3116 = vrot.slane %v3071, 5
  %v3117 = vrot.slane %v3116, 4
  %v3118 = vrot.slane %v2260, 5
  %v3119 = vsel %vm3094, %v3117, %v3118
  %v3120 = vrot.slane %v3118, 4
  %v3121 = vrot.slane %v2304, 5
  %v3122 = vsel %vm3094, %v3120, %v3121
  %v3123 = vrot.slane %v3072, 5
  %v3124 = vrot.slane %v3123, 4
  %v3125 = vrot.slane %v2262, 5
  %v3126 = vsel %vm3094, %v3124, %v3125
  %v3127 = vrot.slane %v3125, 4
  %v3128 = vrot.slane %v2305, 5
  %v3129 = vsel %vm3094, %v3127, %v3128
  %v3130 = vrot.slane %v3073, 5
  %v3131 = vrot.slane %v3130, 4
  %v3132 = vrot.slane %v2264, 5
  %v3133 = vsel %vm3094, %v3131, %v3132
  %v3134 = vrot.slane %v3132, 4
  %v3135 = vrot.slane %v2306, 5
  %v3136 = vsel %vm3094, %v3134, %v3135
  %v3137 = vrot.slane %v3074, 5
  %v3138 = vrot.slane %v3137, 4
  %v3139 = vrot.slane %v2266, 5
  %v3140 = vsel %vm3094, %v3138, %v3139
  %v3141 = vrot.slane %v3139, 4
  %v3142 = vrot.slane %v2307, 5
  %v3143 = vsel %vm3094, %v3141, %v3142
  %v3144 = vrot.slane %v3075, 5
  %v3145 = vrot.slane %v3144, 4
  %v3146 = vrot.slane %v2268, 5
  %v3147 = vsel %vm3094, %v3145, %v3146
  %v3148 = vrot.slane %v3146, 4
  %v3149 = vrot.slane %v2308, 5
  %v3150 = vsel %vm3094, %v3148, %v3149
  %v3151 = vld [vmem:[%s5 + $0x100] sm:$0xf]
  %v3152 = vld [vmem:[%s5 + $0x104] sm:$0xf]
  %v3153 = vld [vmem:[%s5 + $0x108] sm:$0xf]
  %v3154 = vld [vmem:[%s5 + $0x10c] sm:$0xf]
  %v3155 = vld [vmem:[%s5 + $0x110] sm:$0xf]
  %v3156 = vld [vmem:[%s5 + $0x114] sm:$0xf]
  %v3157 = vld [vmem:[%s5 + $0x118] sm:$0xf]
  %v3158 = vld [vmem:[%s5 + $0x11c] sm:$0xf]
  %v3159 = vld [vmem:[%s5 + $0x120] sm:$0xf]
  %v3160 = vld [vmem:[%s5 + $0x124] sm:$0xf]
  %v3161 = vld [vmem:[%s5 + $0x128] sm:$0xf]
  %v3162 = vld [vmem:[%s5 + $0x12c] sm:$0xf]
  %v3163 = vld [vmem:[%s5 + $0x130] sm:$0xf]
  %v3164 = vld [vmem:[%s5 + $0x134] sm:$0xf]
  %v3165 = vld [vmem:[%s5 + $0x138] sm:$0xf]
  %v3166 = vld [vmem:[%s5 + $0x13c] sm:$0xf]
  %v3167 = vld [vmem:[%s5 + $0x140] sm:$0xf]
  %v3168 = vld [vmem:[%s5 + $0x144] sm:$0xf]
  %v3169 = vld [vmem:[%s5 + $0x148] sm:$0xf]
  %v3170 = vld [vmem:[%s5 + $0x14c] sm:$0xf]
  %v3171 = vld [vmem:[%s5 + $0x150] sm:$0xf]
  %v3172 = vld [vmem:[%s5 + $0x154] sm:$0xf]
  %v3173 = vld [vmem:[%s5 + $0x158] sm:$0xf]
  %v3174 = vld [vmem:[%s5 + $0x15c] sm:$0xf]
  %v3175 = vld [vmem:[%s5 + $0x160] sm:$0xf]
  %v3176 = vld [vmem:[%s5 + $0x164] sm:$0xf]
  %v3177 = vld [vmem:[%s5 + $0x168] sm:$0xf]
  %v3178 = vld [vmem:[%s5 + $0x16c] sm:$0xf]
  %v3179 = vld [vmem:[%s5 + $0x170] sm:$0xf]
  %v3180 = vld [vmem:[%s5 + $0x174] sm:$0xf]
  %v3181 = vld [vmem:[%s5 + $0x178] sm:$0xf]
  %v3182 = vld [vmem:[%s5 + $0x17c] sm:$0xf]
  %v3183 = vunpack.c.l.b16 %v3098
  %v3184 = vunpack.c.h.b16 %v3098
  %v3185 = vunpack.c.l.b16 %v3101
  %v3186 = vunpack.c.h.b16 %v3101
  %v3187 = vunpack.c.l.b16 %v3105
  %v3188 = vunpack.c.h.b16 %v3105
  %v3189 = vunpack.c.l.b16 %v3108
  %v3190 = vunpack.c.h.b16 %v3108
  %v3191 = vunpack.c.l.b16 %v3112
  %v3192 = vunpack.c.h.b16 %v3112
  %v3193 = vunpack.c.l.b16 %v3115
  %v3194 = vunpack.c.h.b16 %v3115
  %v3195 = vunpack.c.l.b16 %v3119
  %v3196 = vunpack.c.h.b16 %v3119
  %v3197 = vunpack.c.l.b16 %v3122
  %v3198 = vunpack.c.h.b16 %v3122
  %v3199 = vunpack.c.l.b16 %v3126
  %v3200 = vunpack.c.h.b16 %v3126
  %v3201 = vunpack.c.l.b16 %v3129
  %v3202 = vunpack.c.h.b16 %v3129
  %v3203 = vunpack.c.l.b16 %v3133
  %v3204 = vunpack.c.h.b16 %v3133
  %v3205 = vunpack.c.l.b16 %v3136
  %v3206 = vunpack.c.h.b16 %v3136
  %v3207 = vunpack.c.l.b16 %v3140
  %v3208 = vunpack.c.h.b16 %v3140
  %v3209 = vunpack.c.l.b16 %v3143
  %v3210 = vunpack.c.h.b16 %v3143
  %v3211 = vunpack.c.l.b16 %v3147
  %v3212 = vunpack.c.h.b16 %v3147
  %v3213 = vunpack.c.l.b16 %v3150
  %v3214 = vunpack.c.h.b16 %v3150
  %v3215 = vpack.c.b16 %v3185, %v3183
  %v3216 = vpack.c.b16 %v3186, %v3184
  %v3217 = vpack.c.b16 %v3189, %v3187
  %v3218 = vpack.c.b16 %v3190, %v3188
  %v3219 = vpack.c.b16 %v3193, %v3191
  %v3220 = vpack.c.b16 %v3194, %v3192
  %v3221 = vpack.c.b16 %v3197, %v3195
  %v3222 = vpack.c.b16 %v3198, %v3196
  %v3223 = vpack.c.b16 %v3201, %v3199
  %v3224 = vpack.c.b16 %v3202, %v3200
  %v3225 = vpack.c.b16 %v3205, %v3203
  %v3226 = vpack.c.b16 %v3206, %v3204
  %v3227 = vpack.c.b16 %v3209, %v3207
  %v3228 = vpack.c.b16 %v3210, %v3208
  %v3229 = vpack.c.b16 %v3213, %v3211
  %v3230 = vpack.c.b16 %v3214, %v3212
  %v3279 = vunpack.c.l.b16 %v3151
  %v3280 = vunpack.c.l.b16 %v3152
  %v3281 = vunpack.c.l.b16 %v3153
  %v3282 = vunpack.c.l.b16 %v3154
  %v3283 = vunpack.c.l.b16 %v3155
  %v3284 = vunpack.c.l.b16 %v3156
  %v3285 = vunpack.c.l.b16 %v3157
  %v3286 = vunpack.c.l.b16 %v3158
  %v3287 = vunpack.c.l.b16 %v3159
  %v3288 = vunpack.c.l.b16 %v3160
  %v3289 = vunpack.c.l.b16 %v3161
  %v3290 = vunpack.c.l.b16 %v3162
  %v3291 = vunpack.c.l.b16 %v3163
  %v3292 = vunpack.c.l.b16 %v3164
  %v3293 = vunpack.c.l.b16 %v3165
  %v3294 = vunpack.c.l.b16 %v3166
  %v3295 = vunpack.c.l.b16 %v3167
  %v3296 = vunpack.c.l.b16 %v3168
  %v3297 = vunpack.c.l.b16 %v3169
  %v3298 = vunpack.c.l.b16 %v3170
  %v3299 = vunpack.c.l.b16 %v3171
  %v3300 = vunpack.c.l.b16 %v3172
  %v3301 = vunpack.c.l.b16 %v3173
  %v3302 = vunpack.c.l.b16 %v3174
  %v3303 = vunpack.c.l.b16 %v3175
  %v3304 = vunpack.c.l.b16 %v3176
  %v3305 = vunpack.c.l.b16 %v3177
  %v3306 = vunpack.c.l.b16 %v3178
  %v3307 = vunpack.c.l.b16 %v3179
  %v3308 = vunpack.c.l.b16 %v3180
  %v3309 = vunpack.c.l.b16 %v3181
  %v3310 = vunpack.c.l.b16 %v3182
  %v3311 = vpack.c.b16 %v3280, %v3279
  %v3312 = vpack.c.b16 %v3282, %v3281
  %v3313 = vpack.c.b16 %v3284, %v3283
  %v3314 = vpack.c.b16 %v3286, %v3285
  %v3315 = vpack.c.b16 %v3288, %v3287
  %v3316 = vpack.c.b16 %v3290, %v3289
  %v3317 = vpack.c.b16 %v3292, %v3291
  %v3318 = vpack.c.b16 %v3294, %v3293
  %v3319 = vpack.c.b16 %v3296, %v3295
  %v3320 = vpack.c.b16 %v3298, %v3297
  %v3321 = vpack.c.b16 %v3300, %v3299
  %v3322 = vpack.c.b16 %v3302, %v3301
  %v3323 = vpack.c.b16 %v3304, %v3303
  %v3324 = vpack.c.b16 %v3306, %v3305
  %v3325 = vpack.c.b16 %v3308, %v3307
  %v3326 = vpack.c.b16 %v3310, %v3309
  %3343 = vmatpush.bf16.msra.mxu0 %v3318
  %3344 = vmatpush.bf16.msra.mxu0 %v3317
  %3345 = vmatpush.bf16.msra.mxu0 %v3316
  %3346 = vmatpush.bf16.msra.mxu0 %v3315
  %3347 = vmatpush.bf16.msra.mxu0 %v3314
  %3348 = vmatpush.bf16.msra.mxu0 %v3313
  %3349 = vmatpush.bf16.msra.mxu0 %v3312
  %3350 = vmatpush.bf16.msra.mxu0 %v3311
  %3351 = vmatmul.bf16.gmra.mxu0 %v3215
  %v3352 = vpop.f32.mrf.mxu0
  %v3353 = vadd.f32 0.0, %v3352
  %v3354 = vpop.f32.mrf.mxu0
  %v3355 = vadd.f32 0.0, %v3354
  %3356 = vmatmul.bf16.gmra.mxu0 %v3217
  %v3357 = vpop.f32.mrf.mxu0
  %v3358 = vadd.f32 0.0, %v3357
  %v3359 = vpop.f32.mrf.mxu0
  %v3360 = vadd.f32 0.0, %v3359
  %3361 = vmatmul.bf16.gmra.mxu0 %v3219
  %v3362 = vpop.f32.mrf.mxu0
  %v3363 = vadd.f32 0.0, %v3362
  %v3364 = vpop.f32.mrf.mxu0
  %v3365 = vadd.f32 0.0, %v3364
  %3366 = vmatmul.bf16.gmra.mxu0 %v3221
  %v3367 = vpop.f32.mrf.mxu0
  %v3368 = vadd.f32 0.0, %v3367
  %v3369 = vpop.f32.mrf.mxu0
  %v3370 = vadd.f32 0.0, %v3369
  %3371 = vmatmul.bf16.gmra.mxu0 %v3223
  %v3372 = vpop.f32.mrf.mxu0
  %v3373 = vadd.f32 0.0, %v3372
  %v3374 = vpop.f32.mrf.mxu0
  %v3375 = vadd.f32 0.0, %v3374
  %3376 = vmatmul.bf16.gmra.mxu0 %v3225
  %v3377 = vpop.f32.mrf.mxu0
  %v3378 = vadd.f32 0.0, %v3377
  %v3379 = vpop.f32.mrf.mxu0
  %v3380 = vadd.f32 0.0, %v3379
  %3381 = vmatmul.bf16.gmra.mxu0 %v3227
  %v3382 = vpop.f32.mrf.mxu0
  %v3383 = vadd.f32 0.0, %v3382
  %v3384 = vpop.f32.mrf.mxu0
  %v3385 = vadd.f32 0.0, %v3384
  %3386 = vmatmul.bf16.gmra.mxu0 %v3229
  %v3387 = vpop.f32.mrf.mxu0
  %v3388 = vadd.f32 0.0, %v3387
  %v3389 = vpop.f32.mrf.mxu0
  %v3390 = vadd.f32 0.0, %v3389
  %3391 = vdwg.mxu0
  %3392 = vmatpush.bf16.msra.mxu0 %v3326
  %3393 = vmatpush.bf16.msra.mxu0 %v3325
  %3394 = vmatpush.bf16.msra.mxu0 %v3324
  %3395 = vmatpush.bf16.msra.mxu0 %v3323
  %3396 = vmatpush.bf16.msra.mxu0 %v3322
  %3397 = vmatpush.bf16.msra.mxu0 %v3321
  %3398 = vmatpush.bf16.msra.mxu0 %v3320
  %3399 = vmatpush.bf16.msra.mxu0 %v3319
  %3400 = vmatmul.bf16.gmra.mxu0 %v3216
  %v3401 = vpop.f32.mrf.mxu0
  %v3402 = vadd.f32 %v3353, %v3401
  %v3403 = vpop.f32.mrf.mxu0
  %v3404 = vadd.f32 %v3355, %v3403
  %3405 = vmatmul.bf16.gmra.mxu0 %v3218
  %v3406 = vpop.f32.mrf.mxu0
  %v3407 = vadd.f32 %v3358, %v3406
  %v3408 = vpop.f32.mrf.mxu0
  %v3409 = vadd.f32 %v3360, %v3408
  %3410 = vmatmul.bf16.gmra.mxu0 %v3220
  %v3411 = vpop.f32.mrf.mxu0
  %v3412 = vadd.f32 %v3363, %v3411
  %v3413 = vpop.f32.mrf.mxu0
  %v3414 = vadd.f32 %v3365, %v3413
  %3415 = vmatmul.bf16.gmra.mxu0 %v3222
  %v3416 = vpop.f32.mrf.mxu0
  %v3417 = vadd.f32 %v3368, %v3416
  %v3418 = vpop.f32.mrf.mxu0
  %v3419 = vadd.f32 %v3370, %v3418
  %3420 = vmatmul.bf16.gmra.mxu0 %v3224
  %v3421 = vpop.f32.mrf.mxu0
  %v3422 = vadd.f32 %v3373, %v3421
  %v3423 = vpop.f32.mrf.mxu0
  %v3424 = vadd.f32 %v3375, %v3423
  %3425 = vmatmul.bf16.gmra.mxu0 %v3226
  %v3426 = vpop.f32.mrf.mxu0
  %v3427 = vadd.f32 %v3378, %v3426
  %v3428 = vpop.f32.mrf.mxu0
  %v3429 = vadd.f32 %v3380, %v3428
  %3430 = vmatmul.bf16.gmra.mxu0 %v3228
  %v3431 = vpop.f32.mrf.mxu0
  %v3432 = vadd.f32 %v3383, %v3431
  %v3433 = vpop.f32.mrf.mxu0
  %v3434 = vadd.f32 %v3385, %v3433
  %3435 = vmatmul.bf16.gmra.mxu0 %v3230
  %v3436 = vpop.f32.mrf.mxu0
  %v3437 = vadd.f32 %v3388, %v3436
  %v3438 = vpop.f32.mrf.mxu0
  %v3439 = vadd.f32 %v3390, %v3438
  %3440 = vdwg.mxu0
  %v3441 = vadd.f32 %v3029, %v3402
  %v3442 = vadd.f32 %v3031, %v3404
  %v3443 = vadd.f32 %v3034, %v3407
  %v3444 = vadd.f32 %v3036, %v3409
  %v3445 = vadd.f32 %v3039, %v3412
  %v3446 = vadd.f32 %v3041, %v3414
  %v3447 = vadd.f32 %v3044, %v3417
  %v3448 = vadd.f32 %v3046, %v3419
  %v3449 = vadd.f32 %v3049, %v3422
  %v3450 = vadd.f32 %v3051, %v3424
  %v3451 = vadd.f32 %v3054, %v3427
  %v3452 = vadd.f32 %v3056, %v3429
  %v3453 = vadd.f32 %v3059, %v3432
  %v3454 = vadd.f32 %v3061, %v3434
  %v3455 = vadd.f32 %v3064, %v3437
  %v3456 = vadd.f32 %v3066, %v3439
  %v3457 = vld [vmem:[%s6] sm:$0x1]
  %v3459 = vperm.slane %v3457, 0
  %v3461 = vadd.f32 %v3441, %v3459
  %v3462 = vadd.f32 %v3442, %v3459
  %v3463 = vadd.f32 %v3443, %v3459
  %v3464 = vadd.f32 %v3444, %v3459
  %v3465 = vadd.f32 %v3445, %v3459
  %v3466 = vadd.f32 %v3446, %v3459
  %v3467 = vadd.f32 %v3447, %v3459
  %v3468 = vadd.f32 %v3448, %v3459
  %v3469 = vadd.f32 %v3449, %v3459
  %v3470 = vadd.f32 %v3450, %v3459
  %v3471 = vadd.f32 %v3451, %v3459
  %v3472 = vadd.f32 %v3452, %v3459
  %v3473 = vadd.f32 %v3453, %v3459
  %v3474 = vadd.f32 %v3454, %v3459
  %v3475 = vadd.f32 %v3455, %v3459
  %v3476 = vadd.f32 %v3456, %v3459
  %v3477 = vmax.f32 %v3461, 0.0
  %v3478 = vmax.f32 %v3462, 0.0
  %v3479 = vmax.f32 %v3463, 0.0
  %v3480 = vmax.f32 %v3464, 0.0
  %v3481 = vmax.f32 %v3465, 0.0
  %v3482 = vmax.f32 %v3466, 0.0
  %v3483 = vmax.f32 %v3467, 0.0
  %v3484 = vmax.f32 %v3468, 0.0
  %v3485 = vmax.f32 %v3469, 0.0
  %v3486 = vmax.f32 %v3470, 0.0
  %v3487 = vmax.f32 %v3471, 0.0
  %v3488 = vmax.f32 %v3472, 0.0
  %v3489 = vmax.f32 %v3473, 0.0
  %v3490 = vmax.f32 %v3474, 0.0
  %v3491 = vmax.f32 %v3475, 0.0
  %v3492 = vmax.f32 %v3476, 0.0
  %v3493 = vadd.f32 %v3477, %v3478
  %v3494 = vrot.slane %v3493, 4
  %v3495 = vadd.f32 %v3493, %v3494
  %v3496 = vrot.slane %v3495, 2
  %v3497 = vadd.f32 %v3495, %v3496
  %v3498 = vrot.slane %v3497, 1
  %v3499 = vadd.f32 %v3497, %v3498
  %v3500 = vadd.f32 %v3479, %v3480
  %v3501 = vrot.slane %v3500, 4
  %v3502 = vadd.f32 %v3500, %v3501
  %v3503 = vrot.slane %v3502, 2
  %v3504 = vadd.f32 %v3502, %v3503
  %v3505 = vrot.slane %v3504, 1
  %v3506 = vadd.f32 %v3504, %v3505
  %v3507 = vadd.f32 %v3481, %v3482
  %v3508 = vrot.slane %v3507, 4
  %v3509 = vadd.f32 %v3507, %v3508
  %v3510 = vrot.slane %v3509, 2
  %v3511 = vadd.f32 %v3509, %v3510
  %v3512 = vrot.slane %v3511, 1
  %v3513 = vadd.f32 %v3511, %v3512
  %v3514 = vadd.f32 %v3483, %v3484
  %v3515 = vrot.slane %v3514, 4
  %v3516 = vadd.f32 %v3514, %v3515
  %v3517 = vrot.slane %v3516, 2
  %v3518 = vadd.f32 %v3516, %v3517
  %v3519 = vrot.slane %v3518, 1
  %v3520 = vadd.f32 %v3518, %v3519
  %v3521 = vadd.f32 %v3485, %v3486
  %v3522 = vrot.slane %v3521, 4
  %v3523 = vadd.f32 %v3521, %v3522
  %v3524 = vrot.slane %v3523, 2
  %v3525 = vadd.f32 %v3523, %v3524
  %v3526 = vrot.slane %v3525, 1
  %v3527 = vadd.f32 %v3525, %v3526
  %v3528 = vadd.f32 %v3487, %v3488
  %v3529 = vrot.slane %v3528, 4
  %v3530 = vadd.f32 %v3528, %v3529
  %v3531 = vrot.slane %v3530, 2
  %v3532 = vadd.f32 %v3530, %v3531
  %v3533 = vrot.slane %v3532, 1
  %v3534 = vadd.f32 %v3532, %v3533
  %v3535 = vadd.f32 %v3489, %v3490
  %v3536 = vrot.slane %v3535, 4
  %v3537 = vadd.f32 %v3535, %v3536
  %v3538 = vrot.slane %v3537, 2
  %v3539 = vadd.f32 %v3537, %v3538
  %v3540 = vrot.slane %v3539, 1
  %v3541 = vadd.f32 %v3539, %v3540
  %v3542 = vadd.f32 %v3491, %v3492
  %v3543 = vrot.slane %v3542, 4
  %v3544 = vadd.f32 %v3542, %v3543
  %v3545 = vrot.slane %v3544, 2
  %v3546 = vadd.f32 %v3544, %v3545
  %v3547 = vrot.slane %v3546, 1
  %v3548 = vadd.f32 %v3546, %v3547
  %v3549 = vmul.f32 %v3499, 0.0625
  %v3550 = vmul.f32 %v3506, 0.0625
  %v3551 = vmul.f32 %v3513, 0.0625
  %v3552 = vmul.f32 %v3520, 0.0625
  %v3553 = vmul.f32 %v3527, 0.0625
  %v3554 = vmul.f32 %v3534, 0.0625
  %v3555 = vmul.f32 %v3541, 0.0625
  %v3556 = vmul.f32 %v3548, 0.0625
  %v3557 = vpack.c.bf16 %v3549, %v3549
  %v3558 = vpack.c.bf16 %v3550, %v3550
  %v3559 = vpack.c.bf16 %v3551, %v3551
  %v3560 = vpack.c.bf16 %v3552, %v3552
  %v3561 = vpack.c.bf16 %v3553, %v3553
  %v3562 = vpack.c.bf16 %v3554, %v3554
  %v3563 = vpack.c.bf16 %v3555, %v3555
  %v3564 = vpack.c.bf16 %v3556, %v3556
  %v3565 = vld [vmem:[%s7] sm:$0xf]
  %v3566 = vld [vmem:[%s7 + $0x4] sm:$0xf]
  %v3567 = vld [vmem:[%s7 + $0x8] sm:$0xf]
  %v3568 = vld [vmem:[%s7 + $0xc] sm:$0xf]
  %v3569 = vld [vmem:[%s7 + $0x10] sm:$0xf]
  %v3570 = vld [vmem:[%s7 + $0x14] sm:$0xf]
  %v3571 = vld [vmem:[%s7 + $0x18] sm:$0xf]
  %v3572 = vld [vmem:[%s7 + $0x1c] sm:$0xf]
  %v3573 = vld [vmem:[%s7 + $0x20] sm:$0xf]
  %v3574 = vld [vmem:[%s7 + $0x24] sm:$0xf]
  %v3575 = vld [vmem:[%s7 + $0x28] sm:$0xf]
  %v3576 = vld [vmem:[%s7 + $0x2c] sm:$0xf]
  %v3577 = vld [vmem:[%s7 + $0x30] sm:$0xf]
  %v3578 = vld [vmem:[%s7 + $0x34] sm:$0xf]
  %v3579 = vld [vmem:[%s7 + $0x38] sm:$0xf]
  %v3580 = vld [vmem:[%s7 + $0x3c] sm:$0xf]
  %v3581 = vld [vmem:[%s8] sm:$0x1]
  %v3583 = vperm.slane %v3581, 0
  %v3593 = vunpack.c.l.b16 %v3557
  %v3594 = vunpack.c.l.b16 %v3558
  %v3595 = vunpack.c.l.b16 %v3559
  %v3596 = vunpack.c.l.b16 %v3560
  %v3597 = vunpack.c.l.b16 %v3561
  %v3598 = vunpack.c.l.b16 %v3562
  %v3599 = vunpack.c.l.b16 %v3563
  %v3600 = vunpack.c.l.b16 %v3564
  %vm3601 = vcmask 1041409
  %v3602 = vsel %vm3601, %v3594, %v3593
  %vm3603 = vcmask 1042434
  %v3604 = vsel %vm3603, %v3595, %v3602
  %vm3605 = vcmask 1043459
  %v3606 = vsel %vm3605, %v3596, %v3604
  %vm3607 = vcmask 1044484
  %v3608 = vsel %vm3607, %v3597, %v3606
  %vm3609 = vcmask 1045509
  %v3610 = vsel %vm3609, %v3598, %v3608
  %vm3611 = vcmask 1046534
  %v3612 = vsel %vm3611, %v3599, %v3610
  %vm3613 = vcmask 1047559
  %v3614 = vsel %vm3613, %v3600, %v3612
  %v3615 = vpack.c.b16 %v3614, %v3614
  %v3633 = vunpack.c.l.b16 %v3565
  %v3634 = vunpack.c.l.b16 %v3566
  %v3635 = vunpack.c.l.b16 %v3567
  %v3636 = vunpack.c.l.b16 %v3568
  %v3637 = vunpack.c.l.b16 %v3569
  %v3638 = vunpack.c.l.b16 %v3570
  %v3639 = vunpack.c.l.b16 %v3571
  %v3640 = vunpack.c.l.b16 %v3572
  %v3641 = vunpack.c.l.b16 %v3573
  %v3642 = vunpack.c.l.b16 %v3574
  %v3643 = vunpack.c.l.b16 %v3575
  %v3644 = vunpack.c.l.b16 %v3576
  %v3645 = vunpack.c.l.b16 %v3577
  %v3646 = vunpack.c.l.b16 %v3578
  %v3647 = vunpack.c.l.b16 %v3579
  %v3648 = vunpack.c.l.b16 %v3580
  %v3649 = vpack.c.b16 %v3634, %v3633
  %v3650 = vpack.c.b16 %v3636, %v3635
  %v3651 = vpack.c.b16 %v3638, %v3637
  %v3652 = vpack.c.b16 %v3640, %v3639
  %v3653 = vpack.c.b16 %v3642, %v3641
  %v3654 = vpack.c.b16 %v3644, %v3643
  %v3655 = vpack.c.b16 %v3646, %v3645
  %v3656 = vpack.c.b16 %v3648, %v3647
  %3665 = vmatpush.bf16.msra.mxu0 %v3656
  %3666 = vmatpush.bf16.msra.mxu0 %v3655
  %3667 = vmatpush.bf16.msra.mxu0 %v3654
  %3668 = vmatpush.bf16.msra.mxu0 %v3653
  %3669 = vmatpush.bf16.msra.mxu0 %v3652
  %3670 = vmatpush.bf16.msra.mxu0 %v3651
  %3671 = vmatpush.bf16.msra.mxu0 %v3650
  %3672 = vmatpush.bf16.msra.mxu0 %v3649
  %3673 = vmatmul.bf16.gmra.mxu0 %v3615
  %v3674 = vpop.f32.mrf.mxu0
  %v3675 = vadd.f32 %v3583, %v3674
  %v3676 = vpop.f32.mrf.mxu0
  %3677 = vdwg.mxu0
  %3678 = vst [vmem:[%s9] sm:$0xff] %v3675
  // Predicated region
  $region38: #{fcn_forward.1} parent=0 // pred_check
    _
  $region39: #{fcn_forward.1} parent=0 // pred_check_branch
    %3680 = sbr.rel (0) target = $region41
  $region40: #{fcn_forward.1} parent=0 // pred_region
    _
  $region41: #{fcn_forward.1} parent=0 // pred_fallthru
    _
  // Predicated region
  $region42: #{fcn_forward.1} parent=0 // pred_check
    _
  $region43: #{fcn_forward.1} parent=0 // pred_check_branch
    %3682 = sbr.rel (0) target = $region45
  $region44: #{fcn_forward.1} parent=0 // pred_region
    _
  $region45: #{fcn_forward.1} parent=0 // pred_fallthru
    _

</llo_original>
